<compile_context>
chip_gen: v5e
topology: v5e:2x2
jax: 0.10.0
libtpu: 0.0.40
codegen_flags: <defaults>
</compile_context>

<pallas_src>
import numpy as np
import jax
import jax.numpy as jnp
from jax import lax
from jax.experimental import pallas as pl
from jax.experimental.pallas import tpu as pltpu

# ----- model hyper-params (PyTorch MyViT defaults) -----
CHW = (1, 28, 28)
N_PATCHES = 7
HIDDEN_D = 8
N_HEADS = 2
N_BLOCKS = 2
OUT_D = 10
PATCH = CHW[1] // N_PATCHES              # 4
INPUT_D = CHW[0] * PATCH * PATCH         # 16
SEQ = N_PATCHES ** 2 + 1                 # 50
D_HEAD = HIDDEN_D // N_HEADS             # 4
MLP_D = 4 * HIDDEN_D                     # 32
LN_EPS = 1e-5


# ---------------------------------------------------------------------------
# plain-JAX glue: patchify + positional encoding (identical semantics)
# ---------------------------------------------------------------------------
def patchify_jax(images, n_patches):
    n, c, h, w = images.shape
    ps = h // n_patches
    x = images.reshape(n, c, n_patches, ps, n_patches, ps)
    x = x.transpose(0, 2, 4, 1, 3, 5)            # (n, i, j, c, ph, pw)
    return x.reshape(n, n_patches * n_patches, c * ps * ps)


def positional_encoding(seq_len, d):
    pe = np.zeros((seq_len, d), np.float32)
    for i in range(seq_len):
        for j in range(d):
            if j % 2 == 0:
                pe[i, j] = np.sin(i / 10000 ** (j / d))
            else:
                pe[i, j] = np.cos(i / 10000 ** ((j - 1) / d))
    return jnp.asarray(pe)


# ---------------------------------------------------------------------------
# in-kernel helpers (activations are (features, tokens))
# ---------------------------------------------------------------------------
def _gelu_erf(x):
    # exact GELU = 0.5*x*(1+erf(x/sqrt(2))); erf via Abramowitz–Stegun 7.1.26
    # (abs err ~1.5e-7, well inside the 1e-4 check).
    z = x * 0.7071067811865476
    a1, a2, a3, a4, a5 = 0.254829592, -0.284496736, 1.421413741, -1.453152027, 1.061405429
    p = 0.3275911
    az = jnp.abs(z)
    t = pl.reciprocal(1.0 + p * az, approx=False)
    poly = ((((a5 * t + a4) * t + a3) * t + a2) * t + a1) * t
    erf_abs = 1.0 - poly * jnp.exp(-az * az)
    erf = jnp.where(z >= 0.0, erf_abs, -erf_abs)
    return 0.5 * x * (1.0 + erf)


def _layernorm_t(x, w, b):
    # x: (D, T); w, b: (D, 1); normalize over the feature (sublane) axis.
    mu = jnp.mean(x, axis=0, keepdims=True)
    var = jnp.mean((x - mu) ** 2, axis=0, keepdims=True)
    return (x - mu) * lax.rsqrt(var + LN_EPS) * w + b


def _softmax_last(x):
    m = jnp.max(x, axis=-1, keepdims=True)
    e = jnp.exp(x - m)
    s = jnp.sum(e, axis=-1, keepdims=True)
    return e * pl.reciprocal(s, approx=False)


# ---------------------------------------------------------------------------
# fused Pallas kernel: whole ViT forward for ONE image per grid step
# ---------------------------------------------------------------------------
def fused_vit_kernel(patches_ref, wmapT_ref, baseT_ref,
                     ln1w_ref, ln1b_ref, wqkvT_ref, bqkvT_ref,
                     ln2w_ref, ln2b_ref, w1T_ref, b1T_ref, w2T_ref, b2T_ref,
                     wc_ref, bc_ref, o_ref):
    # patch embedding + class-token slot + positional encoding
    # patches_ref[0]: (INPUT_D, SEQ) with column 0 all-zero (cls slot);
    # baseT carries (cls | linear-mapper bias) + positional encoding.
    x = jnp.dot(wmapT_ref[...], patches_ref[0],
                preferred_element_type=jnp.float32) + baseT_ref[...]      # (D, SEQ)

    # transformer blocks (Python-unrolled, N_BLOCKS=2)
    for blk in range(N_BLOCKS):
        xn = _layernorm_t(x, ln1w_ref[blk], ln1b_ref[blk])
        # fused QKV projection: one (3D, D) @ (D, SEQ) matmul; the attention
        # scale 1/sqrt(d_head) is already folded into the Q rows.
        qkv = jnp.dot(wqkvT_ref[blk], xn,
                      preferred_element_type=jnp.float32) + bqkvT_ref[blk]  # (3D, SEQ)

        head_outs = []
        for h in range(N_HEADS):
            qh = qkv[h * D_HEAD:(h + 1) * D_HEAD, :]                          # (dh, S)
            kh = qkv[HIDDEN_D + h * D_HEAD:HIDDEN_D + (h + 1) * D_HEAD, :]
            vh = qkv[2 * HIDDEN_D + h * D_HEAD:2 * HIDDEN_D + (h + 1) * D_HEAD, :]
            # s[i, j] = sum_d q[d, i] * k[d, j]
            s = lax.dot_general(qh, kh, (((0,), (0,)), ((), ())),
                                preferred_element_type=jnp.float32)          # (S, S)
            attn = _softmax_last(s)
            # pv[d, i] = sum_j v[d, j] * attn[i, j]
            head_outs.append(
                lax.dot_general(vh, attn, (((1,), (1,)), ((), ())),
                                preferred_element_type=jnp.float32))         # (dh, S)
        msa = jnp.concatenate(head_outs, axis=0)                             # (D, S)

        out1 = x + msa
        on = _layernorm_t(out1, ln2w_ref[blk], ln2b_ref[blk])
        h1 = _gelu_erf(jnp.dot(w1T_ref[blk], on,
                               preferred_element_type=jnp.float32) + b1T_ref[blk])
        h2 = jnp.dot(w2T_ref[blk], h1,
                     preferred_element_type=jnp.float32) + b2T_ref[blk]
        x = out1 + h2

    # classifier head on the class-token column only
    cls = x[:, 0:1]                                                          # (D, 1)
    logits = lax.dot_general(cls, wc_ref[...], (((0,), (0,)), ((), ())),
                             preferred_element_type=jnp.float32) + bc_ref[...]  # (1, OUT_D)
    o_ref[0] = _softmax_last(logits)                                         # single store


# ---------------------------------------------------------------------------
# pallas_call wrapper
# ---------------------------------------------------------------------------
def _const_spec(shape):
    nd = len(shape)
    return pl.BlockSpec(tuple(shape), lambda b, _nd=nd: (0,) * _nd)


def prepare_kernel_params(P):
    """Transpose weights to the (out, in) / column-bias kernel layout and fold
    the 1/sqrt(d_head) attention scale into the Q rows of the fused QKV."""
    scale = 1.0 / (D_HEAD ** 0.5)
    qscale = jnp.concatenate(
        [jnp.full((HIDDEN_D,), scale, jnp.float32),
         jnp.ones((2 * HIDDEN_D,), jnp.float32)], axis=0)                    # (3D,)
    return dict(
        wmapT=P["wmap"].T,                                                   # (D, INPUT_D)
        baseT=P["base"].T,                                                   # (D, SEQ)
        ln1w=jnp.transpose(P["ln1w"], (0, 2, 1)),                            # (NB, D, 1)
        ln1b=jnp.transpose(P["ln1b"], (0, 2, 1)),
        ln2w=jnp.transpose(P["ln2w"], (0, 2, 1)),
        ln2b=jnp.transpose(P["ln2b"], (0, 2, 1)),
        wqkvT=jnp.transpose(P["wqkv"], (0, 2, 1)) * qscale[None, :, None],   # (NB, 3D, D)
        bqkvT=jnp.transpose(P["bqkv"], (0, 2, 1)) * qscale[None, :, None],   # (NB, 3D, 1)
        w1T=jnp.transpose(P["w1"], (0, 2, 1)),                               # (NB, MLP, D)
        b1T=jnp.transpose(P["b1"], (0, 2, 1)),                               # (NB, MLP, 1)
        w2T=jnp.transpose(P["w2"], (0, 2, 1)),                               # (NB, D, MLP)
        b2T=jnp.transpose(P["b2"], (0, 2, 1)),                               # (NB, D, 1)
        wc=P["wc"],                                                          # (D, OUT_D)
        bc=P["bc"])                                                          # (1, OUT_D)


def vit_forward(images, P):
    B = images.shape[0]
    patches = patchify_jax(images, N_PATCHES)                                # (B, 49, 16)
    # prepend an all-zero patch row per image -> token 0 becomes the cls slot
    patches_p = jnp.concatenate(
        [jnp.zeros((B, 1, INPUT_D), patches.dtype), patches], axis=1)        # (B, 50, 16)
    patchesT = jnp.transpose(patches_p, (0, 2, 1))                           # (B, 16, 50)

    K = prepare_kernel_params(P)
    args = (patchesT, K["wmapT"], K["baseT"],
            K["ln1w"], K["ln1b"], K["wqkvT"], K["bqkvT"],
            K["ln2w"], K["ln2b"], K["w1T"], K["b1T"], K["w2T"], K["b2T"],
            K["wc"], K["bc"])

    in_specs = [pl.BlockSpec((1, INPUT_D, SEQ), lambda b: (b, 0, 0))]
    in_specs += [_const_spec(a.shape) for a in args[1:]]

    out = pl.pallas_call(
        fused_vit_kernel,
        out_shape=jax.ShapeDtypeStruct((B, 1, OUT_D), jnp.float32),
        grid=(B,),
        in_specs=in_specs,
        out_specs=pl.BlockSpec((1, 1, OUT_D), lambda b: (b, 0, 0)),
        compiler_params=pltpu.CompilerParams(
            dimension_semantics=("parallel",)),
    )(*args)
    return out.reshape(B, OUT_D)


# ---------------------------------------------------------------------------
# parameters (deterministic synthetic init; weights stored (in, out);
# per-head QKV linears assembled into block-diagonal (D,D) then fused (D,3D))
# ---------------------------------------------------------------------------
def _block_diag_from_heads(w_heads):            # (H, dh, dh), torch [out, in]
    H, dh, _ = w_heads.shape
    D = H * dh
    bd = jnp.zeros((D, D), jnp.float32)
    for h in range(H):
        bd = bd.at[h * dh:(h + 1) * dh, h * dh:(h + 1) * dh].set(w_heads[h].T)
    return bd


def init_params(key):
    ks = iter(jax.random.split(key, 64))
    nrm = lambda shape, s=0.1: (s * jax.random.normal(next(ks), shape)).astype(jnp.float32)
    P = {}
    P["wmap"] = nrm((INPUT_D, HIDDEN_D))                 # linear_mapper (in, out)
    P["bmap"] = nrm((1, HIDDEN_D))
    P["cls"] = jax.random.uniform(next(ks), (1, HIDDEN_D), dtype=jnp.float32)
    P["pos"] = positional_encoding(SEQ, HIDDEN_D)

    ln1w, ln1b, ln2w, ln2b = [], [], [], []
    wqkv, bqkv, w1, b1, w2, b2 = [], [], [], [], [], []
    for _ in range(N_BLOCKS):
        ln1w.append(jnp.ones((1, HIDDEN_D), jnp.float32))
        ln1b.append(jnp.zeros((1, HIDDEN_D), jnp.float32))
        ln2w.append(jnp.ones((1, HIDDEN_D), jnp.float32))
        ln2b.append(jnp.zeros((1, HIDDEN_D), jnp.float32))
        ws, bs = [], []
        for _ in ("q", "k", "v"):
            w_heads = nrm((N_HEADS, D_HEAD, D_HEAD))
            b_heads = nrm((N_HEADS, D_HEAD))
            ws.append(_block_diag_from_heads(w_heads))
            bs.append(b_heads.reshape(1, HIDDEN_D))
        wqkv.append(jnp.concatenate(ws, axis=1))         # (D, 3D)
        bqkv.append(jnp.concatenate(bs, axis=1))         # (1, 3D)
        w1.append(nrm((HIDDEN_D, MLP_D)))
        b1.append(nrm((1, MLP_D)))
        w2.append(nrm((MLP_D, HIDDEN_D)))
        b2.append(nrm((1, HIDDEN_D)))

    P["ln1w"], P["ln1b"] = jnp.stack(ln1w), jnp.stack(ln1b)
    P["ln2w"], P["ln2b"] = jnp.stack(ln2w), jnp.stack(ln2b)
    P["wqkv"], P["bqkv"] = jnp.stack(wqkv), jnp.stack(bqkv)
    P["w1"], P["b1"] = jnp.stack(w1), jnp.stack(b1)
    P["w2"], P["b2"] = jnp.stack(w2), jnp.stack(b2)
    P["wc"] = nrm((HIDDEN_D, OUT_D))
    P["bc"] = nrm((1, OUT_D))

    # additive base per sequence position: row 0 -> class token, rows >=1 ->
    # patch-embed bias; positional encoding added for every row.
    row0 = (jnp.arange(SEQ)[:, None] == 0)
    P["base"] = jnp.where(row0, P["cls"], P["bmap"]) + P["pos"]   # (S, D)
    return P


# ---------------------------------------------------------------------------
# pure-JAX reference (mirrors the PyTorch module)
# ---------------------------------------------------------------------------
def ref_forward(images, P):
    B = images.shape[0]
    patches = patchify_jax(images, N_PATCHES)
    tok = patches.reshape(-1, INPUT_D) @ P["wmap"] + P["bmap"]
    tok = tok.reshape(B, N_PATCHES ** 2, HIDDEN_D)
    out = jnp.concatenate(
        [jnp.broadcast_to(P["cls"], (B, 1, HIDDEN_D)), tok], axis=1) + P["pos"][None]

    def ln(y, w, b):
        mu = y.mean(-1, keepdims=True)
        var = ((y - mu) ** 2).mean(-1, keepdims=True)
        return (y - mu) / jnp.sqrt(var + LN_EPS) * w + b

    for i in range(N_BLOCKS):
        xn = ln(out, P["ln1w"][i], P["ln1b"][i])
        q = xn @ P["wqkv"][i][:, 0:HIDDEN_D] + P["bqkv"][i][:, 0:HIDDEN_D]
        k = xn @ P["wqkv"][i][:, HIDDEN_D:2 * HIDDEN_D] + P["bqkv"][i][:, HIDDEN_D:2 * HIDDEN_D]
        v = xn @ P["wqkv"][i][:, 2 * HIDDEN_D:] + P["bqkv"][i][:, 2 * HIDDEN_D:]
        heads = []
        for h in range(N_HEADS):
            sl = slice(h * D_HEAD, (h + 1) * D_HEAD)
            attn = jax.nn.softmax(
                jnp.einsum("bqd,bkd->bqk", q[..., sl], k[..., sl]) / D_HEAD ** 0.5, -1)
            heads.append(jnp.einsum("bqk,bkd->bqd", attn, v[..., sl]))
        out1 = out + jnp.concatenate(heads, -1)
        on = ln(out1, P["ln2w"][i], P["ln2b"][i])
        h1 = jax.nn.gelu(on @ P["w1"][i] + P["b1"][i], approximate=False)
        out = out1 + h1 @ P["w2"][i] + P["b2"][i]
    return jax.nn.softmax(out[:, 0] @ P["wc"] + P["bc"], axis=-1)


if __name__ == "__main__":
    key = jax.random.PRNGKey(0)
    pkey, ikey = jax.random.split(key)
    params = init_params(pkey)
    images = jax.random.normal(ikey, (2,) + CHW, dtype=jnp.float32)   # NCHW

    fwd = jax.jit(vit_forward)
    out = jax.block_until_ready(fwd(images, params))
    ref = ref_forward(images, params)

    assert out.shape == (2, OUT_D), out.shape
    assert jnp.allclose(out, ref, atol=1e-4, rtol=1e-4), (out, ref)
    print("KERNEL_OK")
</pallas_src>

<mosaic_0001>
module attributes {stable_mosaic.version = 11 : i64} {
  func.func @fused_vit_kernel(%arg0: i32, %arg1: memref<1x16x50xf32, #tpu.memory_space<vmem>>, %arg2: memref<8x16xf32, #tpu.memory_space<vmem>>, %arg3: memref<8x50xf32, #tpu.memory_space<vmem>>, %arg4: memref<2x8x1xf32, #tpu.memory_space<vmem>>, %arg5: memref<2x8x1xf32, #tpu.memory_space<vmem>>, %arg6: memref<2x24x8xf32, #tpu.memory_space<vmem>>, %arg7: memref<2x24x1xf32, #tpu.memory_space<vmem>>, %arg8: memref<2x8x1xf32, #tpu.memory_space<vmem>>, %arg9: memref<2x8x1xf32, #tpu.memory_space<vmem>>, %arg10: memref<2x32x8xf32, #tpu.memory_space<vmem>>, %arg11: memref<2x32x1xf32, #tpu.memory_space<vmem>>, %arg12: memref<2x8x32xf32, #tpu.memory_space<vmem>>, %arg13: memref<2x8x1xf32, #tpu.memory_space<vmem>>, %arg14: memref<8x10xf32, #tpu.memory_space<vmem>>, %arg15: memref<1x10xf32, #tpu.memory_space<vmem>>, %arg16: memref<1x1x10xf32, #tpu.memory_space<vmem>>) attributes {dimension_semantics = [#tpu.dimension_semantics<parallel>], iteration_bounds = array<i64: 2>, scalar_prefetch = 0 : i64, scratch_operands = 0 : i64, tpu.core_type = #tpu.core_type<tc>, window_params = [{transform_indices = @transform_0, window_bounds = array<i64: 1, 16, 50>}, {pipeline_mode = #tpu.pipeline_mode<synchronous>, transform_indices = @transform_1, window_bounds = array<i64: 8, 16>}, {pipeline_mode = #tpu.pipeline_mode<synchronous>, transform_indices = @transform_2, window_bounds = array<i64: 8, 50>}, {pipeline_mode = #tpu.pipeline_mode<synchronous>, transform_indices = @transform_3, window_bounds = array<i64: 2, 8, 1>}, {pipeline_mode = #tpu.pipeline_mode<synchronous>, transform_indices = @transform_4, window_bounds = array<i64: 2, 8, 1>}, {pipeline_mode = #tpu.pipeline_mode<synchronous>, transform_indices = @transform_5, window_bounds = array<i64: 2, 24, 8>}, {pipeline_mode = #tpu.pipeline_mode<synchronous>, transform_indices = @transform_6, window_bounds = array<i64: 2, 24, 1>}, {pipeline_mode = #tpu.pipeline_mode<synchronous>, transform_indices = @transform_7, window_bounds = array<i64: 2, 8, 1>}, {pipeline_mode = #tpu.pipeline_mode<synchronous>, transform_indices = @transform_8, window_bounds = array<i64: 2, 8, 1>}, {pipeline_mode = #tpu.pipeline_mode<synchronous>, transform_indices = @transform_9, window_bounds = array<i64: 2, 32, 8>}, {pipeline_mode = #tpu.pipeline_mode<synchronous>, transform_indices = @transform_10, window_bounds = array<i64: 2, 32, 1>}, {pipeline_mode = #tpu.pipeline_mode<synchronous>, transform_indices = @transform_11, window_bounds = array<i64: 2, 8, 32>}, {pipeline_mode = #tpu.pipeline_mode<synchronous>, transform_indices = @transform_12, window_bounds = array<i64: 2, 8, 1>}, {pipeline_mode = #tpu.pipeline_mode<synchronous>, transform_indices = @transform_13, window_bounds = array<i64: 8, 10>}, {pipeline_mode = #tpu.pipeline_mode<synchronous>, transform_indices = @transform_14, window_bounds = array<i64: 1, 10>}, {transform_indices = @transform_15, window_bounds = array<i64: 1, 1, 10>}]} {
    %c0 = arith.constant 0 : index
    %c0_0 = arith.constant 0 : index
    %0 = vector.load %arg2[%c0, %c0_0] : memref<8x16xf32, #tpu.memory_space<vmem>>, vector<8x16xf32>
    %c0_1 = arith.constant 0 : index
    %c0_2 = arith.constant 0 : index
    %c0_3 = arith.constant 0 : index
    %1 = vector.load %arg1[%c0_1, %c0_2, %c0_3] : memref<1x16x50xf32, #tpu.memory_space<vmem>>, vector<1x16x50xf32>
    %2 = vector.shape_cast %1 : vector<1x16x50xf32> to vector<16x50xf32>
    %cst = arith.constant dense<0.000000e+00> : vector<8x50xf32>
    %3 = tpu.matmul %0, %2, %cst {dimension_numbers = #tpu.dot_dimension_numbers<[1], [0], [0], [1], [0, 0, 1, 1], [], []>} : vector<8x16xf32>, vector<16x50xf32>, vector<8x50xf32> -> vector<8x50xf32>
    %c0_4 = arith.constant 0 : index
    %c0_5 = arith.constant 0 : index
    %4 = vector.load %arg3[%c0_4, %c0_5] : memref<8x50xf32, #tpu.memory_space<vmem>>, vector<8x50xf32>
    %5 = arith.addf %3, %4 : vector<8x50xf32>
    %c0_6 = arith.constant 0 : index
    %c0_7 = arith.constant 0 : index
    %c0_8 = arith.constant 0 : index
    %6 = vector.load %arg4[%c0_6, %c0_7, %c0_8] : memref<2x8x1xf32, #tpu.memory_space<vmem>>, vector<1x8x1xf32>
    %7 = vector.shape_cast %6 : vector<1x8x1xf32> to vector<8x1xf32>
    %c0_9 = arith.constant 0 : index
    %c0_10 = arith.constant 0 : index
    %c0_11 = arith.constant 0 : index
    %8 = vector.load %arg5[%c0_9, %c0_10, %c0_11] : memref<2x8x1xf32, #tpu.memory_space<vmem>>, vector<1x8x1xf32>
    %9 = vector.shape_cast %8 : vector<1x8x1xf32> to vector<8x1xf32>
    %cst_12 = arith.constant dense<0.000000e+00> : vector<50xf32>
    %10 = vector.multi_reduction <add>, %5, %cst_12 [0] : vector<8x50xf32> to vector<50xf32>
    %11 = vector.shape_cast %10 : vector<50xf32> to vector<1x50xf32>
    %cst_13 = arith.constant 8.000000e+00 : f32
    %12 = vector.broadcast %cst_13 : f32 to vector<1x50xf32>
    %13 = arith.divf %11, %12 : vector<1x50xf32>
    %14 = vector.broadcast %13 : vector<1x50xf32> to vector<8x50xf32>
    %15 = arith.subf %5, %14 : vector<8x50xf32>
    %16 = arith.mulf %15, %15 : vector<8x50xf32>
    %cst_14 = arith.constant dense<0.000000e+00> : vector<50xf32>
    %17 = vector.multi_reduction <add>, %16, %cst_14 [0] : vector<8x50xf32> to vector<50xf32>
    %18 = vector.shape_cast %17 : vector<50xf32> to vector<1x50xf32>
    %cst_15 = arith.constant 8.000000e+00 : f32
    %19 = vector.broadcast %cst_15 : f32 to vector<1x50xf32>
    %20 = arith.divf %18, %19 : vector<1x50xf32>
    %21 = vector.broadcast %13 : vector<1x50xf32> to vector<8x50xf32>
    %22 = arith.subf %5, %21 : vector<8x50xf32>
    %cst_16 = arith.constant 9.99999974E-6 : f32
    %23 = vector.broadcast %cst_16 : f32 to vector<1x50xf32>
    %24 = arith.addf %20, %23 : vector<1x50xf32>
    %25 = math.rsqrt %24 : vector<1x50xf32>
    %26 = vector.broadcast %25 : vector<1x50xf32> to vector<8x50xf32>
    %27 = arith.mulf %22, %26 : vector<8x50xf32>
    %28 = vector.broadcast %7 : vector<8x1xf32> to vector<8x50xf32>
    %29 = arith.mulf %27, %28 : vector<8x50xf32>
    %30 = vector.broadcast %9 : vector<8x1xf32> to vector<8x50xf32>
    %31 = arith.addf %29, %30 : vector<8x50xf32>
    %c0_17 = arith.constant 0 : index
    %c0_18 = arith.constant 0 : index
    %c0_19 = arith.constant 0 : index
    %32 = vector.load %arg6[%c0_17, %c0_18, %c0_19] : memref<2x24x8xf32, #tpu.memory_space<vmem>>, vector<1x24x8xf32>
    %33 = vector.shape_cast %32 : vector<1x24x8xf32> to vector<24x8xf32>
    %cst_20 = arith.constant dense<0.000000e+00> : vector<24x50xf32>
    %34 = tpu.matmul %33, %31, %cst_20 {dimension_numbers = #tpu.dot_dimension_numbers<[1], [0], [0], [1], [0, 0, 1, 1], [], []>} : vector<24x8xf32>, vector<8x50xf32>, vector<24x50xf32> -> vector<24x50xf32>
    %c0_21 = arith.constant 0 : index
    %c0_22 = arith.constant 0 : index
    %c0_23 = arith.constant 0 : index
    %35 = vector.load %arg7[%c0_21, %c0_22, %c0_23] : memref<2x24x1xf32, #tpu.memory_space<vmem>>, vector<1x24x1xf32>
    %36 = vector.shape_cast %35 : vector<1x24x1xf32> to vector<24x1xf32>
    %37 = vector.broadcast %36 : vector<24x1xf32> to vector<24x50xf32>
    %38 = arith.addf %34, %37 : vector<24x50xf32>
    %39 = vector.extract_strided_slice %38 {offsets = [0, 0], sizes = [4, 50], strides = [1, 1]} : vector<24x50xf32> to vector<4x50xf32>
    %40 = vector.extract_strided_slice %38 {offsets = [8, 0], sizes = [4, 50], strides = [1, 1]} : vector<24x50xf32> to vector<4x50xf32>
    %41 = vector.extract_strided_slice %38 {offsets = [16, 0], sizes = [4, 50], strides = [1, 1]} : vector<24x50xf32> to vector<4x50xf32>
    %cst_24 = arith.constant dense<0.000000e+00> : vector<50x50xf32>
    %42 = tpu.matmul %39, %40, %cst_24 {dimension_numbers = #tpu.dot_dimension_numbers<[0], [0], [1], [1], [0, 1, 1, 1], [], []>} : vector<4x50xf32>, vector<4x50xf32>, vector<50x50xf32> -> vector<50x50xf32>
    %cst_25 = arith.constant dense<0xFF800000> : vector<50xf32>
    %43 = vector.multi_reduction <maximumf>, %42, %cst_25 [1] : vector<50x50xf32> to vector<50xf32>
    %44 = vector.shape_cast %43 : vector<50xf32> to vector<50x1xf32>
    %45 = vector.broadcast %44 : vector<50x1xf32> to vector<50x50xf32>
    %46 = arith.subf %42, %45 : vector<50x50xf32>
    %47 = math.exp %46 : vector<50x50xf32>
    %cst_26 = arith.constant dense<0.000000e+00> : vector<50xf32>
    %48 = vector.multi_reduction <add>, %47, %cst_26 [1] : vector<50x50xf32> to vector<50xf32>
    %49 = vector.shape_cast %48 : vector<50xf32> to vector<50x1xf32>
    %50 = tpu.reciprocal %49 : vector<50x1xf32> -> vector<50x1xf32>
    %51 = vector.broadcast %50 : vector<50x1xf32> to vector<50x50xf32>
    %52 = arith.mulf %47, %51 : vector<50x50xf32>
    %cst_27 = arith.constant dense<0.000000e+00> : vector<4x50xf32>
    %53 = tpu.matmul %41, %52, %cst_27 {dimension_numbers = #tpu.dot_dimension_numbers<[1], [1], [0], [0], [0, 0, 1, 0], [], []>} : vector<4x50xf32>, vector<50x50xf32>, vector<4x50xf32> -> vector<4x50xf32>
    %54 = vector.extract_strided_slice %38 {offsets = [4, 0], sizes = [4, 50], strides = [1, 1]} : vector<24x50xf32> to vector<4x50xf32>
    %55 = vector.extract_strided_slice %38 {offsets = [12, 0], sizes = [4, 50], strides = [1, 1]} : vector<24x50xf32> to vector<4x50xf32>
    %56 = vector.extract_strided_slice %38 {offsets = [20, 0], sizes = [4, 50], strides = [1, 1]} : vector<24x50xf32> to vector<4x50xf32>
    %cst_28 = arith.constant dense<0.000000e+00> : vector<50x50xf32>
    %57 = tpu.matmul %54, %55, %cst_28 {dimension_numbers = #tpu.dot_dimension_numbers<[0], [0], [1], [1], [0, 1, 1, 1], [], []>} : vector<4x50xf32>, vector<4x50xf32>, vector<50x50xf32> -> vector<50x50xf32>
    %cst_29 = arith.constant dense<0xFF800000> : vector<50xf32>
    %58 = vector.multi_reduction <maximumf>, %57, %cst_29 [1] : vector<50x50xf32> to vector<50xf32>
    %59 = vector.shape_cast %58 : vector<50xf32> to vector<50x1xf32>
    %60 = vector.broadcast %59 : vector<50x1xf32> to vector<50x50xf32>
    %61 = arith.subf %57, %60 : vector<50x50xf32>
    %62 = math.exp %61 : vector<50x50xf32>
    %cst_30 = arith.constant dense<0.000000e+00> : vector<50xf32>
    %63 = vector.multi_reduction <add>, %62, %cst_30 [1] : vector<50x50xf32> to vector<50xf32>
    %64 = vector.shape_cast %63 : vector<50xf32> to vector<50x1xf32>
    %65 = tpu.reciprocal %64 : vector<50x1xf32> -> vector<50x1xf32>
    %66 = vector.broadcast %65 : vector<50x1xf32> to vector<50x50xf32>
    %67 = arith.mulf %62, %66 : vector<50x50xf32>
    %cst_31 = arith.constant dense<0.000000e+00> : vector<4x50xf32>
    %68 = tpu.matmul %56, %67, %cst_31 {dimension_numbers = #tpu.dot_dimension_numbers<[1], [1], [0], [0], [0, 0, 1, 0], [], []>} : vector<4x50xf32>, vector<50x50xf32>, vector<4x50xf32> -> vector<4x50xf32>
    %69 = tpu.concatenate %53, %68 in 0 : vector<4x50xf32>, vector<4x50xf32> -> vector<8x50xf32>
    %70 = arith.addf %5, %69 : vector<8x50xf32>
    %c0_32 = arith.constant 0 : index
    %c0_33 = arith.constant 0 : index
    %c0_34 = arith.constant 0 : index
    %71 = vector.load %arg8[%c0_32, %c0_33, %c0_34] : memref<2x8x1xf32, #tpu.memory_space<vmem>>, vector<1x8x1xf32>
    %72 = vector.shape_cast %71 : vector<1x8x1xf32> to vector<8x1xf32>
    %c0_35 = arith.constant 0 : index
    %c0_36 = arith.constant 0 : index
    %c0_37 = arith.constant 0 : index
    %73 = vector.load %arg9[%c0_35, %c0_36, %c0_37] : memref<2x8x1xf32, #tpu.memory_space<vmem>>, vector<1x8x1xf32>
    %74 = vector.shape_cast %73 : vector<1x8x1xf32> to vector<8x1xf32>
    %cst_38 = arith.constant dense<0.000000e+00> : vector<50xf32>
    %75 = vector.multi_reduction <add>, %70, %cst_38 [0] : vector<8x50xf32> to vector<50xf32>
    %76 = vector.shape_cast %75 : vector<50xf32> to vector<1x50xf32>
    %cst_39 = arith.constant 8.000000e+00 : f32
    %77 = vector.broadcast %cst_39 : f32 to vector<1x50xf32>
    %78 = arith.divf %76, %77 : vector<1x50xf32>
    %79 = vector.broadcast %78 : vector<1x50xf32> to vector<8x50xf32>
    %80 = arith.subf %70, %79 : vector<8x50xf32>
    %81 = arith.mulf %80, %80 : vector<8x50xf32>
    %cst_40 = arith.constant dense<0.000000e+00> : vector<50xf32>
    %82 = vector.multi_reduction <add>, %81, %cst_40 [0] : vector<8x50xf32> to vector<50xf32>
    %83 = vector.shape_cast %82 : vector<50xf32> to vector<1x50xf32>
    %cst_41 = arith.constant 8.000000e+00 : f32
    %84 = vector.broadcast %cst_41 : f32 to vector<1x50xf32>
    %85 = arith.divf %83, %84 : vector<1x50xf32>
    %86 = vector.broadcast %78 : vector<1x50xf32> to vector<8x50xf32>
    %87 = arith.subf %70, %86 : vector<8x50xf32>
    %cst_42 = arith.constant 9.99999974E-6 : f32
    %88 = vector.broadcast %cst_42 : f32 to vector<1x50xf32>
    %89 = arith.addf %85, %88 : vector<1x50xf32>
    %90 = math.rsqrt %89 : vector<1x50xf32>
    %91 = vector.broadcast %90 : vector<1x50xf32> to vector<8x50xf32>
    %92 = arith.mulf %87, %91 : vector<8x50xf32>
    %93 = vector.broadcast %72 : vector<8x1xf32> to vector<8x50xf32>
    %94 = arith.mulf %92, %93 : vector<8x50xf32>
    %95 = vector.broadcast %74 : vector<8x1xf32> to vector<8x50xf32>
    %96 = arith.addf %94, %95 : vector<8x50xf32>
    %c0_43 = arith.constant 0 : index
    %c0_44 = arith.constant 0 : index
    %c0_45 = arith.constant 0 : index
    %97 = vector.load %arg10[%c0_43, %c0_44, %c0_45] : memref<2x32x8xf32, #tpu.memory_space<vmem>>, vector<1x32x8xf32>
    %98 = vector.shape_cast %97 : vector<1x32x8xf32> to vector<32x8xf32>
    %cst_46 = arith.constant dense<0.000000e+00> : vector<32x50xf32>
    %99 = tpu.matmul %98, %96, %cst_46 {dimension_numbers = #tpu.dot_dimension_numbers<[1], [0], [0], [1], [0, 0, 1, 1], [], []>} : vector<32x8xf32>, vector<8x50xf32>, vector<32x50xf32> -> vector<32x50xf32>
    %c0_47 = arith.constant 0 : index
    %c0_48 = arith.constant 0 : index
    %c0_49 = arith.constant 0 : index
    %100 = vector.load %arg11[%c0_47, %c0_48, %c0_49] : memref<2x32x1xf32, #tpu.memory_space<vmem>>, vector<1x32x1xf32>
    %101 = vector.shape_cast %100 : vector<1x32x1xf32> to vector<32x1xf32>
    %102 = vector.broadcast %101 : vector<32x1xf32> to vector<32x50xf32>
    %103 = arith.addf %99, %102 : vector<32x50xf32>
    %cst_50 = arith.constant 0.707106769 : f32
    %104 = vector.broadcast %cst_50 : f32 to vector<32x50xf32>
    %105 = arith.mulf %103, %104 : vector<32x50xf32>
    %106 = math.absf %105 : vector<32x50xf32>
    %cst_51 = arith.constant 0.327591091 : f32
    %107 = vector.broadcast %cst_51 : f32 to vector<32x50xf32>
    %108 = arith.mulf %107, %106 : vector<32x50xf32>
    %cst_52 = arith.constant 1.000000e+00 : f32
    %109 = vector.broadcast %cst_52 : f32 to vector<32x50xf32>
    %110 = arith.addf %109, %108 : vector<32x50xf32>
    %111 = tpu.reciprocal %110 : vector<32x50xf32> -> vector<32x50xf32>
    %cst_53 = arith.constant 1.06140542 : f32
    %112 = vector.broadcast %cst_53 : f32 to vector<32x50xf32>
    %113 = arith.mulf %112, %111 : vector<32x50xf32>
    %cst_54 = arith.constant -1.45315206 : f32
    %114 = vector.broadcast %cst_54 : f32 to vector<32x50xf32>
    %115 = arith.addf %113, %114 : vector<32x50xf32>
    %116 = arith.mulf %115, %111 : vector<32x50xf32>
    %cst_55 = arith.constant 1.42141378 : f32
    %117 = vector.broadcast %cst_55 : f32 to vector<32x50xf32>
    %118 = arith.addf %116, %117 : vector<32x50xf32>
    %119 = arith.mulf %118, %111 : vector<32x50xf32>
    %cst_56 = arith.constant -0.284496725 : f32
    %120 = vector.broadcast %cst_56 : f32 to vector<32x50xf32>
    %121 = arith.addf %119, %120 : vector<32x50xf32>
    %122 = arith.mulf %121, %111 : vector<32x50xf32>
    %cst_57 = arith.constant 0.254829586 : f32
    %123 = vector.broadcast %cst_57 : f32 to vector<32x50xf32>
    %124 = arith.addf %122, %123 : vector<32x50xf32>
    %125 = arith.mulf %124, %111 : vector<32x50xf32>
    %cst_58 = arith.constant 0.000000e+00 : f32
    %126 = vector.broadcast %cst_58 : f32 to vector<32x50xf32>
    %127 = arith.subf %126, %106 : vector<32x50xf32>
    %128 = arith.mulf %127, %106 : vector<32x50xf32>
    %129 = math.exp %128 : vector<32x50xf32>
    %130 = arith.mulf %125, %129 : vector<32x50xf32>
    %cst_59 = arith.constant 1.000000e+00 : f32
    %131 = vector.broadcast %cst_59 : f32 to vector<32x50xf32>
    %132 = arith.subf %131, %130 : vector<32x50xf32>
    %cst_60 = arith.constant 0.000000e+00 : f32
    %133 = vector.broadcast %cst_60 : f32 to vector<32x50xf32>
    %134 = arith.cmpf oge, %105, %133 : vector<32x50xf32>
    %cst_61 = arith.constant 0.000000e+00 : f32
    %135 = vector.broadcast %cst_61 : f32 to vector<32x50xf32>
    %136 = arith.subf %135, %132 : vector<32x50xf32>
    %137 = arith.select %134, %132, %136 : vector<32x50xi1>, vector<32x50xf32>
    %cst_62 = arith.constant 5.000000e-01 : f32
    %138 = vector.broadcast %cst_62 : f32 to vector<32x50xf32>
    %139 = arith.mulf %138, %103 : vector<32x50xf32>
    %cst_63 = arith.constant 1.000000e+00 : f32
    %140 = vector.broadcast %cst_63 : f32 to vector<32x50xf32>
    %141 = arith.addf %140, %137 : vector<32x50xf32>
    %142 = arith.mulf %139, %141 : vector<32x50xf32>
    %c0_64 = arith.constant 0 : index
    %c0_65 = arith.constant 0 : index
    %c0_66 = arith.constant 0 : index
    %143 = vector.load %arg12[%c0_64, %c0_65, %c0_66] : memref<2x8x32xf32, #tpu.memory_space<vmem>>, vector<1x8x32xf32>
    %144 = vector.shape_cast %143 : vector<1x8x32xf32> to vector<8x32xf32>
    %cst_67 = arith.constant dense<0.000000e+00> : vector<8x50xf32>
    %145 = tpu.matmul %144, %142, %cst_67 {dimension_numbers = #tpu.dot_dimension_numbers<[1], [0], [0], [1], [0, 0, 1, 1], [], []>} : vector<8x32xf32>, vector<32x50xf32>, vector<8x50xf32> -> vector<8x50xf32>
    %c0_68 = arith.constant 0 : index
    %c0_69 = arith.constant 0 : index
    %c0_70 = arith.constant 0 : index
    %146 = vector.load %arg13[%c0_68, %c0_69, %c0_70] : memref<2x8x1xf32, #tpu.memory_space<vmem>>, vector<1x8x1xf32>
    %147 = vector.shape_cast %146 : vector<1x8x1xf32> to vector<8x1xf32>
    %148 = vector.broadcast %147 : vector<8x1xf32> to vector<8x50xf32>
    %149 = arith.addf %145, %148 : vector<8x50xf32>
    %150 = arith.addf %70, %149 : vector<8x50xf32>
    %c1 = arith.constant 1 : index
    %c0_71 = arith.constant 0 : index
    %c0_72 = arith.constant 0 : index
    %151 = vector.load %arg4[%c1, %c0_71, %c0_72] : memref<2x8x1xf32, #tpu.memory_space<vmem>>, vector<1x8x1xf32>
    %152 = vector.shape_cast %151 : vector<1x8x1xf32> to vector<8x1xf32>
    %c1_73 = arith.constant 1 : index
    %c0_74 = arith.constant 0 : index
    %c0_75 = arith.constant 0 : index
    %153 = vector.load %arg5[%c1_73, %c0_74, %c0_75] : memref<2x8x1xf32, #tpu.memory_space<vmem>>, vector<1x8x1xf32>
    %154 = vector.shape_cast %153 : vector<1x8x1xf32> to vector<8x1xf32>
    %cst_76 = arith.constant dense<0.000000e+00> : vector<50xf32>
    %155 = vector.multi_reduction <add>, %150, %cst_76 [0] : vector<8x50xf32> to vector<50xf32>
    %156 = vector.shape_cast %155 : vector<50xf32> to vector<1x50xf32>
    %cst_77 = arith.constant 8.000000e+00 : f32
    %157 = vector.broadcast %cst_77 : f32 to vector<1x50xf32>
    %158 = arith.divf %156, %157 : vector<1x50xf32>
    %159 = vector.broadcast %158 : vector<1x50xf32> to vector<8x50xf32>
    %160 = arith.subf %150, %159 : vector<8x50xf32>
    %161 = arith.mulf %160, %160 : vector<8x50xf32>
    %cst_78 = arith.constant dense<0.000000e+00> : vector<50xf32>
    %162 = vector.multi_reduction <add>, %161, %cst_78 [0] : vector<8x50xf32> to vector<50xf32>
    %163 = vector.shape_cast %162 : vector<50xf32> to vector<1x50xf32>
    %cst_79 = arith.constant 8.000000e+00 : f32
    %164 = vector.broadcast %cst_79 : f32 to vector<1x50xf32>
    %165 = arith.divf %163, %164 : vector<1x50xf32>
    %166 = vector.broadcast %158 : vector<1x50xf32> to vector<8x50xf32>
    %167 = arith.subf %150, %166 : vector<8x50xf32>
    %cst_80 = arith.constant 9.99999974E-6 : f32
    %168 = vector.broadcast %cst_80 : f32 to vector<1x50xf32>
    %169 = arith.addf %165, %168 : vector<1x50xf32>
    %170 = math.rsqrt %169 : vector<1x50xf32>
    %171 = vector.broadcast %170 : vector<1x50xf32> to vector<8x50xf32>
    %172 = arith.mulf %167, %171 : vector<8x50xf32>
    %173 = vector.broadcast %152 : vector<8x1xf32> to vector<8x50xf32>
    %174 = arith.mulf %172, %173 : vector<8x50xf32>
    %175 = vector.broadcast %154 : vector<8x1xf32> to vector<8x50xf32>
    %176 = arith.addf %174, %175 : vector<8x50xf32>
    %c1_81 = arith.constant 1 : index
    %c0_82 = arith.constant 0 : index
    %c0_83 = arith.constant 0 : index
    %177 = vector.load %arg6[%c1_81, %c0_82, %c0_83] : memref<2x24x8xf32, #tpu.memory_space<vmem>>, vector<1x24x8xf32>
    %178 = vector.shape_cast %177 : vector<1x24x8xf32> to vector<24x8xf32>
    %cst_84 = arith.constant dense<0.000000e+00> : vector<24x50xf32>
    %179 = tpu.matmul %178, %176, %cst_84 {dimension_numbers = #tpu.dot_dimension_numbers<[1], [0], [0], [1], [0, 0, 1, 1], [], []>} : vector<24x8xf32>, vector<8x50xf32>, vector<24x50xf32> -> vector<24x50xf32>
    %c1_85 = arith.constant 1 : index
    %c0_86 = arith.constant 0 : index
    %c0_87 = arith.constant 0 : index
    %180 = vector.load %arg7[%c1_85, %c0_86, %c0_87] : memref<2x24x1xf32, #tpu.memory_space<vmem>>, vector<1x24x1xf32>
    %181 = vector.shape_cast %180 : vector<1x24x1xf32> to vector<24x1xf32>
    %182 = vector.broadcast %181 : vector<24x1xf32> to vector<24x50xf32>
    %183 = arith.addf %179, %182 : vector<24x50xf32>
    %184 = vector.extract_strided_slice %183 {offsets = [0, 0], sizes = [4, 50], strides = [1, 1]} : vector<24x50xf32> to vector<4x50xf32>
    %185 = vector.extract_strided_slice %183 {offsets = [8, 0], sizes = [4, 50], strides = [1, 1]} : vector<24x50xf32> to vector<4x50xf32>
    %186 = vector.extract_strided_slice %183 {offsets = [16, 0], sizes = [4, 50], strides = [1, 1]} : vector<24x50xf32> to vector<4x50xf32>
    %cst_88 = arith.constant dense<0.000000e+00> : vector<50x50xf32>
    %187 = tpu.matmul %184, %185, %cst_88 {dimension_numbers = #tpu.dot_dimension_numbers<[0], [0], [1], [1], [0, 1, 1, 1], [], []>} : vector<4x50xf32>, vector<4x50xf32>, vector<50x50xf32> -> vector<50x50xf32>
    %cst_89 = arith.constant dense<0xFF800000> : vector<50xf32>
    %188 = vector.multi_reduction <maximumf>, %187, %cst_89 [1] : vector<50x50xf32> to vector<50xf32>
    %189 = vector.shape_cast %188 : vector<50xf32> to vector<50x1xf32>
    %190 = vector.broadcast %189 : vector<50x1xf32> to vector<50x50xf32>
    %191 = arith.subf %187, %190 : vector<50x50xf32>
    %192 = math.exp %191 : vector<50x50xf32>
    %cst_90 = arith.constant dense<0.000000e+00> : vector<50xf32>
    %193 = vector.multi_reduction <add>, %192, %cst_90 [1] : vector<50x50xf32> to vector<50xf32>
    %194 = vector.shape_cast %193 : vector<50xf32> to vector<50x1xf32>
    %195 = tpu.reciprocal %194 : vector<50x1xf32> -> vector<50x1xf32>
    %196 = vector.broadcast %195 : vector<50x1xf32> to vector<50x50xf32>
    %197 = arith.mulf %192, %196 : vector<50x50xf32>
    %cst_91 = arith.constant dense<0.000000e+00> : vector<4x50xf32>
    %198 = tpu.matmul %186, %197, %cst_91 {dimension_numbers = #tpu.dot_dimension_numbers<[1], [1], [0], [0], [0, 0, 1, 0], [], []>} : vector<4x50xf32>, vector<50x50xf32>, vector<4x50xf32> -> vector<4x50xf32>
    %199 = vector.extract_strided_slice %183 {offsets = [4, 0], sizes = [4, 50], strides = [1, 1]} : vector<24x50xf32> to vector<4x50xf32>
    %200 = vector.extract_strided_slice %183 {offsets = [12, 0], sizes = [4, 50], strides = [1, 1]} : vector<24x50xf32> to vector<4x50xf32>
    %201 = vector.extract_strided_slice %183 {offsets = [20, 0], sizes = [4, 50], strides = [1, 1]} : vector<24x50xf32> to vector<4x50xf32>
    %cst_92 = arith.constant dense<0.000000e+00> : vector<50x50xf32>
    %202 = tpu.matmul %199, %200, %cst_92 {dimension_numbers = #tpu.dot_dimension_numbers<[0], [0], [1], [1], [0, 1, 1, 1], [], []>} : vector<4x50xf32>, vector<4x50xf32>, vector<50x50xf32> -> vector<50x50xf32>
    %cst_93 = arith.constant dense<0xFF800000> : vector<50xf32>
    %203 = vector.multi_reduction <maximumf>, %202, %cst_93 [1] : vector<50x50xf32> to vector<50xf32>
    %204 = vector.shape_cast %203 : vector<50xf32> to vector<50x1xf32>
    %205 = vector.broadcast %204 : vector<50x1xf32> to vector<50x50xf32>
    %206 = arith.subf %202, %205 : vector<50x50xf32>
    %207 = math.exp %206 : vector<50x50xf32>
    %cst_94 = arith.constant dense<0.000000e+00> : vector<50xf32>
    %208 = vector.multi_reduction <add>, %207, %cst_94 [1] : vector<50x50xf32> to vector<50xf32>
    %209 = vector.shape_cast %208 : vector<50xf32> to vector<50x1xf32>
    %210 = tpu.reciprocal %209 : vector<50x1xf32> -> vector<50x1xf32>
    %211 = vector.broadcast %210 : vector<50x1xf32> to vector<50x50xf32>
    %212 = arith.mulf %207, %211 : vector<50x50xf32>
    %cst_95 = arith.constant dense<0.000000e+00> : vector<4x50xf32>
    %213 = tpu.matmul %201, %212, %cst_95 {dimension_numbers = #tpu.dot_dimension_numbers<[1], [1], [0], [0], [0, 0, 1, 0], [], []>} : vector<4x50xf32>, vector<50x50xf32>, vector<4x50xf32> -> vector<4x50xf32>
    %214 = tpu.concatenate %198, %213 in 0 : vector<4x50xf32>, vector<4x50xf32> -> vector<8x50xf32>
    %215 = arith.addf %150, %214 : vector<8x50xf32>
    %c1_96 = arith.constant 1 : index
    %c0_97 = arith.constant 0 : index
    %c0_98 = arith.constant 0 : index
    %216 = vector.load %arg8[%c1_96, %c0_97, %c0_98] : memref<2x8x1xf32, #tpu.memory_space<vmem>>, vector<1x8x1xf32>
    %217 = vector.shape_cast %216 : vector<1x8x1xf32> to vector<8x1xf32>
    %c1_99 = arith.constant 1 : index
    %c0_100 = arith.constant 0 : index
    %c0_101 = arith.constant 0 : index
    %218 = vector.load %arg9[%c1_99, %c0_100, %c0_101] : memref<2x8x1xf32, #tpu.memory_space<vmem>>, vector<1x8x1xf32>
    %219 = vector.shape_cast %218 : vector<1x8x1xf32> to vector<8x1xf32>
    %cst_102 = arith.constant dense<0.000000e+00> : vector<50xf32>
    %220 = vector.multi_reduction <add>, %215, %cst_102 [0] : vector<8x50xf32> to vector<50xf32>
    %221 = vector.shape_cast %220 : vector<50xf32> to vector<1x50xf32>
    %cst_103 = arith.constant 8.000000e+00 : f32
    %222 = vector.broadcast %cst_103 : f32 to vector<1x50xf32>
    %223 = arith.divf %221, %222 : vector<1x50xf32>
    %224 = vector.broadcast %223 : vector<1x50xf32> to vector<8x50xf32>
    %225 = arith.subf %215, %224 : vector<8x50xf32>
    %226 = arith.mulf %225, %225 : vector<8x50xf32>
    %cst_104 = arith.constant dense<0.000000e+00> : vector<50xf32>
    %227 = vector.multi_reduction <add>, %226, %cst_104 [0] : vector<8x50xf32> to vector<50xf32>
    %228 = vector.shape_cast %227 : vector<50xf32> to vector<1x50xf32>
    %cst_105 = arith.constant 8.000000e+00 : f32
    %229 = vector.broadcast %cst_105 : f32 to vector<1x50xf32>
    %230 = arith.divf %228, %229 : vector<1x50xf32>
    %231 = vector.broadcast %223 : vector<1x50xf32> to vector<8x50xf32>
    %232 = arith.subf %215, %231 : vector<8x50xf32>
    %cst_106 = arith.constant 9.99999974E-6 : f32
    %233 = vector.broadcast %cst_106 : f32 to vector<1x50xf32>
    %234 = arith.addf %230, %233 : vector<1x50xf32>
    %235 = math.rsqrt %234 : vector<1x50xf32>
    %236 = vector.broadcast %235 : vector<1x50xf32> to vector<8x50xf32>
    %237 = arith.mulf %232, %236 : vector<8x50xf32>
    %238 = vector.broadcast %217 : vector<8x1xf32> to vector<8x50xf32>
    %239 = arith.mulf %237, %238 : vector<8x50xf32>
    %240 = vector.broadcast %219 : vector<8x1xf32> to vector<8x50xf32>
    %241 = arith.addf %239, %240 : vector<8x50xf32>
    %c1_107 = arith.constant 1 : index
    %c0_108 = arith.constant 0 : index
    %c0_109 = arith.constant 0 : index
    %242 = vector.load %arg10[%c1_107, %c0_108, %c0_109] : memref<2x32x8xf32, #tpu.memory_space<vmem>>, vector<1x32x8xf32>
    %243 = vector.shape_cast %242 : vector<1x32x8xf32> to vector<32x8xf32>
    %cst_110 = arith.constant dense<0.000000e+00> : vector<32x50xf32>
    %244 = tpu.matmul %243, %241, %cst_110 {dimension_numbers = #tpu.dot_dimension_numbers<[1], [0], [0], [1], [0, 0, 1, 1], [], []>} : vector<32x8xf32>, vector<8x50xf32>, vector<32x50xf32> -> vector<32x50xf32>
    %c1_111 = arith.constant 1 : index
    %c0_112 = arith.constant 0 : index
    %c0_113 = arith.constant 0 : index
    %245 = vector.load %arg11[%c1_111, %c0_112, %c0_113] : memref<2x32x1xf32, #tpu.memory_space<vmem>>, vector<1x32x1xf32>
    %246 = vector.shape_cast %245 : vector<1x32x1xf32> to vector<32x1xf32>
    %247 = vector.broadcast %246 : vector<32x1xf32> to vector<32x50xf32>
    %248 = arith.addf %244, %247 : vector<32x50xf32>
    %cst_114 = arith.constant 0.707106769 : f32
    %249 = vector.broadcast %cst_114 : f32 to vector<32x50xf32>
    %250 = arith.mulf %248, %249 : vector<32x50xf32>
    %251 = math.absf %250 : vector<32x50xf32>
    %cst_115 = arith.constant 0.327591091 : f32
    %252 = vector.broadcast %cst_115 : f32 to vector<32x50xf32>
    %253 = arith.mulf %252, %251 : vector<32x50xf32>
    %cst_116 = arith.constant 1.000000e+00 : f32
    %254 = vector.broadcast %cst_116 : f32 to vector<32x50xf32>
    %255 = arith.addf %254, %253 : vector<32x50xf32>
    %256 = tpu.reciprocal %255 : vector<32x50xf32> -> vector<32x50xf32>
    %cst_117 = arith.constant 1.06140542 : f32
    %257 = vector.broadcast %cst_117 : f32 to vector<32x50xf32>
    %258 = arith.mulf %257, %256 : vector<32x50xf32>
    %cst_118 = arith.constant -1.45315206 : f32
    %259 = vector.broadcast %cst_118 : f32 to vector<32x50xf32>
    %260 = arith.addf %258, %259 : vector<32x50xf32>
    %261 = arith.mulf %260, %256 : vector<32x50xf32>
    %cst_119 = arith.constant 1.42141378 : f32
    %262 = vector.broadcast %cst_119 : f32 to vector<32x50xf32>
    %263 = arith.addf %261, %262 : vector<32x50xf32>
    %264 = arith.mulf %263, %256 : vector<32x50xf32>
    %cst_120 = arith.constant -0.284496725 : f32
    %265 = vector.broadcast %cst_120 : f32 to vector<32x50xf32>
    %266 = arith.addf %264, %265 : vector<32x50xf32>
    %267 = arith.mulf %266, %256 : vector<32x50xf32>
    %cst_121 = arith.constant 0.254829586 : f32
    %268 = vector.broadcast %cst_121 : f32 to vector<32x50xf32>
    %269 = arith.addf %267, %268 : vector<32x50xf32>
    %270 = arith.mulf %269, %256 : vector<32x50xf32>
    %cst_122 = arith.constant 0.000000e+00 : f32
    %271 = vector.broadcast %cst_122 : f32 to vector<32x50xf32>
    %272 = arith.subf %271, %251 : vector<32x50xf32>
    %273 = arith.mulf %272, %251 : vector<32x50xf32>
    %274 = math.exp %273 : vector<32x50xf32>
    %275 = arith.mulf %270, %274 : vector<32x50xf32>
    %cst_123 = arith.constant 1.000000e+00 : f32
    %276 = vector.broadcast %cst_123 : f32 to vector<32x50xf32>
    %277 = arith.subf %276, %275 : vector<32x50xf32>
    %cst_124 = arith.constant 0.000000e+00 : f32
    %278 = vector.broadcast %cst_124 : f32 to vector<32x50xf32>
    %279 = arith.cmpf oge, %250, %278 : vector<32x50xf32>
    %cst_125 = arith.constant 0.000000e+00 : f32
    %280 = vector.broadcast %cst_125 : f32 to vector<32x50xf32>
    %281 = arith.subf %280, %277 : vector<32x50xf32>
    %282 = arith.select %279, %277, %281 : vector<32x50xi1>, vector<32x50xf32>
    %cst_126 = arith.constant 5.000000e-01 : f32
    %283 = vector.broadcast %cst_126 : f32 to vector<32x50xf32>
    %284 = arith.mulf %283, %248 : vector<32x50xf32>
    %cst_127 = arith.constant 1.000000e+00 : f32
    %285 = vector.broadcast %cst_127 : f32 to vector<32x50xf32>
    %286 = arith.addf %285, %282 : vector<32x50xf32>
    %287 = arith.mulf %284, %286 : vector<32x50xf32>
    %c1_128 = arith.constant 1 : index
    %c0_129 = arith.constant 0 : index
    %c0_130 = arith.constant 0 : index
    %288 = vector.load %arg12[%c1_128, %c0_129, %c0_130] : memref<2x8x32xf32, #tpu.memory_space<vmem>>, vector<1x8x32xf32>
    %289 = vector.shape_cast %288 : vector<1x8x32xf32> to vector<8x32xf32>
    %cst_131 = arith.constant dense<0.000000e+00> : vector<8x50xf32>
    %290 = tpu.matmul %289, %287, %cst_131 {dimension_numbers = #tpu.dot_dimension_numbers<[1], [0], [0], [1], [0, 0, 1, 1], [], []>} : vector<8x32xf32>, vector<32x50xf32>, vector<8x50xf32> -> vector<8x50xf32>
    %c1_132 = arith.constant 1 : index
    %c0_133 = arith.constant 0 : index
    %c0_134 = arith.constant 0 : index
    %291 = vector.load %arg13[%c1_132, %c0_133, %c0_134] : memref<2x8x1xf32, #tpu.memory_space<vmem>>, vector<1x8x1xf32>
    %292 = vector.shape_cast %291 : vector<1x8x1xf32> to vector<8x1xf32>
    %293 = vector.broadcast %292 : vector<8x1xf32> to vector<8x50xf32>
    %294 = arith.addf %290, %293 : vector<8x50xf32>
    %295 = arith.addf %215, %294 : vector<8x50xf32>
    %296 = vector.extract_strided_slice %295 {offsets = [0, 0], sizes = [8, 1], strides = [1, 1]} : vector<8x50xf32> to vector<8x1xf32>
    %c0_135 = arith.constant 0 : index
    %c0_136 = arith.constant 0 : index
    %297 = vector.load %arg14[%c0_135, %c0_136] : memref<8x10xf32, #tpu.memory_space<vmem>>, vector<8x10xf32>
    %cst_137 = arith.constant dense<0.000000e+00> : vector<1x10xf32>
    %298 = tpu.matmul %296, %297, %cst_137 {dimension_numbers = #tpu.dot_dimension_numbers<[0], [0], [1], [1], [0, 1, 1, 1], [], []>} : vector<8x1xf32>, vector<8x10xf32>, vector<1x10xf32> -> vector<1x10xf32>
    %c0_138 = arith.constant 0 : index
    %c0_139 = arith.constant 0 : index
    %299 = vector.load %arg15[%c0_138, %c0_139] : memref<1x10xf32, #tpu.memory_space<vmem>>, vector<1x10xf32>
    %300 = arith.addf %298, %299 : vector<1x10xf32>
    %cst_140 = arith.constant dense<0xFF800000> : vector<1xf32>
    %301 = vector.multi_reduction <maximumf>, %300, %cst_140 [1] : vector<1x10xf32> to vector<1xf32>
    %302 = vector.shape_cast %301 : vector<1xf32> to vector<1x1xf32>
    %303 = vector.broadcast %302 : vector<1x1xf32> to vector<1x10xf32>
    %304 = arith.subf %300, %303 : vector<1x10xf32>
    %305 = math.exp %304 : vector<1x10xf32>
    %cst_141 = arith.constant dense<0.000000e+00> : vector<1xf32>
    %306 = vector.multi_reduction <add>, %305, %cst_141 [1] : vector<1x10xf32> to vector<1xf32>
    %307 = vector.shape_cast %306 : vector<1xf32> to vector<1x1xf32>
    %308 = tpu.reciprocal %307 : vector<1x1xf32> -> vector<1x1xf32>
    %309 = vector.broadcast %308 : vector<1x1xf32> to vector<1x10xf32>
    %310 = arith.mulf %305, %309 : vector<1x10xf32>
    %c0_142 = arith.constant 0 : index
    %c0_143 = arith.constant 0 : index
    %c0_144 = arith.constant 0 : index
    %311 = vector.load %arg16[%c0_142, %c0_143, %c0_144] : memref<1x1x10xf32, #tpu.memory_space<vmem>>, vector<1x1x10xf32>
    %312 = vector.shape_cast %311 : vector<1x1x10xf32> to vector<1x10xf32>
    %313 = vector.shape_cast %310 : vector<1x10xf32> to vector<1x1x10xf32>
    tpu.vector_store %arg16[%c0_142, %c0_143, %c0_144], %313 {strides = array<i32>} : memref<1x1x10xf32, #tpu.memory_space<vmem>>, vector<1x1x10xf32>,
    return
  }
  func.func @transform_0(%arg0: i32) -> (i32, i32, i32) {
    %c0_i32 = arith.constant 0 : i32
    %c0_i32_0 = arith.constant 0 : i32
    %c0_i32_1 = arith.constant 0 : i32
    return %arg0, %c0_i32, %c0_i32_0 : i32, i32, i32
  }
  func.func @transform_1(%arg0: i32) -> (i32, i32) {
    %c0_i32 = arith.constant 0 : i32
    %c0_i32_0 = arith.constant 0 : i32
    %c0_i32_1 = arith.constant 0 : i32
    return %c0_i32, %c0_i32_0 : i32, i32
  }
  func.func @transform_2(%arg0: i32) -> (i32, i32) {
    %c0_i32 = arith.constant 0 : i32
    %c0_i32_0 = arith.constant 0 : i32
    %c0_i32_1 = arith.constant 0 : i32
    return %c0_i32, %c0_i32_0 : i32, i32
  }
  func.func @transform_3(%arg0: i32) -> (i32, i32, i32) {
    %c0_i32 = arith.constant 0 : i32
    %c0_i32_0 = arith.constant 0 : i32
    %c0_i32_1 = arith.constant 0 : i32
    %c0_i32_2 = arith.constant 0 : i32
    return %c0_i32, %c0_i32_0, %c0_i32_1 : i32, i32, i32
  }
  func.func @transform_4(%arg0: i32) -> (i32, i32, i32) {
    %c0_i32 = arith.constant 0 : i32
    %c0_i32_0 = arith.constant 0 : i32
    %c0_i32_1 = arith.constant 0 : i32
    %c0_i32_2 = arith.constant 0 : i32
    return %c0_i32, %c0_i32_0, %c0_i32_1 : i32, i32, i32
  }
  func.func @transform_5(%arg0: i32) -> (i32, i32, i32) {
    %c0_i32 = arith.constant 0 : i32
    %c0_i32_0 = arith.constant 0 : i32
    %c0_i32_1 = arith.constant 0 : i32
    %c0_i32_2 = arith.constant 0 : i32
    return %c0_i32, %c0_i32_0, %c0_i32_1 : i32, i32, i32
  }
  func.func @transform_6(%arg0: i32) -> (i32, i32, i32) {
    %c0_i32 = arith.constant 0 : i32
    %c0_i32_0 = arith.constant 0 : i32
    %c0_i32_1 = arith.constant 0 : i32
    %c0_i32_2 = arith.constant 0 : i32
    return %c0_i32, %c0_i32_0, %c0_i32_1 : i32, i32, i32
  }
  func.func @transform_7(%arg0: i32) -> (i32, i32, i32) {
    %c0_i32 = arith.constant 0 : i32
    %c0_i32_0 = arith.constant 0 : i32
    %c0_i32_1 = arith.constant 0 : i32
    %c0_i32_2 = arith.constant 0 : i32
    return %c0_i32, %c0_i32_0, %c0_i32_1 : i32, i32, i32
  }
  func.func @transform_8(%arg0: i32) -> (i32, i32, i32) {
    %c0_i32 = arith.constant 0 : i32
    %c0_i32_0 = arith.constant 0 : i32
    %c0_i32_1 = arith.constant 0 : i32
    %c0_i32_2 = arith.constant 0 : i32
    return %c0_i32, %c0_i32_0, %c0_i32_1 : i32, i32, i32
  }
  func.func @transform_9(%arg0: i32) -> (i32, i32, i32) {
    %c0_i32 = arith.constant 0 : i32
    %c0_i32_0 = arith.constant 0 : i32
    %c0_i32_1 = arith.constant 0 : i32
    %c0_i32_2 = arith.constant 0 : i32
    return %c0_i32, %c0_i32_0, %c0_i32_1 : i32, i32, i32
  }
  func.func @transform_10(%arg0: i32) -> (i32, i32, i32) {
    %c0_i32 = arith.constant 0 : i32
    %c0_i32_0 = arith.constant 0 : i32
    %c0_i32_1 = arith.constant 0 : i32
    %c0_i32_2 = arith.constant 0 : i32
    return %c0_i32, %c0_i32_0, %c0_i32_1 : i32, i32, i32
  }
  func.func @transform_11(%arg0: i32) -> (i32, i32, i32) {
    %c0_i32 = arith.constant 0 : i32
    %c0_i32_0 = arith.constant 0 : i32
    %c0_i32_1 = arith.constant 0 : i32
    %c0_i32_2 = arith.constant 0 : i32
    return %c0_i32, %c0_i32_0, %c0_i32_1 : i32, i32, i32
  }
  func.func @transform_12(%arg0: i32) -> (i32, i32, i32) {
    %c0_i32 = arith.constant 0 : i32
    %c0_i32_0 = arith.constant 0 : i32
    %c0_i32_1 = arith.constant 0 : i32
    %c0_i32_2 = arith.constant 0 : i32
    return %c0_i32, %c0_i32_0, %c0_i32_1 : i32, i32, i32
  }
  func.func @transform_13(%arg0: i32) -> (i32, i32) {
    %c0_i32 = arith.constant 0 : i32
    %c0_i32_0 = arith.constant 0 : i32
    %c0_i32_1 = arith.constant 0 : i32
    return %c0_i32, %c0_i32_0 : i32, i32
  }
  func.func @transform_14(%arg0: i32) -> (i32, i32) {
    %c0_i32 = arith.constant 0 : i32
    %c0_i32_0 = arith.constant 0 : i32
    %c0_i32_1 = arith.constant 0 : i32
    return %c0_i32, %c0_i32_0 : i32, i32
  }
  func.func @transform_15(%arg0: i32) -> (i32, i32, i32) {
    %c0_i32 = arith.constant 0 : i32
    %c0_i32_0 = arith.constant 0 : i32
    %c0_i32_1 = arith.constant 0 : i32
    return %arg0, %c0_i32, %c0_i32_0 : i32, i32, i32
  }
}

</mosaic_0001>

<llo_original>
// kernel: vit_forward.1
$region0: #{vit_forward.1}
  #allocation0 [shape = 'u32[]', space=smem, size = 0x4, offset = 0x4, fixed_abs, tag = 'smem constant byte address 0x4 - core index']
  #allocation1 [shape = 'u32[72,128]{1,0:T(1,128)}', space=vmem, size = 0x9000, scoped, tag = 'internal scratch']
  %s0 = inlined_call_operand.vmem [shape: f32[2,16,50], index: 0, kind: input, shape index: {}]
  %s1 = inlined_call_operand.vmem [shape: f32[8,16], index: 1, kind: input, shape index: {}]
  %s2 = inlined_call_operand.vmem [shape: f32[8,50], index: 2, kind: input, shape index: {}]
  %s3 = inlined_call_operand.vmem [shape: f32[2,8,1], index: 3, kind: input, shape index: {}]
  %s4 = inlined_call_operand.vmem [shape: f32[2,8,1], index: 4, kind: input, shape index: {}]
  %s5 = inlined_call_operand.vmem [shape: f32[2,24,8], index: 5, kind: input, shape index: {}]
  %s6 = inlined_call_operand.vmem [shape: f32[2,24,1], index: 6, kind: input, shape index: {}]
  %s7 = inlined_call_operand.vmem [shape: f32[2,8,1], index: 7, kind: input, shape index: {}]
  %s8 = inlined_call_operand.vmem [shape: f32[2,8,1], index: 8, kind: input, shape index: {}]
  %s9 = inlined_call_operand.vmem [shape: f32[2,32,8], index: 9, kind: input, shape index: {}]
  %s10 = inlined_call_operand.vmem [shape: f32[2,32,1], index: 10, kind: input, shape index: {}]
  %s11 = inlined_call_operand.vmem [shape: f32[2,8,32], index: 11, kind: input, shape index: {}]
  %s12 = inlined_call_operand.vmem [shape: f32[2,8,1], index: 12, kind: input, shape index: {}]
  %s13 = inlined_call_operand.vmem [shape: f32[8,10], index: 13, kind: input, shape index: {}]
  %s14 = inlined_call_operand.vmem [shape: f32[1,10], index: 14, kind: input, shape index: {}]
  %s15 = inlined_call_operand.hbm [shape: f32[2,1,10], index: 15, kind: output, shape index: {}]
  %s16 = sld [smem:[#allocation0]]
  $region93: #{vit_forward.1} parent=0
    _
  %s18 = ssub.s32 1, %s16
  %s19 = scalar_select 0, %s18, %s16
  $region1: #{vit_forward.1} parent=0
    #allocation2 [shape = 'u8[1024]{0}', space=vmem, size = 0x400, scoped, tag = 'output window, operand 0']
    #allocation3 [shape = 's32[2]{0}', space=sflag, size = 0x8, scoped, tag = 'scoped memory for vit_forward.1']
    %20 = vsyncpa [#allocation3], 0
    %s21 = scalar_lea.sflag [#allocation3], 1
    %22 = vsyncpa %s21, 0
    loop: start=0, step=1, limit=4
    $region2: #{vit_forward.1} parent=1 // loop_pre_header
      _
    $region3: #{vit_forward.1} parent=1 // loop_header
      %s24 = sphi 0, %s28
      %p25 = scmp.ge.s32.totalorder %s24, 4
      %s34 = sphi 0, %s36
      %s37 = sphi 0, %s34
      %s38 = sphi 0, %s37
      %s54 = sphi 0, %s38
      %s58 = sphi 0, %s58
      %s60 = sphi 0, %s58
      %s61 = sphi 0, %s60
      %s75 = sphi 0, %s61
      %s79 = sphi 0, %s79
      %s81 = sphi 0, %s79
      %s82 = sphi 0, %s81
      %s96 = sphi 0, %s82
      %s100 = sphi 0, %s100
      %s102 = sphi 0, %s100
      %s103 = sphi 0, %s102
      %s117 = sphi 0, %s103
      %s121 = sphi 0, %s121
      %s123 = sphi 0, %s121
      %s124 = sphi 0, %s123
      %s138 = sphi 0, %s124
      %s142 = sphi 0, %s142
      %s144 = sphi 0, %s142
      %s145 = sphi 0, %s144
      %s159 = sphi 0, %s145
      %s163 = sphi 0, %s163
      %s165 = sphi 0, %s163
      %s166 = sphi 0, %s165
      %s180 = sphi 0, %s166
      %s184 = sphi 0, %s184
      %s186 = sphi 0, %s184
      %s187 = sphi 0, %s186
      %s201 = sphi 0, %s187
      %s205 = sphi 0, %s205
      %s207 = sphi 0, %s205
      %s208 = sphi 0, %s207
      %s222 = sphi 0, %s208
      %s226 = sphi 0, %s226
      %s228 = sphi 0, %s226
      %s229 = sphi 0, %s228
      %s243 = sphi 0, %s229
      %s247 = sphi 0, %s247
      %s249 = sphi 0, %s247
      %s250 = sphi 0, %s249
      %s264 = sphi 0, %s250
      %s268 = sphi 0, %s268
      %s270 = sphi 0, %s268
      %s271 = sphi 0, %s270
      %s285 = sphi 0, %s271
      %s289 = sphi 0, %s289
      %s291 = sphi 0, %s289
      %s292 = sphi 0, %s291
      %s306 = sphi 0, %s292
      %s310 = sphi 0, %s310
      %s312 = sphi 0, %s310
      %s313 = sphi 0, %s312
      %s327 = sphi 0, %s313
      %s331 = sphi 0, %s331
      %s333 = sphi 0, %s331
      %s334 = sphi 0, %s333
      %s348 = sphi 0, %s334
      %s354 = sphi 0, %s356
      %s357 = sphi 0, %s354
      %s358 = sphi 0, %s357
      %s374 = sphi 0, %s358
    $region4: #{vit_forward.1} parent=1 // loop_header_branch
      %27 = sbr.rel (%p25) target = $region8
    $region5: #{vit_forward.1} parent=1 // loop_body
      %s29 = ssub.s32 %s24, 1
      %s30 = ssub.s32 %s24, 2
      %s31 = sadd.s32 %s24, 1
      %s32 = ssub.s32 %s24, %s31
      %p33 = scmp.eq.s32.totalorder %s32, 0
      %s35 = sadd.s32 %s34, 1
      %s36 = scalar_select %p33, %s34, %s35
      %p39 = pneg %p33
      %p40 = scmp.eq.s32.totalorder %s24, 1
      %p41 = por %p39, %p40
      %p42 = scmp.ne.s32.totalorder %s34, %s37
      %p43 = scmp.eq.s32.totalorder %s24, 0
      %p44 = por %p42, %p43
      %p45 = scmp.ne.s32.totalorder %s34, %s37
      %p46 = scmp.eq.s32.totalorder %s29, 1
      %p47 = por %p45, %p46
      %p48 = scmp.ne.s32.totalorder %s37, %s38
      %p49 = scmp.eq.s32.totalorder %s29, 0
      %p50 = por %p48, %p49
      %p51 = scmp.ne.s32.totalorder %s37, %s38
      %p52 = scmp.eq.s32.totalorder %s30, 1
      %p53 = por %p51, %p52
      %p55 = scmp.ne.s32.totalorder %s38, %s54
      %p56 = scmp.eq.s32.totalorder %s30, 0
      %p57 = por %p55, %p56
      %s59 = sadd.s32 %s58, 1
      %p62 = scmp.eq.s32.totalorder %s24, 1
      %p63 = scmp.ne.s32.totalorder %s58, %s60
      %p64 = scmp.eq.s32.totalorder %s24, 0
      %p65 = por %p63, %p64
      %p66 = scmp.ne.s32.totalorder %s58, %s60
      %p67 = scmp.eq.s32.totalorder %s29, 1
      %p68 = por %p66, %p67
      %p69 = scmp.ne.s32.totalorder %s60, %s61
      %p70 = scmp.eq.s32.totalorder %s29, 0
      %p71 = por %p69, %p70
      %p72 = scmp.ne.s32.totalorder %s60, %s61
      %p73 = scmp.eq.s32.totalorder %s30, 1
      %p74 = por %p72, %p73
      %p76 = scmp.ne.s32.totalorder %s61, %s75
      %p77 = scmp.eq.s32.totalorder %s30, 0
      %p78 = por %p76, %p77
      %s80 = sadd.s32 %s79, 1
      %p83 = scmp.eq.s32.totalorder %s24, 1
      %p84 = scmp.ne.s32.totalorder %s79, %s81
      %p85 = scmp.eq.s32.totalorder %s24, 0
      %p86 = por %p84, %p85
      %p87 = scmp.ne.s32.totalorder %s79, %s81
      %p88 = scmp.eq.s32.totalorder %s29, 1
      %p89 = por %p87, %p88
      %p90 = scmp.ne.s32.totalorder %s81, %s82
      %p91 = scmp.eq.s32.totalorder %s29, 0
      %p92 = por %p90, %p91
      %p93 = scmp.ne.s32.totalorder %s81, %s82
      %p94 = scmp.eq.s32.totalorder %s30, 1
      %p95 = por %p93, %p94
      %p97 = scmp.ne.s32.totalorder %s82, %s96
      %p98 = scmp.eq.s32.totalorder %s30, 0
      %p99 = por %p97, %p98
      %s101 = sadd.s32 %s100, 1
      %p104 = scmp.eq.s32.totalorder %s24, 1
      %p105 = scmp.ne.s32.totalorder %s100, %s102
      %p106 = scmp.eq.s32.totalorder %s24, 0
      %p107 = por %p105, %p106
      %p108 = scmp.ne.s32.totalorder %s100, %s102
      %p109 = scmp.eq.s32.totalorder %s29, 1
      %p110 = por %p108, %p109
      %p111 = scmp.ne.s32.totalorder %s102, %s103
      %p112 = scmp.eq.s32.totalorder %s29, 0
      %p113 = por %p111, %p112
      %p114 = scmp.ne.s32.totalorder %s102, %s103
      %p115 = scmp.eq.s32.totalorder %s30, 1
      %p116 = por %p114, %p115
      %p118 = scmp.ne.s32.totalorder %s103, %s117
      %p119 = scmp.eq.s32.totalorder %s30, 0
      %p120 = por %p118, %p119
      %s122 = sadd.s32 %s121, 1
      %p125 = scmp.eq.s32.totalorder %s24, 1
      %p126 = scmp.ne.s32.totalorder %s121, %s123
      %p127 = scmp.eq.s32.totalorder %s24, 0
      %p128 = por %p126, %p127
      %p129 = scmp.ne.s32.totalorder %s121, %s123
      %p130 = scmp.eq.s32.totalorder %s29, 1
      %p131 = por %p129, %p130
      %p132 = scmp.ne.s32.totalorder %s123, %s124
      %p133 = scmp.eq.s32.totalorder %s29, 0
      %p134 = por %p132, %p133
      %p135 = scmp.ne.s32.totalorder %s123, %s124
      %p136 = scmp.eq.s32.totalorder %s30, 1
      %p137 = por %p135, %p136
      %p139 = scmp.ne.s32.totalorder %s124, %s138
      %p140 = scmp.eq.s32.totalorder %s30, 0
      %p141 = por %p139, %p140
      %s143 = sadd.s32 %s142, 1
      %p146 = scmp.eq.s32.totalorder %s24, 1
      %p147 = scmp.ne.s32.totalorder %s142, %s144
      %p148 = scmp.eq.s32.totalorder %s24, 0
      %p149 = por %p147, %p148
      %p150 = scmp.ne.s32.totalorder %s142, %s144
      %p151 = scmp.eq.s32.totalorder %s29, 1
      %p152 = por %p150, %p151
      %p153 = scmp.ne.s32.totalorder %s144, %s145
      %p154 = scmp.eq.s32.totalorder %s29, 0
      %p155 = por %p153, %p154
      %p156 = scmp.ne.s32.totalorder %s144, %s145
      %p157 = scmp.eq.s32.totalorder %s30, 1
      %p158 = por %p156, %p157
      %p160 = scmp.ne.s32.totalorder %s145, %s159
      %p161 = scmp.eq.s32.totalorder %s30, 0
      %p162 = por %p160, %p161
      %s164 = sadd.s32 %s163, 1
      %p167 = scmp.eq.s32.totalorder %s24, 1
      %p168 = scmp.ne.s32.totalorder %s163, %s165
      %p169 = scmp.eq.s32.totalorder %s24, 0
      %p170 = por %p168, %p169
      %p171 = scmp.ne.s32.totalorder %s163, %s165
      %p172 = scmp.eq.s32.totalorder %s29, 1
      %p173 = por %p171, %p172
      %p174 = scmp.ne.s32.totalorder %s165, %s166
      %p175 = scmp.eq.s32.totalorder %s29, 0
      %p176 = por %p174, %p175
      %p177 = scmp.ne.s32.totalorder %s165, %s166
      %p178 = scmp.eq.s32.totalorder %s30, 1
      %p179 = por %p177, %p178
      %p181 = scmp.ne.s32.totalorder %s166, %s180
      %p182 = scmp.eq.s32.totalorder %s30, 0
      %p183 = por %p181, %p182
      %s185 = sadd.s32 %s184, 1
      %p188 = scmp.eq.s32.totalorder %s24, 1
      %p189 = scmp.ne.s32.totalorder %s184, %s186
      %p190 = scmp.eq.s32.totalorder %s24, 0
      %p191 = por %p189, %p190
      %p192 = scmp.ne.s32.totalorder %s184, %s186
      %p193 = scmp.eq.s32.totalorder %s29, 1
      %p194 = por %p192, %p193
      %p195 = scmp.ne.s32.totalorder %s186, %s187
      %p196 = scmp.eq.s32.totalorder %s29, 0
      %p197 = por %p195, %p196
      %p198 = scmp.ne.s32.totalorder %s186, %s187
      %p199 = scmp.eq.s32.totalorder %s30, 1
      %p200 = por %p198, %p199
      %p202 = scmp.ne.s32.totalorder %s187, %s201
      %p203 = scmp.eq.s32.totalorder %s30, 0
      %p204 = por %p202, %p203
      %s206 = sadd.s32 %s205, 1
      %p209 = scmp.eq.s32.totalorder %s24, 1
      %p210 = scmp.ne.s32.totalorder %s205, %s207
      %p211 = scmp.eq.s32.totalorder %s24, 0
      %p212 = por %p210, %p211
      %p213 = scmp.ne.s32.totalorder %s205, %s207
      %p214 = scmp.eq.s32.totalorder %s29, 1
      %p215 = por %p213, %p214
      %p216 = scmp.ne.s32.totalorder %s207, %s208
      %p217 = scmp.eq.s32.totalorder %s29, 0
      %p218 = por %p216, %p217
      %p219 = scmp.ne.s32.totalorder %s207, %s208
      %p220 = scmp.eq.s32.totalorder %s30, 1
      %p221 = por %p219, %p220
      %p223 = scmp.ne.s32.totalorder %s208, %s222
      %p224 = scmp.eq.s32.totalorder %s30, 0
      %p225 = por %p223, %p224
      %s227 = sadd.s32 %s226, 1
      %p230 = scmp.eq.s32.totalorder %s24, 1
      %p231 = scmp.ne.s32.totalorder %s226, %s228
      %p232 = scmp.eq.s32.totalorder %s24, 0
      %p233 = por %p231, %p232
      %p234 = scmp.ne.s32.totalorder %s226, %s228
      %p235 = scmp.eq.s32.totalorder %s29, 1
      %p236 = por %p234, %p235
      %p237 = scmp.ne.s32.totalorder %s228, %s229
      %p238 = scmp.eq.s32.totalorder %s29, 0
      %p239 = por %p237, %p238
      %p240 = scmp.ne.s32.totalorder %s228, %s229
      %p241 = scmp.eq.s32.totalorder %s30, 1
      %p242 = por %p240, %p241
      %p244 = scmp.ne.s32.totalorder %s229, %s243
      %p245 = scmp.eq.s32.totalorder %s30, 0
      %p246 = por %p244, %p245
      %s248 = sadd.s32 %s247, 1
      %p251 = scmp.eq.s32.totalorder %s24, 1
      %p252 = scmp.ne.s32.totalorder %s247, %s249
      %p253 = scmp.eq.s32.totalorder %s24, 0
      %p254 = por %p252, %p253
      %p255 = scmp.ne.s32.totalorder %s247, %s249
      %p256 = scmp.eq.s32.totalorder %s29, 1
      %p257 = por %p255, %p256
      %p258 = scmp.ne.s32.totalorder %s249, %s250
      %p259 = scmp.eq.s32.totalorder %s29, 0
      %p260 = por %p258, %p259
      %p261 = scmp.ne.s32.totalorder %s249, %s250
      %p262 = scmp.eq.s32.totalorder %s30, 1
      %p263 = por %p261, %p262
      %p265 = scmp.ne.s32.totalorder %s250, %s264
      %p266 = scmp.eq.s32.totalorder %s30, 0
      %p267 = por %p265, %p266
      %s269 = sadd.s32 %s268, 1
      %p272 = scmp.eq.s32.totalorder %s24, 1
      %p273 = scmp.ne.s32.totalorder %s268, %s270
      %p274 = scmp.eq.s32.totalorder %s24, 0
      %p275 = por %p273, %p274
      %p276 = scmp.ne.s32.totalorder %s268, %s270
      %p277 = scmp.eq.s32.totalorder %s29, 1
      %p278 = por %p276, %p277
      %p279 = scmp.ne.s32.totalorder %s270, %s271
      %p280 = scmp.eq.s32.totalorder %s29, 0
      %p281 = por %p279, %p280
      %p282 = scmp.ne.s32.totalorder %s270, %s271
      %p283 = scmp.eq.s32.totalorder %s30, 1
      %p284 = por %p282, %p283
      %p286 = scmp.ne.s32.totalorder %s271, %s285
      %p287 = scmp.eq.s32.totalorder %s30, 0
      %p288 = por %p286, %p287
      %s290 = sadd.s32 %s289, 1
      %p293 = scmp.eq.s32.totalorder %s24, 1
      %p294 = scmp.ne.s32.totalorder %s289, %s291
      %p295 = scmp.eq.s32.totalorder %s24, 0
      %p296 = por %p294, %p295
      %p297 = scmp.ne.s32.totalorder %s289, %s291
      %p298 = scmp.eq.s32.totalorder %s29, 1
      %p299 = por %p297, %p298
      %p300 = scmp.ne.s32.totalorder %s291, %s292
      %p301 = scmp.eq.s32.totalorder %s29, 0
      %p302 = por %p300, %p301
      %p303 = scmp.ne.s32.totalorder %s291, %s292
      %p304 = scmp.eq.s32.totalorder %s30, 1
      %p305 = por %p303, %p304
      %p307 = scmp.ne.s32.totalorder %s292, %s306
      %p308 = scmp.eq.s32.totalorder %s30, 0
      %p309 = por %p307, %p308
      %s311 = sadd.s32 %s310, 1
      %p314 = scmp.eq.s32.totalorder %s24, 1
      %p315 = scmp.ne.s32.totalorder %s310, %s312
      %p316 = scmp.eq.s32.totalorder %s24, 0
      %p317 = por %p315, %p316
      %p318 = scmp.ne.s32.totalorder %s310, %s312
      %p319 = scmp.eq.s32.totalorder %s29, 1
      %p320 = por %p318, %p319
      %p321 = scmp.ne.s32.totalorder %s312, %s313
      %p322 = scmp.eq.s32.totalorder %s29, 0
      %p323 = por %p321, %p322
      %p324 = scmp.ne.s32.totalorder %s312, %s313
      %p325 = scmp.eq.s32.totalorder %s30, 1
      %p326 = por %p324, %p325
      %p328 = scmp.ne.s32.totalorder %s313, %s327
      %p329 = scmp.eq.s32.totalorder %s30, 0
      %p330 = por %p328, %p329
      %s332 = sadd.s32 %s331, 1
      %p335 = scmp.eq.s32.totalorder %s24, 1
      %p336 = scmp.ne.s32.totalorder %s331, %s333
      %p337 = scmp.eq.s32.totalorder %s24, 0
      %p338 = por %p336, %p337
      %p339 = scmp.ne.s32.totalorder %s331, %s333
      %p340 = scmp.eq.s32.totalorder %s29, 1
      %p341 = por %p339, %p340
      %p342 = scmp.ne.s32.totalorder %s333, %s334
      %p343 = scmp.eq.s32.totalorder %s29, 0
      %p344 = por %p342, %p343
      %p345 = scmp.ne.s32.totalorder %s333, %s334
      %p346 = scmp.eq.s32.totalorder %s30, 1
      %p347 = por %p345, %p346
      %p349 = scmp.ne.s32.totalorder %s334, %s348
      %p350 = scmp.eq.s32.totalorder %s30, 0
      %p351 = por %p349, %p350
      %s352 = ssub.s32 %s24, %s31
      %p353 = scmp.eq.s32.totalorder %s352, 0
      %s355 = sadd.s32 %s354, 1
      %s356 = scalar_select %p353, %s354, %s355
      %p359 = pneg %p353
      %p360 = scmp.eq.s32.totalorder %s24, 1
      %p361 = por %p359, %p360
      %p362 = scmp.ne.s32.totalorder %s354, %s357
      %p363 = scmp.eq.s32.totalorder %s24, 0
      %p364 = por %p362, %p363
      %p365 = scmp.ne.s32.totalorder %s354, %s357
      %p366 = scmp.eq.s32.totalorder %s29, 1
      %p367 = por %p365, %p366
      %p368 = scmp.ne.s32.totalorder %s357, %s358
      %p369 = scmp.eq.s32.totalorder %s29, 0
      %p370 = por %p368, %p369
      %p371 = scmp.ne.s32.totalorder %s357, %s358
      %p372 = scmp.eq.s32.totalorder %s30, 1
      %p373 = por %p371, %p372
      %p375 = scmp.ne.s32.totalorder %s358, %s374
      %p376 = scmp.eq.s32.totalorder %s30, 0
      %p377 = por %p375, %p376
      %p378 = scmp.le.s32.totalorder 1, %s24
      %p379 = scmp.lt.s32.totalorder %s24, 3
      %p380 = pnand %p378, %p379
      %p381 = pneg %p380
      // Predicated region
      $region9: #{vit_forward.1} parent=5 // pred_check
        _
      $region10: #{vit_forward.1} parent=5 // pred_check_branch
        %383 = sbr.rel (%p380) target = $region12
      $region11: #{vit_forward.1} parent=5 // pred_region
        %s384 = ssub.s32 %s24, 1
        // Predicated region
        $region13: #{vit_forward.1} parent=11 // pred_check
          %p385 = pneg %p71
        $region14: #{vit_forward.1} parent=11 // pred_check_branch
          %387 = sbr.rel (%p385) target = $region16
        $region15: #{vit_forward.1} parent=11 // pred_region
          _
        $region16: #{vit_forward.1} parent=11 // pred_fallthru
          _
        // Predicated region
        $region17: #{vit_forward.1} parent=11 // pred_check
          %p388 = pneg %p92
        $region18: #{vit_forward.1} parent=11 // pred_check_branch
          %390 = sbr.rel (%p388) target = $region20
        $region19: #{vit_forward.1} parent=11 // pred_region
          _
        $region20: #{vit_forward.1} parent=11 // pred_fallthru
          _
        // Predicated region
        $region21: #{vit_forward.1} parent=11 // pred_check
          %p391 = pneg %p113
        $region22: #{vit_forward.1} parent=11 // pred_check_branch
          %393 = sbr.rel (%p391) target = $region24
        $region23: #{vit_forward.1} parent=11 // pred_region
          _
        $region24: #{vit_forward.1} parent=11 // pred_fallthru
          _
        // Predicated region
        $region25: #{vit_forward.1} parent=11 // pred_check
          %p394 = pneg %p134
        $region26: #{vit_forward.1} parent=11 // pred_check_branch
          %396 = sbr.rel (%p394) target = $region28
        $region27: #{vit_forward.1} parent=11 // pred_region
          _
        $region28: #{vit_forward.1} parent=11 // pred_fallthru
          _
        // Predicated region
        $region29: #{vit_forward.1} parent=11 // pred_check
          %p397 = pneg %p155
        $region30: #{vit_forward.1} parent=11 // pred_check_branch
          %399 = sbr.rel (%p397) target = $region32
        $region31: #{vit_forward.1} parent=11 // pred_region
          _
        $region32: #{vit_forward.1} parent=11 // pred_fallthru
          _
        // Predicated region
        $region33: #{vit_forward.1} parent=11 // pred_check
          %p400 = pneg %p176
        $region34: #{vit_forward.1} parent=11 // pred_check_branch
          %402 = sbr.rel (%p400) target = $region36
        $region35: #{vit_forward.1} parent=11 // pred_region
          _
        $region36: #{vit_forward.1} parent=11 // pred_fallthru
          _
        // Predicated region
        $region37: #{vit_forward.1} parent=11 // pred_check
          %p403 = pneg %p197
        $region38: #{vit_forward.1} parent=11 // pred_check_branch
          %405 = sbr.rel (%p403) target = $region40
        $region39: #{vit_forward.1} parent=11 // pred_region
          _
        $region40: #{vit_forward.1} parent=11 // pred_fallthru
          _
        // Predicated region
        $region41: #{vit_forward.1} parent=11 // pred_check
          %p406 = pneg %p218
        $region42: #{vit_forward.1} parent=11 // pred_check_branch
          %408 = sbr.rel (%p406) target = $region44
        $region43: #{vit_forward.1} parent=11 // pred_region
          _
        $region44: #{vit_forward.1} parent=11 // pred_fallthru
          _
        // Predicated region
        $region45: #{vit_forward.1} parent=11 // pred_check
          %p409 = pneg %p239
        $region46: #{vit_forward.1} parent=11 // pred_check_branch
          %411 = sbr.rel (%p409) target = $region48
        $region47: #{vit_forward.1} parent=11 // pred_region
          _
        $region48: #{vit_forward.1} parent=11 // pred_fallthru
          _
        // Predicated region
        $region49: #{vit_forward.1} parent=11 // pred_check
          %p412 = pneg %p260
        $region50: #{vit_forward.1} parent=11 // pred_check_branch
          %414 = sbr.rel (%p412) target = $region52
        $region51: #{vit_forward.1} parent=11 // pred_region
          _
        $region52: #{vit_forward.1} parent=11 // pred_fallthru
          _
        // Predicated region
        $region53: #{vit_forward.1} parent=11 // pred_check
          %p415 = pneg %p281
        $region54: #{vit_forward.1} parent=11 // pred_check_branch
          %417 = sbr.rel (%p415) target = $region56
        $region55: #{vit_forward.1} parent=11 // pred_region
          _
        $region56: #{vit_forward.1} parent=11 // pred_fallthru
          _
        // Predicated region
        $region57: #{vit_forward.1} parent=11 // pred_check
          %p418 = pneg %p302
        $region58: #{vit_forward.1} parent=11 // pred_check_branch
          %420 = sbr.rel (%p418) target = $region60
        $region59: #{vit_forward.1} parent=11 // pred_region
          _
        $region60: #{vit_forward.1} parent=11 // pred_fallthru
          _
        // Predicated region
        $region61: #{vit_forward.1} parent=11 // pred_check
          %p421 = pneg %p323
        $region62: #{vit_forward.1} parent=11 // pred_check_branch
          %423 = sbr.rel (%p421) target = $region64
        $region63: #{vit_forward.1} parent=11 // pred_region
          _
        $region64: #{vit_forward.1} parent=11 // pred_fallthru
          _
        // Predicated region
        $region65: #{vit_forward.1} parent=11 // pred_check
          %p424 = pneg %p344
        $region66: #{vit_forward.1} parent=11 // pred_check_branch
          %426 = sbr.rel (%p424) target = $region68
        $region67: #{vit_forward.1} parent=11 // pred_region
          _
        $region68: #{vit_forward.1} parent=11 // pred_fallthru
          _
      $region12: #{vit_forward.1} parent=5 // pred_fallthru
        _
      %p427 = scmp.lt.s32.totalorder %s24, 2
      // Predicated region
      $region69: #{vit_forward.1} parent=5 // pred_check
        %p428 = pneg %p427
      $region70: #{vit_forward.1} parent=5 // pred_check_branch
        %430 = sbr.rel (%p428) target = $region72
      $region71: #{vit_forward.1} parent=5 // pred_region
        // Predicated region
        $region73: #{vit_forward.1} parent=71 // pred_check
          %p431 = pneg %p44
        $region74: #{vit_forward.1} parent=71 // pred_check_branch
          %433 = sbr.rel (%p431) target = $region76
        $region75: #{vit_forward.1} parent=71 // pred_region
          %p434 = scmp.lt.s32.totalorder %s24, 1
          %s435 = scalar_select %p434, %s24, 1
          %s436 = smul.addr %s435, 2
          %s437 = smul.addr %s436, 8
          %s438 = scalar_lea.vmem %s0, %s437
        $region76: #{vit_forward.1} parent=71 // pred_fallthru
          _
      $region72: #{vit_forward.1} parent=5 // pred_fallthru
        _
      %p439 = scmp.le.s32.totalorder 1, %s24
      %p440 = scmp.lt.s32.totalorder %s24, 3
      %p441 = pnand %p439, %p440
      %p442 = pneg %p441
      // Predicated region
      $region77: #{vit_forward.1} parent=5 // pred_check
        _
      $region78: #{vit_forward.1} parent=5 // pred_check_branch
        %444 = sbr.rel (%p441) target = $region80
      $region79: #{vit_forward.1} parent=5 // pred_region
        %s445 = ssub.s32 %s24, 1
        %p446 = scmp.lt.s32.totalorder %s29, 1
        %s447 = scalar_select %p446, %s29, 1
        %s448 = smul.addr %s447, 2
        %s449 = smul.addr %s448, 8
        %s450 = scalar_lea.vmem %s0, %s449
        %p451 = pneg %p50
        %p452 = pneg %p47
        %p453 = pneg %p71
        %p454 = pneg %p68
        %p455 = pneg %p92
        %p456 = pneg %p89
        %p457 = pneg %p113
        %p458 = pneg %p110
        %p459 = pneg %p134
        %p460 = pneg %p131
        %p461 = pneg %p155
        %p462 = pneg %p152
        %p463 = pneg %p176
        %p464 = pneg %p173
        %p465 = pneg %p197
        %p466 = pneg %p194
        %p467 = pneg %p218
        %p468 = pneg %p215
        %p469 = pneg %p239
        %p470 = pneg %p236
        %p471 = pneg %p260
        %p472 = pneg %p257
        %p473 = pneg %p281
        %p474 = pneg %p278
        %p475 = pneg %p302
        %p476 = pneg %p299
        %p477 = pneg %p323
        %p478 = pneg %p320
        %p479 = pneg %p344
        %p480 = pneg %p341
        %p481 = pneg %p370
        %p482 = pneg %p367
        %s483 = sand.u32 %s357, 1
        %s484 = scalar_lea.sflag [#allocation3], %s483
        %s485 = sand.u32 %s357, 1
        %s486 = scalar_lea.vmem [#allocation2], %s485
        %p487 = scmp.lt.s32.totalorder %s29, 1
        %s488 = scalar_select %p487, %s29, 1
        %s489 = smul.addr %s488, 2
        %s490 = smul.addr %s489, 8
        %s491 = scalar_lea.vmem %s0, %s490
        %v492 = vld [vmem:[%s1] sm:$0xff]
        %v493 = vld [vmem:[%s491] sm:$0xff]
        %v494 = vld [vmem:[%s491 + $0x8] sm:$0xff]
        %v495 = vld [vmem:[%s2] sm:$0xff]
        %vm496 = vcmask 130048
        %v498 = vsel %vm496, %v492, 0
        %500 = vmatpush.msra.mxu0 0.0
        %501 = vmatpush.msra.mxu0 0.0
        %502 = vmatpush.msra.mxu0 0.0
        %503 = vmatpush.msra.mxu0 0.0
        %504 = vmatpush.msra.mxu0 0.0
        %505 = vmatpush.msra.mxu0 0.0
        %506 = vmatpush.msra.mxu0 0.0
        %507 = vmatpush.msra.mxu0 0.0
        %508 = vmatpush.msra.mxu0 0.0
        %509 = vmatpush.msra.mxu0 0.0
        %510 = vmatpush.msra.mxu0 0.0
        %511 = vmatpush.msra.mxu0 0.0
        %512 = vmatpush.msra.mxu0 0.0
        %513 = vmatpush.msra.mxu0 0.0
        %514 = vmatpush.msra.mxu0 %v494
        %515 = vmatpush.msra.mxu0 %v493
        %516 = vmatmul.f32.gmra.mxu0 %v498
        %v517 = vpop.f32.mrf.mxu0
        %v518 = vadd.f32 %v495, %v517
        %519 = vdwg.mxu0
        %v520 = vld [vmem:[%s3] sm:$0xff]
        %v521 = vld [vmem:[%s4] sm:$0xff]
        %vm522 = vcmask 408576
        %v523 = vsel %vm522, %v518, 0.0
        %v524 = vrot.slane %v523, 4
        %v525 = vadd.f32 %v523, %v524
        %v526 = vrot.slane %v525, 2
        %v527 = vadd.f32 %v525, %v526
        %v528 = vrot.slane %v527, 1
        %v529 = vadd.f32 %v527, %v528
        %v530 = vrcp.pop 8.0
        %v531 = vmul.f32 8.0, %v530
        %v532 = vsub.f32 1.0, %v531
        %v533 = vmul.f32 %v530, %v532
        %v534 = vadd.f32 %v530, %v533
        %vm535 = vweird.f32 %v530
        %v536 = vsel %vm535, %v530, %v534
        %v537 = vmul.f32 %v529, %v536
        %v538 = vsub.f32 %v518, %v537
        %v539 = vmul.f32 %v538, %v538
        %v540 = vsel %vm522, %v539, 0.0
        %v541 = vrot.slane %v540, 4
        %v542 = vadd.f32 %v540, %v541
        %v543 = vrot.slane %v542, 2
        %v544 = vadd.f32 %v542, %v543
        %v545 = vrot.slane %v544, 1
        %v546 = vadd.f32 %v544, %v545
        %v547 = vmul.f32 %v546, %v536
        %v548 = vadd.f32 %v547, 1e-05
        %v549 = vrsqrt.pop %v548
        %v550 = vmul.f32 %v549, %v548
        %v551 = vmul.f32 %v550, %v549
        %v552 = vmul.f32 0.5, %v551
        %v553 = vsub.f32 1.5, %v552
        %v554 = vmul.f32 %v549, %v553
        %vm555 = vweird.f32 %v548
        %vm556 = vweird.f32 %v549
        %vm557 = vmor %vm555, %vm556
        %v558 = vsel %vm557, %v549, %v554
        %v559 = vmul.f32 %v538, %v558
        %561 = vset.pattern.permute.xlu0 0
        %562 = vperm.xlu0 %561, %v520
        %v563 = vpop.permute.xlu0 %562
        %v565 = vmul.f32 %v559, %v563
        %567 = vset.pattern.permute.xlu0 0
        %568 = vperm.xlu0 %567, %v521
        %v569 = vpop.permute.xlu0 %568
        %v571 = vadd.f32 %v565, %v569
        %v572 = vld [vmem:[%s5] sm:$0xff]
        %v573 = vld [vmem:[%s5 + $0x8] sm:$0xff]
        %v574 = vld [vmem:[%s5 + $0x10] sm:$0xff]
        %v575 = vld [vmem:[%s6] sm:$0xff]
        %v576 = vld [vmem:[%s6 + $0x8] sm:$0xff]
        %v577 = vld [vmem:[%s6 + $0x10] sm:$0xff]
        %579 = vset.pattern.permute.xlu0 0
        %580 = vperm.xlu0 %579, %v575
        %v581 = vpop.permute.xlu0 %580
        %584 = vset.pattern.permute.xlu0 0
        %585 = vperm.xlu0 %584, %v576
        %v586 = vpop.permute.xlu0 %585
        %589 = vset.pattern.permute.xlu0 0
        %590 = vperm.xlu0 %589, %v577
        %v591 = vpop.permute.xlu0 %590
        %vm593 = vcmask 64512
        %v595 = vsel %vm593, %v572, 0
        %v598 = vsel %vm593, %v573, 0
        %v601 = vsel %vm593, %v574, 0
        %603 = vmatpush.msra.mxu0 0.0
        %604 = vmatpush.msra.mxu0 0.0
        %605 = vmatpush.msra.mxu0 0.0
        %606 = vmatpush.msra.mxu0 0.0
        %607 = vmatpush.msra.mxu0 0.0
        %608 = vmatpush.msra.mxu0 0.0
        %609 = vmatpush.msra.mxu0 0.0
        %610 = vmatpush.msra.mxu0 0.0
        %611 = vmatpush.msra.mxu0 0.0
        %612 = vmatpush.msra.mxu0 0.0
        %613 = vmatpush.msra.mxu0 0.0
        %614 = vmatpush.msra.mxu0 0.0
        %615 = vmatpush.msra.mxu0 0.0
        %616 = vmatpush.msra.mxu0 0.0
        %617 = vmatpush.msra.mxu0 0.0
        %618 = vmatpush.msra.mxu0 %v571
        %619 = vmatmul.f32.gmra.mxu0 %v595
        %v620 = vpop.f32.mrf.mxu0
        %v621 = vadd.f32 %v581, %v620
        %622 = vmatmul.f32.gmra.mxu0 %v598
        %v623 = vpop.f32.mrf.mxu0
        %v624 = vadd.f32 %v586, %v623
        %625 = vmatmul.f32.gmra.mxu0 %v601
        %v626 = vpop.f32.mrf.mxu0
        %v627 = vadd.f32 %v591, %v626
        %628 = vdwg.mxu0
        %629 = vxpose.xlu0.b32.start [1/16] %v621, 128
        %630 = vxpose.xlu0.b32.cont [2/16] 0.0, 128
        %631 = vxpose.xlu0.b32.cont [3/16] 0.0, 128
        %632 = vxpose.xlu0.b32.cont [4/16] 0.0, 128
        %633 = vxpose.xlu0.b32.cont [5/16] 0.0, 128
        %634 = vxpose.xlu0.b32.cont [6/16] 0.0, 128
        %635 = vxpose.xlu0.b32.cont [7/16] 0.0, 128
        %636 = vxpose.xlu0.b32.cont [8/16] 0.0, 128
        %637 = vxpose.xlu0.b32.cont [9/16] 0.0, 128
        %638 = vxpose.xlu0.b32.cont [10/16] 0.0, 128
        %639 = vxpose.xlu0.b32.cont [11/16] 0.0, 128
        %640 = vxpose.xlu0.b32.cont [12/16] 0.0, 128
        %641 = vxpose.xlu0.b32.cont [13/16] 0.0, 128
        %642 = vxpose.xlu0.b32.cont [14/16] 0.0, 128
        %643 = vxpose.xlu0.b32.cont [15/16] 0.0, 128
        %644 = vxpose.xlu0.b32.end [16/16] 0.0, 128
        %v645 = vpop.trf.xlu0
        %v646 = vpop.trf.xlu0
        %v647 = vpop.trf.xlu0
        %v648 = vpop.trf.xlu0
        %v649 = vpop.trf.xlu0
        %v650 = vpop.trf.xlu0
        %v651 = vpop.trf.xlu0
        %v652 = vpop.trf.xlu0
        %v653 = vpop.trf.xlu0
        %v654 = vpop.trf.xlu0
        %v655 = vpop.trf.xlu0
        %v656 = vpop.trf.xlu0
        %v657 = vpop.trf.xlu0
        %v658 = vpop.trf.xlu0
        %v659 = vpop.trf.xlu0
        %v660 = vpop.trf.xlu0
        %vm661 = vcmask 31744
        %v663 = vsel %vm661, %v645, 0
        %v666 = vsel %vm661, %v646, 0
        %v669 = vsel %vm661, %v647, 0
        %v672 = vsel %vm661, %v648, 0
        %v675 = vsel %vm661, %v649, 0
        %v678 = vsel %vm661, %v650, 0
        %v681 = vsel %vm661, %v651, 0
        %vm683 = vcmask 1043456
        %v685 = vsel %vm683, %v624, 0
        %687 = vmatpush.msra.mxu0 0.0
        %688 = vmatpush.msra.mxu0 0.0
        %689 = vmatpush.msra.mxu0 0.0
        %690 = vmatpush.msra.mxu0 0.0
        %691 = vmatpush.msra.mxu0 0.0
        %692 = vmatpush.msra.mxu0 0.0
        %693 = vmatpush.msra.mxu0 0.0
        %694 = vmatpush.msra.mxu0 0.0
        %695 = vmatpush.msra.mxu0 0.0
        %696 = vmatpush.msra.mxu0 0.0
        %697 = vmatpush.msra.mxu0 0.0
        %698 = vmatpush.msra.mxu0 0.0
        %699 = vmatpush.msra.mxu0 0.0
        %700 = vmatpush.msra.mxu0 0.0
        %701 = vmatpush.msra.mxu0 0.0
        %702 = vmatpush.msra.mxu0 %v685
        %703 = vmatmul.f32.gmra.mxu0 %v663
        %v704 = vpop.f32.mrf.mxu0
        %v705 = vadd.f32 0.0, %v704
        %706 = vmatmul.f32.gmra.mxu0 %v666
        %v707 = vpop.f32.mrf.mxu0
        %v708 = vadd.f32 0.0, %v707
        %709 = vmatmul.f32.gmra.mxu0 %v669
        %v710 = vpop.f32.mrf.mxu0
        %v711 = vadd.f32 0.0, %v710
        %712 = vmatmul.f32.gmra.mxu0 %v672
        %v713 = vpop.f32.mrf.mxu0
        %v714 = vadd.f32 0.0, %v713
        %715 = vmatmul.f32.gmra.mxu0 %v675
        %v716 = vpop.f32.mrf.mxu0
        %v717 = vadd.f32 0.0, %v716
        %718 = vmatmul.f32.gmra.mxu0 %v678
        %v719 = vpop.f32.mrf.mxu0
        %v720 = vadd.f32 0.0, %v719
        %721 = vmatmul.f32.gmra.mxu0 %v681
        %v722 = vpop.f32.mrf.mxu0
        %v723 = vadd.f32 0.0, %v722
        %724 = vdwg.mxu0
        %v725 = vsel %vm522, %v705, -inf
        %726 = vmax.xlane.f32.xlu0 %v725
        %v727 = vpop.xlane.xlu0 %726
        %v728 = vsel %vm522, %v708, -inf
        %729 = vmax.xlane.f32.xlu0 %v728
        %v730 = vpop.xlane.xlu0 %729
        %v731 = vsel %vm522, %v711, -inf
        %732 = vmax.xlane.f32.xlu0 %v731
        %v733 = vpop.xlane.xlu0 %732
        %v734 = vsel %vm522, %v714, -inf
        %735 = vmax.xlane.f32.xlu0 %v734
        %v736 = vpop.xlane.xlu0 %735
        %v737 = vsel %vm522, %v717, -inf
        %738 = vmax.xlane.f32.xlu0 %v737
        %v739 = vpop.xlane.xlu0 %738
        %v740 = vsel %vm522, %v720, -inf
        %741 = vmax.xlane.f32.xlu0 %v740
        %v742 = vpop.xlane.xlu0 %741
        %vm743 = vcmask 402432
        %v744 = vsel %vm743, %v723, -inf
        %745 = vmax.xlane.f32.xlu0 %v744
        %v746 = vpop.xlane.xlu0 %745
        %v747 = vsub.f32 %v705, %v727
        %v748 = vsub.f32 %v708, %v730
        %v749 = vsub.f32 %v711, %v733
        %v750 = vsub.f32 %v714, %v736
        %v751 = vsub.f32 %v717, %v739
        %v752 = vsub.f32 %v720, %v742
        %v753 = vsub.f32 %v723, %v746
        %v754 = vmul.f32 %v747, 1.442695
        %v755 = vpow.pop %v754
        %v756 = vmul.f32 %v748, 1.442695
        %v757 = vpow.pop %v756
        %v758 = vmul.f32 %v749, 1.442695
        %v759 = vpow.pop %v758
        %v760 = vmul.f32 %v750, 1.442695
        %v761 = vpow.pop %v760
        %v762 = vmul.f32 %v751, 1.442695
        %v763 = vpow.pop %v762
        %v764 = vmul.f32 %v752, 1.442695
        %v765 = vpow.pop %v764
        %v766 = vmul.f32 %v753, 1.442695
        %v767 = vpow.pop %v766
        %v768 = vsel %vm522, %v755, 0.0
        %769 = vadd.xlane.f32.xlu0 %v768
        %v770 = vpop.xlane.xlu0 %769
        %v771 = vsel %vm522, %v757, 0.0
        %772 = vadd.xlane.f32.xlu0 %v771
        %v773 = vpop.xlane.xlu0 %772
        %v774 = vsel %vm522, %v759, 0.0
        %775 = vadd.xlane.f32.xlu0 %v774
        %v776 = vpop.xlane.xlu0 %775
        %v777 = vsel %vm522, %v761, 0.0
        %778 = vadd.xlane.f32.xlu0 %v777
        %v779 = vpop.xlane.xlu0 %778
        %v780 = vsel %vm522, %v763, 0.0
        %781 = vadd.xlane.f32.xlu0 %v780
        %v782 = vpop.xlane.xlu0 %781
        %v783 = vsel %vm522, %v765, 0.0
        %784 = vadd.xlane.f32.xlu0 %v783
        %v785 = vpop.xlane.xlu0 %784
        %v786 = vsel %vm743, %v767, 0.0
        %787 = vadd.xlane.f32.xlu0 %v786
        %v788 = vpop.xlane.xlu0 %787
        %v789 = vrcp.pop %v770
        %v790 = vmul.f32 %v770, %v789
        %v791 = vsub.f32 1.0, %v790
        %v792 = vmul.f32 %v789, %v791
        %v793 = vadd.f32 %v789, %v792
        %vm794 = vweird.f32 %v770
        %vm795 = vweird.f32 %v789
        %vm796 = vmor %vm794, %vm795
        %v797 = vsel %vm796, %v789, %v793
        %v798 = vand.u32 2147483647, %v770
        %vm799 = vcmp.eq.f32.partialorder %v798, 8.507059e+37
        %v800 = vand.u32 %v770, 2147483648
        %v801 = vor.u32 1.1754944e-38, %v800
        %v802 = vsel %vm799, %v801, %v797
        %v803 = vrcp.pop %v773
        %v804 = vmul.f32 %v773, %v803
        %v805 = vsub.f32 1.0, %v804
        %v806 = vmul.f32 %v803, %v805
        %v807 = vadd.f32 %v803, %v806
        %vm808 = vweird.f32 %v773
        %vm809 = vweird.f32 %v803
        %vm810 = vmor %vm808, %vm809
        %v811 = vsel %vm810, %v803, %v807
        %v812 = vand.u32 2147483647, %v773
        %vm813 = vcmp.eq.f32.partialorder %v812, 8.507059e+37
        %v814 = vand.u32 %v773, 2147483648
        %v815 = vor.u32 1.1754944e-38, %v814
        %v816 = vsel %vm813, %v815, %v811
        %v817 = vrcp.pop %v776
        %v818 = vmul.f32 %v776, %v817
        %v819 = vsub.f32 1.0, %v818
        %v820 = vmul.f32 %v817, %v819
        %v821 = vadd.f32 %v817, %v820
        %vm822 = vweird.f32 %v776
        %vm823 = vweird.f32 %v817
        %vm824 = vmor %vm822, %vm823
        %v825 = vsel %vm824, %v817, %v821
        %v826 = vand.u32 2147483647, %v776
        %vm827 = vcmp.eq.f32.partialorder %v826, 8.507059e+37
        %v828 = vand.u32 %v776, 2147483648
        %v829 = vor.u32 1.1754944e-38, %v828
        %v830 = vsel %vm827, %v829, %v825
        %v831 = vrcp.pop %v779
        %v832 = vmul.f32 %v779, %v831
        %v833 = vsub.f32 1.0, %v832
        %v834 = vmul.f32 %v831, %v833
        %v835 = vadd.f32 %v831, %v834
        %vm836 = vweird.f32 %v779
        %vm837 = vweird.f32 %v831
        %vm838 = vmor %vm836, %vm837
        %v839 = vsel %vm838, %v831, %v835
        %v840 = vand.u32 2147483647, %v779
        %vm841 = vcmp.eq.f32.partialorder %v840, 8.507059e+37
        %v842 = vand.u32 %v779, 2147483648
        %v843 = vor.u32 1.1754944e-38, %v842
        %v844 = vsel %vm841, %v843, %v839
        %v845 = vrcp.pop %v782
        %v846 = vmul.f32 %v782, %v845
        %v847 = vsub.f32 1.0, %v846
        %v848 = vmul.f32 %v845, %v847
        %v849 = vadd.f32 %v845, %v848
        %vm850 = vweird.f32 %v782
        %vm851 = vweird.f32 %v845
        %vm852 = vmor %vm850, %vm851
        %v853 = vsel %vm852, %v845, %v849
        %v854 = vand.u32 2147483647, %v782
        %vm855 = vcmp.eq.f32.partialorder %v854, 8.507059e+37
        %v856 = vand.u32 %v782, 2147483648
        %v857 = vor.u32 1.1754944e-38, %v856
        %v858 = vsel %vm855, %v857, %v853
        %v859 = vrcp.pop %v785
        %v860 = vmul.f32 %v785, %v859
        %v861 = vsub.f32 1.0, %v860
        %v862 = vmul.f32 %v859, %v861
        %v863 = vadd.f32 %v859, %v862
        %vm864 = vweird.f32 %v785
        %vm865 = vweird.f32 %v859
        %vm866 = vmor %vm864, %vm865
        %v867 = vsel %vm866, %v859, %v863
        %v868 = vand.u32 2147483647, %v785
        %vm869 = vcmp.eq.f32.partialorder %v868, 8.507059e+37
        %v870 = vand.u32 %v785, 2147483648
        %v871 = vor.u32 1.1754944e-38, %v870
        %v872 = vsel %vm869, %v871, %v867
        %v873 = vrcp.pop %v788
        %v874 = vmul.f32 %v788, %v873
        %v875 = vsub.f32 1.0, %v874
        %v876 = vmul.f32 %v873, %v875
        %v877 = vadd.f32 %v873, %v876
        %vm878 = vweird.f32 %v788
        %vm879 = vweird.f32 %v873
        %vm880 = vmor %vm878, %vm879
        %v881 = vsel %vm880, %v873, %v877
        %v882 = vand.u32 2147483647, %v788
        %vm883 = vcmp.eq.f32.partialorder %v882, 8.507059e+37
        %v884 = vand.u32 %v788, 2147483648
        %v885 = vor.u32 1.1754944e-38, %v884
        %v886 = vsel %vm883, %v885, %v881
        %v887 = vmul.f32 %v755, %v802
        %v888 = vmul.f32 %v757, %v816
        %v889 = vmul.f32 %v759, %v830
        %v890 = vmul.f32 %v761, %v844
        %v891 = vmul.f32 %v763, %v858
        %v892 = vmul.f32 %v765, %v872
        %v893 = vmul.f32 %v767, %v886
        %v895 = vsel %vm522, %v627, 0
        %v898 = vsel %vm522, %v887, 0
        %v901 = vsel %vm522, %v888, 0
        %v904 = vsel %vm522, %v889, 0
        %v907 = vsel %vm522, %v890, 0
        %v910 = vsel %vm522, %v891, 0
        %v913 = vsel %vm522, %v892, 0
        %v916 = vsel %vm522, %v893, 0
        %918 = vmatpush.xpose.msra.mxu0 0.0
        %919 = vmatpush.xpose.msra.mxu0 0.0
        %920 = vmatpush.xpose.msra.mxu0 0.0
        %921 = vmatpush.xpose.msra.mxu0 0.0
        %922 = vmatpush.xpose.msra.mxu0 0.0
        %923 = vmatpush.xpose.msra.mxu0 0.0
        %924 = vmatpush.xpose.msra.mxu0 0.0
        %925 = vmatpush.xpose.msra.mxu0 0.0
        %926 = vmatpush.xpose.msra.mxu0 0.0
        %927 = vmatpush.xpose.msra.mxu0 %v916
        %928 = vmatpush.xpose.msra.mxu0 %v913
        %929 = vmatpush.xpose.msra.mxu0 %v910
        %930 = vmatpush.xpose.msra.mxu0 %v907
        %931 = vmatpush.xpose.msra.mxu0 %v904
        %932 = vmatpush.xpose.msra.mxu0 %v901
        %933 = vmatpush.xpose.msra.mxu0 %v898
        %934 = vmatmul.f32.gmra.mxu0 %v895
        %v935 = vpop.f32.mrf.mxu0
        %v936 = vadd.f32 0.0, %v935
        %937 = vdwg.mxu0
        %v939 = vrot.slane %v621, 4
        %941 = vxpose.xlu0.b32.start [1/16] %v939, 128
        %942 = vxpose.xlu0.b32.cont [2/16] 0.0, 128
        %943 = vxpose.xlu0.b32.cont [3/16] 0.0, 128
        %944 = vxpose.xlu0.b32.cont [4/16] 0.0, 128
        %945 = vxpose.xlu0.b32.cont [5/16] 0.0, 128
        %946 = vxpose.xlu0.b32.cont [6/16] 0.0, 128
        %947 = vxpose.xlu0.b32.cont [7/16] 0.0, 128
        %948 = vxpose.xlu0.b32.cont [8/16] 0.0, 128
        %949 = vxpose.xlu0.b32.cont [9/16] 0.0, 128
        %950 = vxpose.xlu0.b32.cont [10/16] 0.0, 128
        %951 = vxpose.xlu0.b32.cont [11/16] 0.0, 128
        %952 = vxpose.xlu0.b32.cont [12/16] 0.0, 128
        %953 = vxpose.xlu0.b32.cont [13/16] 0.0, 128
        %954 = vxpose.xlu0.b32.cont [14/16] 0.0, 128
        %955 = vxpose.xlu0.b32.cont [15/16] 0.0, 128
        %956 = vxpose.xlu0.b32.end [16/16] 0.0, 128
        %v957 = vpop.trf.xlu0
        %v958 = vpop.trf.xlu0
        %v959 = vpop.trf.xlu0
        %v960 = vpop.trf.xlu0
        %v961 = vpop.trf.xlu0
        %v962 = vpop.trf.xlu0
        %v963 = vpop.trf.xlu0
        %v964 = vpop.trf.xlu0
        %v965 = vpop.trf.xlu0
        %v966 = vpop.trf.xlu0
        %v967 = vpop.trf.xlu0
        %v968 = vpop.trf.xlu0
        %v969 = vpop.trf.xlu0
        %v970 = vpop.trf.xlu0
        %v971 = vpop.trf.xlu0
        %v972 = vpop.trf.xlu0
        %v973 = vrot.slane %v624, 4
        %v975 = vsel %vm661, %v957, 0
        %v978 = vsel %vm661, %v958, 0
        %v981 = vsel %vm661, %v959, 0
        %v984 = vsel %vm661, %v960, 0
        %v987 = vsel %vm661, %v961, 0
        %v990 = vsel %vm661, %v962, 0
        %v993 = vsel %vm661, %v963, 0
        %v995 = vsel %vm683, %v973, 0
        %997 = vmatpush.msra.mxu0 0.0
        %998 = vmatpush.msra.mxu0 0.0
        %999 = vmatpush.msra.mxu0 0.0
        %1000 = vmatpush.msra.mxu0 0.0
        %1001 = vmatpush.msra.mxu0 0.0
        %1002 = vmatpush.msra.mxu0 0.0
        %1003 = vmatpush.msra.mxu0 0.0
        %1004 = vmatpush.msra.mxu0 0.0
        %1005 = vmatpush.msra.mxu0 0.0
        %1006 = vmatpush.msra.mxu0 0.0
        %1007 = vmatpush.msra.mxu0 0.0
        %1008 = vmatpush.msra.mxu0 0.0
        %1009 = vmatpush.msra.mxu0 0.0
        %1010 = vmatpush.msra.mxu0 0.0
        %1011 = vmatpush.msra.mxu0 0.0
        %1012 = vmatpush.msra.mxu0 %v995
        %1013 = vmatmul.f32.gmra.mxu0 %v975
        %v1014 = vpop.f32.mrf.mxu0
        %v1015 = vadd.f32 0.0, %v1014
        %1016 = vmatmul.f32.gmra.mxu0 %v978
        %v1017 = vpop.f32.mrf.mxu0
        %v1018 = vadd.f32 0.0, %v1017
        %1019 = vmatmul.f32.gmra.mxu0 %v981
        %v1020 = vpop.f32.mrf.mxu0
        %v1021 = vadd.f32 0.0, %v1020
        %1022 = vmatmul.f32.gmra.mxu0 %v984
        %v1023 = vpop.f32.mrf.mxu0
        %v1024 = vadd.f32 0.0, %v1023
        %1025 = vmatmul.f32.gmra.mxu0 %v987
        %v1026 = vpop.f32.mrf.mxu0
        %v1027 = vadd.f32 0.0, %v1026
        %1028 = vmatmul.f32.gmra.mxu0 %v990
        %v1029 = vpop.f32.mrf.mxu0
        %v1030 = vadd.f32 0.0, %v1029
        %1031 = vmatmul.f32.gmra.mxu0 %v993
        %v1032 = vpop.f32.mrf.mxu0
        %v1033 = vadd.f32 0.0, %v1032
        %1034 = vdwg.mxu0
        %v1035 = vsel %vm522, %v1015, -inf
        %1036 = vmax.xlane.f32.xlu0 %v1035
        %v1037 = vpop.xlane.xlu0 %1036
        %v1038 = vsel %vm522, %v1018, -inf
        %1039 = vmax.xlane.f32.xlu0 %v1038
        %v1040 = vpop.xlane.xlu0 %1039
        %v1041 = vsel %vm522, %v1021, -inf
        %1042 = vmax.xlane.f32.xlu0 %v1041
        %v1043 = vpop.xlane.xlu0 %1042
        %v1044 = vsel %vm522, %v1024, -inf
        %1045 = vmax.xlane.f32.xlu0 %v1044
        %v1046 = vpop.xlane.xlu0 %1045
        %v1047 = vsel %vm522, %v1027, -inf
        %1048 = vmax.xlane.f32.xlu0 %v1047
        %v1049 = vpop.xlane.xlu0 %1048
        %v1050 = vsel %vm522, %v1030, -inf
        %1051 = vmax.xlane.f32.xlu0 %v1050
        %v1052 = vpop.xlane.xlu0 %1051
        %v1053 = vsel %vm743, %v1033, -inf
        %1054 = vmax.xlane.f32.xlu0 %v1053
        %v1055 = vpop.xlane.xlu0 %1054
        %v1056 = vsub.f32 %v1015, %v1037
        %v1057 = vsub.f32 %v1018, %v1040
        %v1058 = vsub.f32 %v1021, %v1043
        %v1059 = vsub.f32 %v1024, %v1046
        %v1060 = vsub.f32 %v1027, %v1049
        %v1061 = vsub.f32 %v1030, %v1052
        %v1062 = vsub.f32 %v1033, %v1055
        %v1063 = vmul.f32 %v1056, 1.442695
        %v1064 = vpow.pop %v1063
        %v1065 = vmul.f32 %v1057, 1.442695
        %v1066 = vpow.pop %v1065
        %v1067 = vmul.f32 %v1058, 1.442695
        %v1068 = vpow.pop %v1067
        %v1069 = vmul.f32 %v1059, 1.442695
        %v1070 = vpow.pop %v1069
        %v1071 = vmul.f32 %v1060, 1.442695
        %v1072 = vpow.pop %v1071
        %v1073 = vmul.f32 %v1061, 1.442695
        %v1074 = vpow.pop %v1073
        %v1075 = vmul.f32 %v1062, 1.442695
        %v1076 = vpow.pop %v1075
        %v1077 = vsel %vm522, %v1064, 0.0
        %1078 = vadd.xlane.f32.xlu0 %v1077
        %v1079 = vpop.xlane.xlu0 %1078
        %v1080 = vsel %vm522, %v1066, 0.0
        %1081 = vadd.xlane.f32.xlu0 %v1080
        %v1082 = vpop.xlane.xlu0 %1081
        %v1083 = vsel %vm522, %v1068, 0.0
        %1084 = vadd.xlane.f32.xlu0 %v1083
        %v1085 = vpop.xlane.xlu0 %1084
        %v1086 = vsel %vm522, %v1070, 0.0
        %1087 = vadd.xlane.f32.xlu0 %v1086
        %v1088 = vpop.xlane.xlu0 %1087
        %v1089 = vsel %vm522, %v1072, 0.0
        %1090 = vadd.xlane.f32.xlu0 %v1089
        %v1091 = vpop.xlane.xlu0 %1090
        %v1092 = vsel %vm522, %v1074, 0.0
        %1093 = vadd.xlane.f32.xlu0 %v1092
        %v1094 = vpop.xlane.xlu0 %1093
        %v1095 = vsel %vm743, %v1076, 0.0
        %1096 = vadd.xlane.f32.xlu0 %v1095
        %v1097 = vpop.xlane.xlu0 %1096
        %v1098 = vrcp.pop %v1079
        %v1099 = vmul.f32 %v1079, %v1098
        %v1100 = vsub.f32 1.0, %v1099
        %v1101 = vmul.f32 %v1098, %v1100
        %v1102 = vadd.f32 %v1098, %v1101
        %vm1103 = vweird.f32 %v1079
        %vm1104 = vweird.f32 %v1098
        %vm1105 = vmor %vm1103, %vm1104
        %v1106 = vsel %vm1105, %v1098, %v1102
        %v1107 = vand.u32 2147483647, %v1079
        %vm1108 = vcmp.eq.f32.partialorder %v1107, 8.507059e+37
        %v1109 = vand.u32 %v1079, 2147483648
        %v1110 = vor.u32 1.1754944e-38, %v1109
        %v1111 = vsel %vm1108, %v1110, %v1106
        %v1112 = vrcp.pop %v1082
        %v1113 = vmul.f32 %v1082, %v1112
        %v1114 = vsub.f32 1.0, %v1113
        %v1115 = vmul.f32 %v1112, %v1114
        %v1116 = vadd.f32 %v1112, %v1115
        %vm1117 = vweird.f32 %v1082
        %vm1118 = vweird.f32 %v1112
        %vm1119 = vmor %vm1117, %vm1118
        %v1120 = vsel %vm1119, %v1112, %v1116
        %v1121 = vand.u32 2147483647, %v1082
        %vm1122 = vcmp.eq.f32.partialorder %v1121, 8.507059e+37
        %v1123 = vand.u32 %v1082, 2147483648
        %v1124 = vor.u32 1.1754944e-38, %v1123
        %v1125 = vsel %vm1122, %v1124, %v1120
        %v1126 = vrcp.pop %v1085
        %v1127 = vmul.f32 %v1085, %v1126
        %v1128 = vsub.f32 1.0, %v1127
        %v1129 = vmul.f32 %v1126, %v1128
        %v1130 = vadd.f32 %v1126, %v1129
        %vm1131 = vweird.f32 %v1085
        %vm1132 = vweird.f32 %v1126
        %vm1133 = vmor %vm1131, %vm1132
        %v1134 = vsel %vm1133, %v1126, %v1130
        %v1135 = vand.u32 2147483647, %v1085
        %vm1136 = vcmp.eq.f32.partialorder %v1135, 8.507059e+37
        %v1137 = vand.u32 %v1085, 2147483648
        %v1138 = vor.u32 1.1754944e-38, %v1137
        %v1139 = vsel %vm1136, %v1138, %v1134
        %v1140 = vrcp.pop %v1088
        %v1141 = vmul.f32 %v1088, %v1140
        %v1142 = vsub.f32 1.0, %v1141
        %v1143 = vmul.f32 %v1140, %v1142
        %v1144 = vadd.f32 %v1140, %v1143
        %vm1145 = vweird.f32 %v1088
        %vm1146 = vweird.f32 %v1140
        %vm1147 = vmor %vm1145, %vm1146
        %v1148 = vsel %vm1147, %v1140, %v1144
        %v1149 = vand.u32 2147483647, %v1088
        %vm1150 = vcmp.eq.f32.partialorder %v1149, 8.507059e+37
        %v1151 = vand.u32 %v1088, 2147483648
        %v1152 = vor.u32 1.1754944e-38, %v1151
        %v1153 = vsel %vm1150, %v1152, %v1148
        %v1154 = vrcp.pop %v1091
        %v1155 = vmul.f32 %v1091, %v1154
        %v1156 = vsub.f32 1.0, %v1155
        %v1157 = vmul.f32 %v1154, %v1156
        %v1158 = vadd.f32 %v1154, %v1157
        %vm1159 = vweird.f32 %v1091
        %vm1160 = vweird.f32 %v1154
        %vm1161 = vmor %vm1159, %vm1160
        %v1162 = vsel %vm1161, %v1154, %v1158
        %v1163 = vand.u32 2147483647, %v1091
        %vm1164 = vcmp.eq.f32.partialorder %v1163, 8.507059e+37
        %v1165 = vand.u32 %v1091, 2147483648
        %v1166 = vor.u32 1.1754944e-38, %v1165
        %v1167 = vsel %vm1164, %v1166, %v1162
        %v1168 = vrcp.pop %v1094
        %v1169 = vmul.f32 %v1094, %v1168
        %v1170 = vsub.f32 1.0, %v1169
        %v1171 = vmul.f32 %v1168, %v1170
        %v1172 = vadd.f32 %v1168, %v1171
        %vm1173 = vweird.f32 %v1094
        %vm1174 = vweird.f32 %v1168
        %vm1175 = vmor %vm1173, %vm1174
        %v1176 = vsel %vm1175, %v1168, %v1172
        %v1177 = vand.u32 2147483647, %v1094
        %vm1178 = vcmp.eq.f32.partialorder %v1177, 8.507059e+37
        %v1179 = vand.u32 %v1094, 2147483648
        %v1180 = vor.u32 1.1754944e-38, %v1179
        %v1181 = vsel %vm1178, %v1180, %v1176
        %v1182 = vrcp.pop %v1097
        %v1183 = vmul.f32 %v1097, %v1182
        %v1184 = vsub.f32 1.0, %v1183
        %v1185 = vmul.f32 %v1182, %v1184
        %v1186 = vadd.f32 %v1182, %v1185
        %vm1187 = vweird.f32 %v1097
        %vm1188 = vweird.f32 %v1182
        %vm1189 = vmor %vm1187, %vm1188
        %v1190 = vsel %vm1189, %v1182, %v1186
        %v1191 = vand.u32 2147483647, %v1097
        %vm1192 = vcmp.eq.f32.partialorder %v1191, 8.507059e+37
        %v1193 = vand.u32 %v1097, 2147483648
        %v1194 = vor.u32 1.1754944e-38, %v1193
        %v1195 = vsel %vm1192, %v1194, %v1190
        %v1196 = vmul.f32 %v1064, %v1111
        %v1197 = vmul.f32 %v1066, %v1125
        %v1198 = vmul.f32 %v1068, %v1139
        %v1199 = vmul.f32 %v1070, %v1153
        %v1200 = vmul.f32 %v1072, %v1167
        %v1201 = vmul.f32 %v1074, %v1181
        %v1202 = vmul.f32 %v1076, %v1195
        %v1203 = vrot.slane %v627, 4
        %v1204 = vsel %vm522, %v1203, 0
        %v1207 = vsel %vm522, %v1196, 0
        %v1210 = vsel %vm522, %v1197, 0
        %v1213 = vsel %vm522, %v1198, 0
        %v1216 = vsel %vm522, %v1199, 0
        %v1219 = vsel %vm522, %v1200, 0
        %v1222 = vsel %vm522, %v1201, 0
        %v1225 = vsel %vm522, %v1202, 0
        %1227 = vmatpush.xpose.msra.mxu0 0.0
        %1228 = vmatpush.xpose.msra.mxu0 0.0
        %1229 = vmatpush.xpose.msra.mxu0 0.0
        %1230 = vmatpush.xpose.msra.mxu0 0.0
        %1231 = vmatpush.xpose.msra.mxu0 0.0
        %1232 = vmatpush.xpose.msra.mxu0 0.0
        %1233 = vmatpush.xpose.msra.mxu0 0.0
        %1234 = vmatpush.xpose.msra.mxu0 0.0
        %1235 = vmatpush.xpose.msra.mxu0 0.0
        %1236 = vmatpush.xpose.msra.mxu0 %v1225
        %1237 = vmatpush.xpose.msra.mxu0 %v1222
        %1238 = vmatpush.xpose.msra.mxu0 %v1219
        %1239 = vmatpush.xpose.msra.mxu0 %v1216
        %1240 = vmatpush.xpose.msra.mxu0 %v1213
        %1241 = vmatpush.xpose.msra.mxu0 %v1210
        %1242 = vmatpush.xpose.msra.mxu0 %v1207
        %1243 = vmatmul.f32.gmra.mxu0 %v1204
        %v1244 = vpop.f32.mrf.mxu0
        %v1245 = vadd.f32 0.0, %v1244
        %1246 = vdwg.mxu0
        %v1248 = vrot.slane %v1245, 4
        %v1250 = vsel %vm683, %v936, %v1248
        %v1251 = vadd.f32 %v518, %v1250
        %v1252 = vld [vmem:[%s7] sm:$0xff]
        %v1253 = vld [vmem:[%s8] sm:$0xff]
        %v1254 = vsel %vm522, %v1251, 0.0
        %v1255 = vrot.slane %v1254, 4
        %v1256 = vadd.f32 %v1254, %v1255
        %v1257 = vrot.slane %v1256, 2
        %v1258 = vadd.f32 %v1256, %v1257
        %v1259 = vrot.slane %v1258, 1
        %v1260 = vadd.f32 %v1258, %v1259
        %v1261 = vmul.f32 %v1260, %v536
        %v1262 = vsub.f32 %v1251, %v1261
        %v1263 = vmul.f32 %v1262, %v1262
        %v1264 = vsel %vm522, %v1263, 0.0
        %v1265 = vrot.slane %v1264, 4
        %v1266 = vadd.f32 %v1264, %v1265
        %v1267 = vrot.slane %v1266, 2
        %v1268 = vadd.f32 %v1266, %v1267
        %v1269 = vrot.slane %v1268, 1
        %v1270 = vadd.f32 %v1268, %v1269
        %v1271 = vmul.f32 %v1270, %v536
        %v1272 = vadd.f32 %v1271, 1e-05
        %v1273 = vrsqrt.pop %v1272
        %v1274 = vmul.f32 %v1273, %v1272
        %v1275 = vmul.f32 %v1274, %v1273
        %v1276 = vmul.f32 0.5, %v1275
        %v1277 = vsub.f32 1.5, %v1276
        %v1278 = vmul.f32 %v1273, %v1277
        %vm1279 = vweird.f32 %v1272
        %vm1280 = vweird.f32 %v1273
        %vm1281 = vmor %vm1279, %vm1280
        %v1282 = vsel %vm1281, %v1273, %v1278
        %v1283 = vmul.f32 %v1262, %v1282
        %1285 = vset.pattern.permute.xlu0 0
        %1286 = vperm.xlu0 %1285, %v1252
        %v1287 = vpop.permute.xlu0 %1286
        %v1289 = vmul.f32 %v1283, %v1287
        %1291 = vset.pattern.permute.xlu0 0
        %1292 = vperm.xlu0 %1291, %v1253
        %v1293 = vpop.permute.xlu0 %1292
        %v1295 = vadd.f32 %v1289, %v1293
        %v1296 = vld [vmem:[%s9] sm:$0xff]
        %v1297 = vld [vmem:[%s9 + $0x8] sm:$0xff]
        %v1298 = vld [vmem:[%s9 + $0x10] sm:$0xff]
        %v1299 = vld [vmem:[%s9 + $0x18] sm:$0xff]
        %v1300 = vld [vmem:[%s10] sm:$0xff]
        %v1301 = vld [vmem:[%s10 + $0x8] sm:$0xff]
        %v1302 = vld [vmem:[%s10 + $0x10] sm:$0xff]
        %v1303 = vld [vmem:[%s10 + $0x18] sm:$0xff]
        %1305 = vset.pattern.permute.xlu0 0
        %1306 = vperm.xlu0 %1305, %v1300
        %v1307 = vpop.permute.xlu0 %1306
        %1310 = vset.pattern.permute.xlu0 0
        %1311 = vperm.xlu0 %1310, %v1301
        %v1312 = vpop.permute.xlu0 %1311
        %1315 = vset.pattern.permute.xlu0 0
        %1316 = vperm.xlu0 %1315, %v1302
        %v1317 = vpop.permute.xlu0 %1316
        %1320 = vset.pattern.permute.xlu0 0
        %1321 = vperm.xlu0 %1320, %v1303
        %v1322 = vpop.permute.xlu0 %1321
        %v1325 = vsel %vm593, %v1296, 0
        %v1328 = vsel %vm593, %v1297, 0
        %v1331 = vsel %vm593, %v1298, 0
        %v1334 = vsel %vm593, %v1299, 0
        %1336 = vmatpush.msra.mxu0 0.0
        %1337 = vmatpush.msra.mxu0 0.0
        %1338 = vmatpush.msra.mxu0 0.0
        %1339 = vmatpush.msra.mxu0 0.0
        %1340 = vmatpush.msra.mxu0 0.0
        %1341 = vmatpush.msra.mxu0 0.0
        %1342 = vmatpush.msra.mxu0 0.0
        %1343 = vmatpush.msra.mxu0 0.0
        %1344 = vmatpush.msra.mxu0 0.0
        %1345 = vmatpush.msra.mxu0 0.0
        %1346 = vmatpush.msra.mxu0 0.0
        %1347 = vmatpush.msra.mxu0 0.0
        %1348 = vmatpush.msra.mxu0 0.0
        %1349 = vmatpush.msra.mxu0 0.0
        %1350 = vmatpush.msra.mxu0 0.0
        %1351 = vmatpush.msra.mxu0 %v1295
        %1352 = vmatmul.f32.gmra.mxu0 %v1325
        %v1353 = vpop.f32.mrf.mxu0
        %v1354 = vadd.f32 %v1307, %v1353
        %1355 = vmatmul.f32.gmra.mxu0 %v1328
        %v1356 = vpop.f32.mrf.mxu0
        %v1357 = vadd.f32 %v1312, %v1356
        %1358 = vmatmul.f32.gmra.mxu0 %v1331
        %v1359 = vpop.f32.mrf.mxu0
        %v1360 = vadd.f32 %v1317, %v1359
        %1361 = vmatmul.f32.gmra.mxu0 %v1334
        %v1362 = vpop.f32.mrf.mxu0
        %v1363 = vadd.f32 %v1322, %v1362
        %1364 = vdwg.mxu0
        %v1365 = vmul.f32 %v1354, 0.70710677
        %v1366 = vmul.f32 %v1357, 0.70710677
        %v1367 = vmul.f32 %v1360, 0.70710677
        %v1368 = vmul.f32 %v1363, 0.70710677
        %v1369 = vand.u32 2147483647, %v1365
        %v1370 = vand.u32 2147483647, %v1366
        %v1371 = vand.u32 2147483647, %v1367
        %v1372 = vand.u32 2147483647, %v1368
        %v1373 = vmul.f32 %v1369, 0.3275911
        %v1374 = vmul.f32 %v1370, 0.3275911
        %v1375 = vmul.f32 %v1371, 0.3275911
        %v1376 = vmul.f32 %v1372, 0.3275911
        %v1377 = vadd.f32 %v1373, 1.0
        %v1378 = vadd.f32 %v1374, 1.0
        %v1379 = vadd.f32 %v1375, 1.0
        %v1380 = vadd.f32 %v1376, 1.0
        %v1381 = vrcp.pop %v1377
        %v1382 = vmul.f32 %v1377, %v1381
        %v1383 = vsub.f32 1.0, %v1382
        %v1384 = vmul.f32 %v1381, %v1383
        %v1385 = vadd.f32 %v1381, %v1384
        %vm1386 = vweird.f32 %v1377
        %vm1387 = vweird.f32 %v1381
        %vm1388 = vmor %vm1386, %vm1387
        %v1389 = vsel %vm1388, %v1381, %v1385
        %v1390 = vand.u32 2147483647, %v1377
        %vm1391 = vcmp.eq.f32.partialorder %v1390, 8.507059e+37
        %v1392 = vand.u32 %v1377, 2147483648
        %v1393 = vor.u32 1.1754944e-38, %v1392
        %v1394 = vsel %vm1391, %v1393, %v1389
        %v1395 = vrcp.pop %v1378
        %v1396 = vmul.f32 %v1378, %v1395
        %v1397 = vsub.f32 1.0, %v1396
        %v1398 = vmul.f32 %v1395, %v1397
        %v1399 = vadd.f32 %v1395, %v1398
        %vm1400 = vweird.f32 %v1378
        %vm1401 = vweird.f32 %v1395
        %vm1402 = vmor %vm1400, %vm1401
        %v1403 = vsel %vm1402, %v1395, %v1399
        %v1404 = vand.u32 2147483647, %v1378
        %vm1405 = vcmp.eq.f32.partialorder %v1404, 8.507059e+37
        %v1406 = vand.u32 %v1378, 2147483648
        %v1407 = vor.u32 1.1754944e-38, %v1406
        %v1408 = vsel %vm1405, %v1407, %v1403
        %v1409 = vrcp.pop %v1379
        %v1410 = vmul.f32 %v1379, %v1409
        %v1411 = vsub.f32 1.0, %v1410
        %v1412 = vmul.f32 %v1409, %v1411
        %v1413 = vadd.f32 %v1409, %v1412
        %vm1414 = vweird.f32 %v1379
        %vm1415 = vweird.f32 %v1409
        %vm1416 = vmor %vm1414, %vm1415
        %v1417 = vsel %vm1416, %v1409, %v1413
        %v1418 = vand.u32 2147483647, %v1379
        %vm1419 = vcmp.eq.f32.partialorder %v1418, 8.507059e+37
        %v1420 = vand.u32 %v1379, 2147483648
        %v1421 = vor.u32 1.1754944e-38, %v1420
        %v1422 = vsel %vm1419, %v1421, %v1417
        %v1423 = vrcp.pop %v1380
        %v1424 = vmul.f32 %v1380, %v1423
        %v1425 = vsub.f32 1.0, %v1424
        %v1426 = vmul.f32 %v1423, %v1425
        %v1427 = vadd.f32 %v1423, %v1426
        %vm1428 = vweird.f32 %v1380
        %vm1429 = vweird.f32 %v1423
        %vm1430 = vmor %vm1428, %vm1429
        %v1431 = vsel %vm1430, %v1423, %v1427
        %v1432 = vand.u32 2147483647, %v1380
        %vm1433 = vcmp.eq.f32.partialorder %v1432, 8.507059e+37
        %v1434 = vand.u32 %v1380, 2147483648
        %v1435 = vor.u32 1.1754944e-38, %v1434
        %v1436 = vsel %vm1433, %v1435, %v1431
        %v1437 = vmul.f32 %v1394, 1.0614054
        %v1438 = vmul.f32 %v1408, 1.0614054
        %v1439 = vmul.f32 %v1422, 1.0614054
        %v1440 = vmul.f32 %v1436, 1.0614054
        %v1441 = vadd.f32 %v1437, -1.4531521
        %v1442 = vadd.f32 %v1438, -1.4531521
        %v1443 = vadd.f32 %v1439, -1.4531521
        %v1444 = vadd.f32 %v1440, -1.4531521
        %v1445 = vmul.f32 %v1441, %v1394
        %v1446 = vmul.f32 %v1442, %v1408
        %v1447 = vmul.f32 %v1443, %v1422
        %v1448 = vmul.f32 %v1444, %v1436
        %v1449 = vadd.f32 %v1445, 1.4214138
        %v1450 = vadd.f32 %v1446, 1.4214138
        %v1451 = vadd.f32 %v1447, 1.4214138
        %v1452 = vadd.f32 %v1448, 1.4214138
        %v1453 = vmul.f32 %v1449, %v1394
        %v1454 = vmul.f32 %v1450, %v1408
        %v1455 = vmul.f32 %v1451, %v1422
        %v1456 = vmul.f32 %v1452, %v1436
        %v1457 = vadd.f32 %v1453, -0.28449672
        %v1458 = vadd.f32 %v1454, -0.28449672
        %v1459 = vadd.f32 %v1455, -0.28449672
        %v1460 = vadd.f32 %v1456, -0.28449672
        %v1461 = vmul.f32 %v1457, %v1394
        %v1462 = vmul.f32 %v1458, %v1408
        %v1463 = vmul.f32 %v1459, %v1422
        %v1464 = vmul.f32 %v1460, %v1436
        %v1465 = vadd.f32 %v1461, 0.2548296
        %v1466 = vadd.f32 %v1462, 0.2548296
        %v1467 = vadd.f32 %v1463, 0.2548296
        %v1468 = vadd.f32 %v1464, 0.2548296
        %v1469 = vmul.f32 %v1465, %v1394
        %v1470 = vmul.f32 %v1466, %v1408
        %v1471 = vmul.f32 %v1467, %v1422
        %v1472 = vmul.f32 %v1468, %v1436
        %v1473 = vsub.f32 0.0, %v1369
        %v1474 = vsub.f32 0.0, %v1370
        %v1475 = vsub.f32 0.0, %v1371
        %v1476 = vsub.f32 0.0, %v1372
        %v1477 = vmul.f32 %v1473, %v1369
        %v1478 = vmul.f32 %v1474, %v1370
        %v1479 = vmul.f32 %v1475, %v1371
        %v1480 = vmul.f32 %v1476, %v1372
        %v1481 = vmul.f32 %v1477, 1.442695
        %v1482 = vpow.pop %v1481
        %v1483 = vmul.f32 %v1478, 1.442695
        %v1484 = vpow.pop %v1483
        %v1485 = vmul.f32 %v1479, 1.442695
        %v1486 = vpow.pop %v1485
        %v1487 = vmul.f32 %v1480, 1.442695
        %v1488 = vpow.pop %v1487
        %v1489 = vmul.f32 %v1469, %v1482
        %v1490 = vmul.f32 %v1470, %v1484
        %v1491 = vmul.f32 %v1471, %v1486
        %v1492 = vmul.f32 %v1472, %v1488
        %v1493 = vsub.f32 1.0, %v1489
        %v1494 = vsub.f32 1.0, %v1490
        %v1495 = vsub.f32 1.0, %v1491
        %v1496 = vsub.f32 1.0, %v1492
        %vm1497 = vcmp.ge.f32.partialorder %v1365, 0.0
        %vm1498 = vcmp.ge.f32.partialorder %v1366, 0.0
        %vm1499 = vcmp.ge.f32.partialorder %v1367, 0.0
        %vm1500 = vcmp.ge.f32.partialorder %v1368, 0.0
        %v1501 = vsub.f32 0.0, %v1493
        %v1502 = vsub.f32 0.0, %v1494
        %v1503 = vsub.f32 0.0, %v1495
        %v1504 = vsub.f32 0.0, %v1496
        %v1505 = vsel %vm1497, %v1493, %v1501
        %v1506 = vsel %vm1498, %v1494, %v1502
        %v1507 = vsel %vm1499, %v1495, %v1503
        %v1508 = vsel %vm1500, %v1496, %v1504
        %v1509 = vmul.f32 %v1354, 0.5
        %v1510 = vmul.f32 %v1357, 0.5
        %v1511 = vmul.f32 %v1360, 0.5
        %v1512 = vmul.f32 %v1363, 0.5
        %v1513 = vadd.f32 %v1505, 1.0
        %v1514 = vadd.f32 %v1506, 1.0
        %v1515 = vadd.f32 %v1507, 1.0
        %v1516 = vadd.f32 %v1508, 1.0
        %v1517 = vmul.f32 %v1509, %v1513
        %v1518 = vmul.f32 %v1510, %v1514
        %v1519 = vmul.f32 %v1511, %v1515
        %v1520 = vmul.f32 %v1512, %v1516
        %v1521 = vld [vmem:[%s11] sm:$0xff]
        %v1522 = vld [vmem:[%s12] sm:$0xff]
        %1524 = vset.pattern.permute.xlu0 0
        %1525 = vperm.xlu0 %1524, %v1522
        %v1526 = vpop.permute.xlu0 %1525
        %vm1528 = vcmask 261120
        %v1530 = vsel %vm1528, %v1521, 0
        %1532 = vmatpush.msra.mxu0 0.0
        %1533 = vmatpush.msra.mxu0 0.0
        %1534 = vmatpush.msra.mxu0 0.0
        %1535 = vmatpush.msra.mxu0 0.0
        %1536 = vmatpush.msra.mxu0 0.0
        %1537 = vmatpush.msra.mxu0 0.0
        %1538 = vmatpush.msra.mxu0 0.0
        %1539 = vmatpush.msra.mxu0 0.0
        %1540 = vmatpush.msra.mxu0 0.0
        %1541 = vmatpush.msra.mxu0 0.0
        %1542 = vmatpush.msra.mxu0 0.0
        %1543 = vmatpush.msra.mxu0 0.0
        %1544 = vmatpush.msra.mxu0 %v1520
        %1545 = vmatpush.msra.mxu0 %v1519
        %1546 = vmatpush.msra.mxu0 %v1518
        %1547 = vmatpush.msra.mxu0 %v1517
        %1548 = vmatmul.f32.gmra.mxu0 %v1530
        %v1549 = vpop.f32.mrf.mxu0
        %v1550 = vadd.f32 %v1526, %v1549
        %1551 = vdwg.mxu0
        %v1552 = vadd.f32 %v1251, %v1550
        %s1553 = scalar_lea.vmem %s3, 8
        %v1554 = vld [vmem:[%s1553] sm:$0xff]
        %s1555 = scalar_lea.vmem %s4, 8
        %v1556 = vld [vmem:[%s1555] sm:$0xff]
        %v1557 = vsel %vm522, %v1552, 0.0
        %v1558 = vrot.slane %v1557, 4
        %v1559 = vadd.f32 %v1557, %v1558
        %v1560 = vrot.slane %v1559, 2
        %v1561 = vadd.f32 %v1559, %v1560
        %v1562 = vrot.slane %v1561, 1
        %v1563 = vadd.f32 %v1561, %v1562
        %v1564 = vmul.f32 %v1563, %v536
        %v1565 = vsub.f32 %v1552, %v1564
        %v1566 = vmul.f32 %v1565, %v1565
        %v1567 = vsel %vm522, %v1566, 0.0
        %v1568 = vrot.slane %v1567, 4
        %v1569 = vadd.f32 %v1567, %v1568
        %v1570 = vrot.slane %v1569, 2
        %v1571 = vadd.f32 %v1569, %v1570
        %v1572 = vrot.slane %v1571, 1
        %v1573 = vadd.f32 %v1571, %v1572
        %v1574 = vmul.f32 %v1573, %v536
        %v1575 = vadd.f32 %v1574, 1e-05
        %v1576 = vrsqrt.pop %v1575
        %v1577 = vmul.f32 %v1576, %v1575
        %v1578 = vmul.f32 %v1577, %v1576
        %v1579 = vmul.f32 0.5, %v1578
        %v1580 = vsub.f32 1.5, %v1579
        %v1581 = vmul.f32 %v1576, %v1580
        %vm1582 = vweird.f32 %v1575
        %vm1583 = vweird.f32 %v1576
        %vm1584 = vmor %vm1582, %vm1583
        %v1585 = vsel %vm1584, %v1576, %v1581
        %v1586 = vmul.f32 %v1565, %v1585
        %1588 = vset.pattern.permute.xlu0 0
        %1589 = vperm.xlu0 %1588, %v1554
        %v1590 = vpop.permute.xlu0 %1589
        %v1592 = vmul.f32 %v1586, %v1590
        %1594 = vset.pattern.permute.xlu0 0
        %1595 = vperm.xlu0 %1594, %v1556
        %v1596 = vpop.permute.xlu0 %1595
        %v1598 = vadd.f32 %v1592, %v1596
        %s1599 = scalar_lea.vmem %s5, 24
        %v1600 = vld [vmem:[%s1599] sm:$0xff]
        %v1601 = vld [vmem:[%s1599 + $0x8] sm:$0xff]
        %v1602 = vld [vmem:[%s1599 + $0x10] sm:$0xff]
        %s1603 = scalar_lea.vmem %s6, 24
        %v1604 = vld [vmem:[%s1603] sm:$0xff]
        %v1605 = vld [vmem:[%s1603 + $0x8] sm:$0xff]
        %v1606 = vld [vmem:[%s1603 + $0x10] sm:$0xff]
        %1608 = vset.pattern.permute.xlu0 0
        %1609 = vperm.xlu0 %1608, %v1604
        %v1610 = vpop.permute.xlu0 %1609
        %1613 = vset.pattern.permute.xlu0 0
        %1614 = vperm.xlu0 %1613, %v1605
        %v1615 = vpop.permute.xlu0 %1614
        %1618 = vset.pattern.permute.xlu0 0
        %1619 = vperm.xlu0 %1618, %v1606
        %v1620 = vpop.permute.xlu0 %1619
        %v1623 = vsel %vm593, %v1600, 0
        %v1626 = vsel %vm593, %v1601, 0
        %v1629 = vsel %vm593, %v1602, 0
        %1631 = vmatpush.msra.mxu0 0.0
        %1632 = vmatpush.msra.mxu0 0.0
        %1633 = vmatpush.msra.mxu0 0.0
        %1634 = vmatpush.msra.mxu0 0.0
        %1635 = vmatpush.msra.mxu0 0.0
        %1636 = vmatpush.msra.mxu0 0.0
        %1637 = vmatpush.msra.mxu0 0.0
        %1638 = vmatpush.msra.mxu0 0.0
        %1639 = vmatpush.msra.mxu0 0.0
        %1640 = vmatpush.msra.mxu0 0.0
        %1641 = vmatpush.msra.mxu0 0.0
        %1642 = vmatpush.msra.mxu0 0.0
        %1643 = vmatpush.msra.mxu0 0.0
        %1644 = vmatpush.msra.mxu0 0.0
        %1645 = vmatpush.msra.mxu0 0.0
        %1646 = vmatpush.msra.mxu0 %v1598
        %1647 = vmatmul.f32.gmra.mxu0 %v1623
        %v1648 = vpop.f32.mrf.mxu0
        %v1649 = vadd.f32 %v1610, %v1648
        %1650 = vmatmul.f32.gmra.mxu0 %v1626
        %v1651 = vpop.f32.mrf.mxu0
        %v1652 = vadd.f32 %v1615, %v1651
        %1653 = vmatmul.f32.gmra.mxu0 %v1629
        %v1654 = vpop.f32.mrf.mxu0
        %v1655 = vadd.f32 %v1620, %v1654
        %1656 = vdwg.mxu0
        %1657 = vxpose.xlu0.b32.start [1/16] %v1649, 128
        %1658 = vxpose.xlu0.b32.cont [2/16] 0.0, 128
        %1659 = vxpose.xlu0.b32.cont [3/16] 0.0, 128
        %1660 = vxpose.xlu0.b32.cont [4/16] 0.0, 128
        %1661 = vxpose.xlu0.b32.cont [5/16] 0.0, 128
        %1662 = vxpose.xlu0.b32.cont [6/16] 0.0, 128
        %1663 = vxpose.xlu0.b32.cont [7/16] 0.0, 128
        %1664 = vxpose.xlu0.b32.cont [8/16] 0.0, 128
        %1665 = vxpose.xlu0.b32.cont [9/16] 0.0, 128
        %1666 = vxpose.xlu0.b32.cont [10/16] 0.0, 128
        %1667 = vxpose.xlu0.b32.cont [11/16] 0.0, 128
        %1668 = vxpose.xlu0.b32.cont [12/16] 0.0, 128
        %1669 = vxpose.xlu0.b32.cont [13/16] 0.0, 128
        %1670 = vxpose.xlu0.b32.cont [14/16] 0.0, 128
        %1671 = vxpose.xlu0.b32.cont [15/16] 0.0, 128
        %1672 = vxpose.xlu0.b32.end [16/16] 0.0, 128
        %v1673 = vpop.trf.xlu0
        %v1674 = vpop.trf.xlu0
        %v1675 = vpop.trf.xlu0
        %v1676 = vpop.trf.xlu0
        %v1677 = vpop.trf.xlu0
        %v1678 = vpop.trf.xlu0
        %v1679 = vpop.trf.xlu0
        %v1680 = vpop.trf.xlu0
        %v1681 = vpop.trf.xlu0
        %v1682 = vpop.trf.xlu0
        %v1683 = vpop.trf.xlu0
        %v1684 = vpop.trf.xlu0
        %v1685 = vpop.trf.xlu0
        %v1686 = vpop.trf.xlu0
        %v1687 = vpop.trf.xlu0
        %v1688 = vpop.trf.xlu0
        %v1690 = vsel %vm661, %v1673, 0
        %v1693 = vsel %vm661, %v1674, 0
        %v1696 = vsel %vm661, %v1675, 0
        %v1699 = vsel %vm661, %v1676, 0
        %v1702 = vsel %vm661, %v1677, 0
        %v1705 = vsel %vm661, %v1678, 0
        %v1708 = vsel %vm661, %v1679, 0
        %v1711 = vsel %vm683, %v1652, 0
        %1713 = vmatpush.msra.mxu0 0.0
        %1714 = vmatpush.msra.mxu0 0.0
        %1715 = vmatpush.msra.mxu0 0.0
        %1716 = vmatpush.msra.mxu0 0.0
        %1717 = vmatpush.msra.mxu0 0.0
        %1718 = vmatpush.msra.mxu0 0.0
        %1719 = vmatpush.msra.mxu0 0.0
        %1720 = vmatpush.msra.mxu0 0.0
        %1721 = vmatpush.msra.mxu0 0.0
        %1722 = vmatpush.msra.mxu0 0.0
        %1723 = vmatpush.msra.mxu0 0.0
        %1724 = vmatpush.msra.mxu0 0.0
        %1725 = vmatpush.msra.mxu0 0.0
        %1726 = vmatpush.msra.mxu0 0.0
        %1727 = vmatpush.msra.mxu0 0.0
        %1728 = vmatpush.msra.mxu0 %v1711
        %1729 = vmatmul.f32.gmra.mxu0 %v1690
        %v1730 = vpop.f32.mrf.mxu0
        %v1731 = vadd.f32 0.0, %v1730
        %1732 = vmatmul.f32.gmra.mxu0 %v1693
        %v1733 = vpop.f32.mrf.mxu0
        %v1734 = vadd.f32 0.0, %v1733
        %1735 = vmatmul.f32.gmra.mxu0 %v1696
        %v1736 = vpop.f32.mrf.mxu0
        %v1737 = vadd.f32 0.0, %v1736
        %1738 = vmatmul.f32.gmra.mxu0 %v1699
        %v1739 = vpop.f32.mrf.mxu0
        %v1740 = vadd.f32 0.0, %v1739
        %1741 = vmatmul.f32.gmra.mxu0 %v1702
        %v1742 = vpop.f32.mrf.mxu0
        %v1743 = vadd.f32 0.0, %v1742
        %1744 = vmatmul.f32.gmra.mxu0 %v1705
        %v1745 = vpop.f32.mrf.mxu0
        %v1746 = vadd.f32 0.0, %v1745
        %1747 = vmatmul.f32.gmra.mxu0 %v1708
        %v1748 = vpop.f32.mrf.mxu0
        %v1749 = vadd.f32 0.0, %v1748
        %1750 = vdwg.mxu0
        %v1751 = vsel %vm522, %v1731, -inf
        %1752 = vmax.xlane.f32.xlu0 %v1751
        %v1753 = vpop.xlane.xlu0 %1752
        %v1754 = vsel %vm522, %v1734, -inf
        %1755 = vmax.xlane.f32.xlu0 %v1754
        %v1756 = vpop.xlane.xlu0 %1755
        %v1757 = vsel %vm522, %v1737, -inf
        %1758 = vmax.xlane.f32.xlu0 %v1757
        %v1759 = vpop.xlane.xlu0 %1758
        %v1760 = vsel %vm522, %v1740, -inf
        %1761 = vmax.xlane.f32.xlu0 %v1760
        %v1762 = vpop.xlane.xlu0 %1761
        %v1763 = vsel %vm522, %v1743, -inf
        %1764 = vmax.xlane.f32.xlu0 %v1763
        %v1765 = vpop.xlane.xlu0 %1764
        %v1766 = vsel %vm522, %v1746, -inf
        %1767 = vmax.xlane.f32.xlu0 %v1766
        %v1768 = vpop.xlane.xlu0 %1767
        %v1769 = vsel %vm743, %v1749, -inf
        %1770 = vmax.xlane.f32.xlu0 %v1769
        %v1771 = vpop.xlane.xlu0 %1770
        %v1772 = vsub.f32 %v1731, %v1753
        %v1773 = vsub.f32 %v1734, %v1756
        %v1774 = vsub.f32 %v1737, %v1759
        %v1775 = vsub.f32 %v1740, %v1762
        %v1776 = vsub.f32 %v1743, %v1765
        %v1777 = vsub.f32 %v1746, %v1768
        %v1778 = vsub.f32 %v1749, %v1771
        %v1779 = vmul.f32 %v1772, 1.442695
        %v1780 = vpow.pop %v1779
        %v1781 = vmul.f32 %v1773, 1.442695
        %v1782 = vpow.pop %v1781
        %v1783 = vmul.f32 %v1774, 1.442695
        %v1784 = vpow.pop %v1783
        %v1785 = vmul.f32 %v1775, 1.442695
        %v1786 = vpow.pop %v1785
        %v1787 = vmul.f32 %v1776, 1.442695
        %v1788 = vpow.pop %v1787
        %v1789 = vmul.f32 %v1777, 1.442695
        %v1790 = vpow.pop %v1789
        %v1791 = vmul.f32 %v1778, 1.442695
        %v1792 = vpow.pop %v1791
        %v1793 = vsel %vm522, %v1780, 0.0
        %1794 = vadd.xlane.f32.xlu0 %v1793
        %v1795 = vpop.xlane.xlu0 %1794
        %v1796 = vsel %vm522, %v1782, 0.0
        %1797 = vadd.xlane.f32.xlu0 %v1796
        %v1798 = vpop.xlane.xlu0 %1797
        %v1799 = vsel %vm522, %v1784, 0.0
        %1800 = vadd.xlane.f32.xlu0 %v1799
        %v1801 = vpop.xlane.xlu0 %1800
        %v1802 = vsel %vm522, %v1786, 0.0
        %1803 = vadd.xlane.f32.xlu0 %v1802
        %v1804 = vpop.xlane.xlu0 %1803
        %v1805 = vsel %vm522, %v1788, 0.0
        %1806 = vadd.xlane.f32.xlu0 %v1805
        %v1807 = vpop.xlane.xlu0 %1806
        %v1808 = vsel %vm522, %v1790, 0.0
        %1809 = vadd.xlane.f32.xlu0 %v1808
        %v1810 = vpop.xlane.xlu0 %1809
        %v1811 = vsel %vm743, %v1792, 0.0
        %1812 = vadd.xlane.f32.xlu0 %v1811
        %v1813 = vpop.xlane.xlu0 %1812
        %v1814 = vrcp.pop %v1795
        %v1815 = vmul.f32 %v1795, %v1814
        %v1816 = vsub.f32 1.0, %v1815
        %v1817 = vmul.f32 %v1814, %v1816
        %v1818 = vadd.f32 %v1814, %v1817
        %vm1819 = vweird.f32 %v1795
        %vm1820 = vweird.f32 %v1814
        %vm1821 = vmor %vm1819, %vm1820
        %v1822 = vsel %vm1821, %v1814, %v1818
        %v1823 = vand.u32 2147483647, %v1795
        %vm1824 = vcmp.eq.f32.partialorder %v1823, 8.507059e+37
        %v1825 = vand.u32 %v1795, 2147483648
        %v1826 = vor.u32 1.1754944e-38, %v1825
        %v1827 = vsel %vm1824, %v1826, %v1822
        %v1828 = vrcp.pop %v1798
        %v1829 = vmul.f32 %v1798, %v1828
        %v1830 = vsub.f32 1.0, %v1829
        %v1831 = vmul.f32 %v1828, %v1830
        %v1832 = vadd.f32 %v1828, %v1831
        %vm1833 = vweird.f32 %v1798
        %vm1834 = vweird.f32 %v1828
        %vm1835 = vmor %vm1833, %vm1834
        %v1836 = vsel %vm1835, %v1828, %v1832
        %v1837 = vand.u32 2147483647, %v1798
        %vm1838 = vcmp.eq.f32.partialorder %v1837, 8.507059e+37
        %v1839 = vand.u32 %v1798, 2147483648
        %v1840 = vor.u32 1.1754944e-38, %v1839
        %v1841 = vsel %vm1838, %v1840, %v1836
        %v1842 = vrcp.pop %v1801
        %v1843 = vmul.f32 %v1801, %v1842
        %v1844 = vsub.f32 1.0, %v1843
        %v1845 = vmul.f32 %v1842, %v1844
        %v1846 = vadd.f32 %v1842, %v1845
        %vm1847 = vweird.f32 %v1801
        %vm1848 = vweird.f32 %v1842
        %vm1849 = vmor %vm1847, %vm1848
        %v1850 = vsel %vm1849, %v1842, %v1846
        %v1851 = vand.u32 2147483647, %v1801
        %vm1852 = vcmp.eq.f32.partialorder %v1851, 8.507059e+37
        %v1853 = vand.u32 %v1801, 2147483648
        %v1854 = vor.u32 1.1754944e-38, %v1853
        %v1855 = vsel %vm1852, %v1854, %v1850
        %v1856 = vrcp.pop %v1804
        %v1857 = vmul.f32 %v1804, %v1856
        %v1858 = vsub.f32 1.0, %v1857
        %v1859 = vmul.f32 %v1856, %v1858
        %v1860 = vadd.f32 %v1856, %v1859
        %vm1861 = vweird.f32 %v1804
        %vm1862 = vweird.f32 %v1856
        %vm1863 = vmor %vm1861, %vm1862
        %v1864 = vsel %vm1863, %v1856, %v1860
        %v1865 = vand.u32 2147483647, %v1804
        %vm1866 = vcmp.eq.f32.partialorder %v1865, 8.507059e+37
        %v1867 = vand.u32 %v1804, 2147483648
        %v1868 = vor.u32 1.1754944e-38, %v1867
        %v1869 = vsel %vm1866, %v1868, %v1864
        %v1870 = vrcp.pop %v1807
        %v1871 = vmul.f32 %v1807, %v1870
        %v1872 = vsub.f32 1.0, %v1871
        %v1873 = vmul.f32 %v1870, %v1872
        %v1874 = vadd.f32 %v1870, %v1873
        %vm1875 = vweird.f32 %v1807
        %vm1876 = vweird.f32 %v1870
        %vm1877 = vmor %vm1875, %vm1876
        %v1878 = vsel %vm1877, %v1870, %v1874
        %v1879 = vand.u32 2147483647, %v1807
        %vm1880 = vcmp.eq.f32.partialorder %v1879, 8.507059e+37
        %v1881 = vand.u32 %v1807, 2147483648
        %v1882 = vor.u32 1.1754944e-38, %v1881
        %v1883 = vsel %vm1880, %v1882, %v1878
        %v1884 = vrcp.pop %v1810
        %v1885 = vmul.f32 %v1810, %v1884
        %v1886 = vsub.f32 1.0, %v1885
        %v1887 = vmul.f32 %v1884, %v1886
        %v1888 = vadd.f32 %v1884, %v1887
        %vm1889 = vweird.f32 %v1810
        %vm1890 = vweird.f32 %v1884
        %vm1891 = vmor %vm1889, %vm1890
        %v1892 = vsel %vm1891, %v1884, %v1888
        %v1893 = vand.u32 2147483647, %v1810
        %vm1894 = vcmp.eq.f32.partialorder %v1893, 8.507059e+37
        %v1895 = vand.u32 %v1810, 2147483648
        %v1896 = vor.u32 1.1754944e-38, %v1895
        %v1897 = vsel %vm1894, %v1896, %v1892
        %v1898 = vrcp.pop %v1813
        %v1899 = vmul.f32 %v1813, %v1898
        %v1900 = vsub.f32 1.0, %v1899
        %v1901 = vmul.f32 %v1898, %v1900
        %v1902 = vadd.f32 %v1898, %v1901
        %vm1903 = vweird.f32 %v1813
        %vm1904 = vweird.f32 %v1898
        %vm1905 = vmor %vm1903, %vm1904
        %v1906 = vsel %vm1905, %v1898, %v1902
        %v1907 = vand.u32 2147483647, %v1813
        %vm1908 = vcmp.eq.f32.partialorder %v1907, 8.507059e+37
        %v1909 = vand.u32 %v1813, 2147483648
        %v1910 = vor.u32 1.1754944e-38, %v1909
        %v1911 = vsel %vm1908, %v1910, %v1906
        %v1912 = vmul.f32 %v1780, %v1827
        %v1913 = vmul.f32 %v1782, %v1841
        %v1914 = vmul.f32 %v1784, %v1855
        %v1915 = vmul.f32 %v1786, %v1869
        %v1916 = vmul.f32 %v1788, %v1883
        %v1917 = vmul.f32 %v1790, %v1897
        %v1918 = vmul.f32 %v1792, %v1911
        %v1920 = vsel %vm522, %v1655, 0
        %v1923 = vsel %vm522, %v1912, 0
        %v1926 = vsel %vm522, %v1913, 0
        %v1929 = vsel %vm522, %v1914, 0
        %v1932 = vsel %vm522, %v1915, 0
        %v1935 = vsel %vm522, %v1916, 0
        %v1938 = vsel %vm522, %v1917, 0
        %v1941 = vsel %vm522, %v1918, 0
        %1943 = vmatpush.xpose.msra.mxu0 0.0
        %1944 = vmatpush.xpose.msra.mxu0 0.0
        %1945 = vmatpush.xpose.msra.mxu0 0.0
        %1946 = vmatpush.xpose.msra.mxu0 0.0
        %1947 = vmatpush.xpose.msra.mxu0 0.0
        %1948 = vmatpush.xpose.msra.mxu0 0.0
        %1949 = vmatpush.xpose.msra.mxu0 0.0
        %1950 = vmatpush.xpose.msra.mxu0 0.0
        %1951 = vmatpush.xpose.msra.mxu0 0.0
        %1952 = vmatpush.xpose.msra.mxu0 %v1941
        %1953 = vmatpush.xpose.msra.mxu0 %v1938
        %1954 = vmatpush.xpose.msra.mxu0 %v1935
        %1955 = vmatpush.xpose.msra.mxu0 %v1932
        %1956 = vmatpush.xpose.msra.mxu0 %v1929
        %1957 = vmatpush.xpose.msra.mxu0 %v1926
        %1958 = vmatpush.xpose.msra.mxu0 %v1923
        %1959 = vmatmul.f32.gmra.mxu0 %v1920
        %v1960 = vpop.f32.mrf.mxu0
        %v1961 = vadd.f32 0.0, %v1960
        %1962 = vdwg.mxu0
        %v1964 = vrot.slane %v1649, 4
        %1966 = vxpose.xlu0.b32.start [1/16] %v1964, 128
        %1967 = vxpose.xlu0.b32.cont [2/16] 0.0, 128
        %1968 = vxpose.xlu0.b32.cont [3/16] 0.0, 128
        %1969 = vxpose.xlu0.b32.cont [4/16] 0.0, 128
        %1970 = vxpose.xlu0.b32.cont [5/16] 0.0, 128
        %1971 = vxpose.xlu0.b32.cont [6/16] 0.0, 128
        %1972 = vxpose.xlu0.b32.cont [7/16] 0.0, 128
        %1973 = vxpose.xlu0.b32.cont [8/16] 0.0, 128
        %1974 = vxpose.xlu0.b32.cont [9/16] 0.0, 128
        %1975 = vxpose.xlu0.b32.cont [10/16] 0.0, 128
        %1976 = vxpose.xlu0.b32.cont [11/16] 0.0, 128
        %1977 = vxpose.xlu0.b32.cont [12/16] 0.0, 128
        %1978 = vxpose.xlu0.b32.cont [13/16] 0.0, 128
        %1979 = vxpose.xlu0.b32.cont [14/16] 0.0, 128
        %1980 = vxpose.xlu0.b32.cont [15/16] 0.0, 128
        %1981 = vxpose.xlu0.b32.end [16/16] 0.0, 128
        %v1982 = vpop.trf.xlu0
        %v1983 = vpop.trf.xlu0
        %v1984 = vpop.trf.xlu0
        %v1985 = vpop.trf.xlu0
        %v1986 = vpop.trf.xlu0
        %v1987 = vpop.trf.xlu0
        %v1988 = vpop.trf.xlu0
        %v1989 = vpop.trf.xlu0
        %v1990 = vpop.trf.xlu0
        %v1991 = vpop.trf.xlu0
        %v1992 = vpop.trf.xlu0
        %v1993 = vpop.trf.xlu0
        %v1994 = vpop.trf.xlu0
        %v1995 = vpop.trf.xlu0
        %v1996 = vpop.trf.xlu0
        %v1997 = vpop.trf.xlu0
        %v1998 = vrot.slane %v1652, 4
        %v2000 = vsel %vm661, %v1982, 0
        %v2003 = vsel %vm661, %v1983, 0
        %v2006 = vsel %vm661, %v1984, 0
        %v2009 = vsel %vm661, %v1985, 0
        %v2012 = vsel %vm661, %v1986, 0
        %v2015 = vsel %vm661, %v1987, 0
        %v2018 = vsel %vm661, %v1988, 0
        %v2020 = vsel %vm683, %v1998, 0
        %2022 = vmatpush.msra.mxu0 0.0
        %2023 = vmatpush.msra.mxu0 0.0
        %2024 = vmatpush.msra.mxu0 0.0
        %2025 = vmatpush.msra.mxu0 0.0
        %2026 = vmatpush.msra.mxu0 0.0
        %2027 = vmatpush.msra.mxu0 0.0
        %2028 = vmatpush.msra.mxu0 0.0
        %2029 = vmatpush.msra.mxu0 0.0
        %2030 = vmatpush.msra.mxu0 0.0
        %2031 = vmatpush.msra.mxu0 0.0
        %2032 = vmatpush.msra.mxu0 0.0
        %2033 = vmatpush.msra.mxu0 0.0
        %2034 = vmatpush.msra.mxu0 0.0
        %2035 = vmatpush.msra.mxu0 0.0
        %2036 = vmatpush.msra.mxu0 0.0
        %2037 = vmatpush.msra.mxu0 %v2020
        %2038 = vmatmul.f32.gmra.mxu0 %v2000
        %v2039 = vpop.f32.mrf.mxu0
        %v2040 = vadd.f32 0.0, %v2039
        %2041 = vmatmul.f32.gmra.mxu0 %v2003
        %v2042 = vpop.f32.mrf.mxu0
        %v2043 = vadd.f32 0.0, %v2042
        %2044 = vmatmul.f32.gmra.mxu0 %v2006
        %v2045 = vpop.f32.mrf.mxu0
        %v2046 = vadd.f32 0.0, %v2045
        %2047 = vmatmul.f32.gmra.mxu0 %v2009
        %v2048 = vpop.f32.mrf.mxu0
        %v2049 = vadd.f32 0.0, %v2048
        %2050 = vmatmul.f32.gmra.mxu0 %v2012
        %v2051 = vpop.f32.mrf.mxu0
        %v2052 = vadd.f32 0.0, %v2051
        %2053 = vmatmul.f32.gmra.mxu0 %v2015
        %v2054 = vpop.f32.mrf.mxu0
        %v2055 = vadd.f32 0.0, %v2054
        %2056 = vmatmul.f32.gmra.mxu0 %v2018
        %v2057 = vpop.f32.mrf.mxu0
        %v2058 = vadd.f32 0.0, %v2057
        %2059 = vdwg.mxu0
        %v2060 = vsel %vm522, %v2040, -inf
        %2061 = vmax.xlane.f32.xlu0 %v2060
        %v2062 = vpop.xlane.xlu0 %2061
        %v2063 = vsel %vm522, %v2043, -inf
        %2064 = vmax.xlane.f32.xlu0 %v2063
        %v2065 = vpop.xlane.xlu0 %2064
        %v2066 = vsel %vm522, %v2046, -inf
        %2067 = vmax.xlane.f32.xlu0 %v2066
        %v2068 = vpop.xlane.xlu0 %2067
        %v2069 = vsel %vm522, %v2049, -inf
        %2070 = vmax.xlane.f32.xlu0 %v2069
        %v2071 = vpop.xlane.xlu0 %2070
        %v2072 = vsel %vm522, %v2052, -inf
        %2073 = vmax.xlane.f32.xlu0 %v2072
        %v2074 = vpop.xlane.xlu0 %2073
        %v2075 = vsel %vm522, %v2055, -inf
        %2076 = vmax.xlane.f32.xlu0 %v2075
        %v2077 = vpop.xlane.xlu0 %2076
        %v2078 = vsel %vm743, %v2058, -inf
        %2079 = vmax.xlane.f32.xlu0 %v2078
        %v2080 = vpop.xlane.xlu0 %2079
        %v2081 = vsub.f32 %v2040, %v2062
        %v2082 = vsub.f32 %v2043, %v2065
        %v2083 = vsub.f32 %v2046, %v2068
        %v2084 = vsub.f32 %v2049, %v2071
        %v2085 = vsub.f32 %v2052, %v2074
        %v2086 = vsub.f32 %v2055, %v2077
        %v2087 = vsub.f32 %v2058, %v2080
        %v2088 = vmul.f32 %v2081, 1.442695
        %v2089 = vpow.pop %v2088
        %v2090 = vmul.f32 %v2082, 1.442695
        %v2091 = vpow.pop %v2090
        %v2092 = vmul.f32 %v2083, 1.442695
        %v2093 = vpow.pop %v2092
        %v2094 = vmul.f32 %v2084, 1.442695
        %v2095 = vpow.pop %v2094
        %v2096 = vmul.f32 %v2085, 1.442695
        %v2097 = vpow.pop %v2096
        %v2098 = vmul.f32 %v2086, 1.442695
        %v2099 = vpow.pop %v2098
        %v2100 = vmul.f32 %v2087, 1.442695
        %v2101 = vpow.pop %v2100
        %v2102 = vsel %vm522, %v2089, 0.0
        %2103 = vadd.xlane.f32.xlu0 %v2102
        %v2104 = vpop.xlane.xlu0 %2103
        %v2105 = vsel %vm522, %v2091, 0.0
        %2106 = vadd.xlane.f32.xlu0 %v2105
        %v2107 = vpop.xlane.xlu0 %2106
        %v2108 = vsel %vm522, %v2093, 0.0
        %2109 = vadd.xlane.f32.xlu0 %v2108
        %v2110 = vpop.xlane.xlu0 %2109
        %v2111 = vsel %vm522, %v2095, 0.0
        %2112 = vadd.xlane.f32.xlu0 %v2111
        %v2113 = vpop.xlane.xlu0 %2112
        %v2114 = vsel %vm522, %v2097, 0.0
        %2115 = vadd.xlane.f32.xlu0 %v2114
        %v2116 = vpop.xlane.xlu0 %2115
        %v2117 = vsel %vm522, %v2099, 0.0
        %2118 = vadd.xlane.f32.xlu0 %v2117
        %v2119 = vpop.xlane.xlu0 %2118
        %v2120 = vsel %vm743, %v2101, 0.0
        %2121 = vadd.xlane.f32.xlu0 %v2120
        %v2122 = vpop.xlane.xlu0 %2121
        %v2123 = vrcp.pop %v2104
        %v2124 = vmul.f32 %v2104, %v2123
        %v2125 = vsub.f32 1.0, %v2124
        %v2126 = vmul.f32 %v2123, %v2125
        %v2127 = vadd.f32 %v2123, %v2126
        %vm2128 = vweird.f32 %v2104
        %vm2129 = vweird.f32 %v2123
        %vm2130 = vmor %vm2128, %vm2129
        %v2131 = vsel %vm2130, %v2123, %v2127
        %v2132 = vand.u32 2147483647, %v2104
        %vm2133 = vcmp.eq.f32.partialorder %v2132, 8.507059e+37
        %v2134 = vand.u32 %v2104, 2147483648
        %v2135 = vor.u32 1.1754944e-38, %v2134
        %v2136 = vsel %vm2133, %v2135, %v2131
        %v2137 = vrcp.pop %v2107
        %v2138 = vmul.f32 %v2107, %v2137
        %v2139 = vsub.f32 1.0, %v2138
        %v2140 = vmul.f32 %v2137, %v2139
        %v2141 = vadd.f32 %v2137, %v2140
        %vm2142 = vweird.f32 %v2107
        %vm2143 = vweird.f32 %v2137
        %vm2144 = vmor %vm2142, %vm2143
        %v2145 = vsel %vm2144, %v2137, %v2141
        %v2146 = vand.u32 2147483647, %v2107
        %vm2147 = vcmp.eq.f32.partialorder %v2146, 8.507059e+37
        %v2148 = vand.u32 %v2107, 2147483648
        %v2149 = vor.u32 1.1754944e-38, %v2148
        %v2150 = vsel %vm2147, %v2149, %v2145
        %v2151 = vrcp.pop %v2110
        %v2152 = vmul.f32 %v2110, %v2151
        %v2153 = vsub.f32 1.0, %v2152
        %v2154 = vmul.f32 %v2151, %v2153
        %v2155 = vadd.f32 %v2151, %v2154
        %vm2156 = vweird.f32 %v2110
        %vm2157 = vweird.f32 %v2151
        %vm2158 = vmor %vm2156, %vm2157
        %v2159 = vsel %vm2158, %v2151, %v2155
        %v2160 = vand.u32 2147483647, %v2110
        %vm2161 = vcmp.eq.f32.partialorder %v2160, 8.507059e+37
        %v2162 = vand.u32 %v2110, 2147483648
        %v2163 = vor.u32 1.1754944e-38, %v2162
        %v2164 = vsel %vm2161, %v2163, %v2159
        %v2165 = vrcp.pop %v2113
        %v2166 = vmul.f32 %v2113, %v2165
        %v2167 = vsub.f32 1.0, %v2166
        %v2168 = vmul.f32 %v2165, %v2167
        %v2169 = vadd.f32 %v2165, %v2168
        %vm2170 = vweird.f32 %v2113
        %vm2171 = vweird.f32 %v2165
        %vm2172 = vmor %vm2170, %vm2171
        %v2173 = vsel %vm2172, %v2165, %v2169
        %v2174 = vand.u32 2147483647, %v2113
        %vm2175 = vcmp.eq.f32.partialorder %v2174, 8.507059e+37
        %v2176 = vand.u32 %v2113, 2147483648
        %v2177 = vor.u32 1.1754944e-38, %v2176
        %v2178 = vsel %vm2175, %v2177, %v2173
        %v2179 = vrcp.pop %v2116
        %v2180 = vmul.f32 %v2116, %v2179
        %v2181 = vsub.f32 1.0, %v2180
        %v2182 = vmul.f32 %v2179, %v2181
        %v2183 = vadd.f32 %v2179, %v2182
        %vm2184 = vweird.f32 %v2116
        %vm2185 = vweird.f32 %v2179
        %vm2186 = vmor %vm2184, %vm2185
        %v2187 = vsel %vm2186, %v2179, %v2183
        %v2188 = vand.u32 2147483647, %v2116
        %vm2189 = vcmp.eq.f32.partialorder %v2188, 8.507059e+37
        %v2190 = vand.u32 %v2116, 2147483648
        %v2191 = vor.u32 1.1754944e-38, %v2190
        %v2192 = vsel %vm2189, %v2191, %v2187
        %v2193 = vrcp.pop %v2119
        %v2194 = vmul.f32 %v2119, %v2193
        %v2195 = vsub.f32 1.0, %v2194
        %v2196 = vmul.f32 %v2193, %v2195
        %v2197 = vadd.f32 %v2193, %v2196
        %vm2198 = vweird.f32 %v2119
        %vm2199 = vweird.f32 %v2193
        %vm2200 = vmor %vm2198, %vm2199
        %v2201 = vsel %vm2200, %v2193, %v2197
        %v2202 = vand.u32 2147483647, %v2119
        %vm2203 = vcmp.eq.f32.partialorder %v2202, 8.507059e+37
        %v2204 = vand.u32 %v2119, 2147483648
        %v2205 = vor.u32 1.1754944e-38, %v2204
        %v2206 = vsel %vm2203, %v2205, %v2201
        %v2207 = vrcp.pop %v2122
        %v2208 = vmul.f32 %v2122, %v2207
        %v2209 = vsub.f32 1.0, %v2208
        %v2210 = vmul.f32 %v2207, %v2209
        %v2211 = vadd.f32 %v2207, %v2210
        %vm2212 = vweird.f32 %v2122
        %vm2213 = vweird.f32 %v2207
        %vm2214 = vmor %vm2212, %vm2213
        %v2215 = vsel %vm2214, %v2207, %v2211
        %v2216 = vand.u32 2147483647, %v2122
        %vm2217 = vcmp.eq.f32.partialorder %v2216, 8.507059e+37
        %v2218 = vand.u32 %v2122, 2147483648
        %v2219 = vor.u32 1.1754944e-38, %v2218
        %v2220 = vsel %vm2217, %v2219, %v2215
        %v2221 = vmul.f32 %v2089, %v2136
        %v2222 = vmul.f32 %v2091, %v2150
        %v2223 = vmul.f32 %v2093, %v2164
        %v2224 = vmul.f32 %v2095, %v2178
        %v2225 = vmul.f32 %v2097, %v2192
        %v2226 = vmul.f32 %v2099, %v2206
        %v2227 = vmul.f32 %v2101, %v2220
        %v2228 = vrot.slane %v1655, 4
        %v2229 = vsel %vm522, %v2228, 0
        %v2232 = vsel %vm522, %v2221, 0
        %v2235 = vsel %vm522, %v2222, 0
        %v2238 = vsel %vm522, %v2223, 0
        %v2241 = vsel %vm522, %v2224, 0
        %v2244 = vsel %vm522, %v2225, 0
        %v2247 = vsel %vm522, %v2226, 0
        %v2250 = vsel %vm522, %v2227, 0
        %2252 = vmatpush.xpose.msra.mxu0 0.0
        %2253 = vmatpush.xpose.msra.mxu0 0.0
        %2254 = vmatpush.xpose.msra.mxu0 0.0
        %2255 = vmatpush.xpose.msra.mxu0 0.0
        %2256 = vmatpush.xpose.msra.mxu0 0.0
        %2257 = vmatpush.xpose.msra.mxu0 0.0
        %2258 = vmatpush.xpose.msra.mxu0 0.0
        %2259 = vmatpush.xpose.msra.mxu0 0.0
        %2260 = vmatpush.xpose.msra.mxu0 0.0
        %2261 = vmatpush.xpose.msra.mxu0 %v2250
        %2262 = vmatpush.xpose.msra.mxu0 %v2247
        %2263 = vmatpush.xpose.msra.mxu0 %v2244
        %2264 = vmatpush.xpose.msra.mxu0 %v2241
        %2265 = vmatpush.xpose.msra.mxu0 %v2238
        %2266 = vmatpush.xpose.msra.mxu0 %v2235
        %2267 = vmatpush.xpose.msra.mxu0 %v2232
        %2268 = vmatmul.f32.gmra.mxu0 %v2229
        %v2269 = vpop.f32.mrf.mxu0
        %v2270 = vadd.f32 0.0, %v2269
        %2271 = vdwg.mxu0
        %v2273 = vrot.slane %v2270, 4
        %v2275 = vsel %vm683, %v1961, %v2273
        %v2276 = vadd.f32 %v1552, %v2275
        %s2277 = scalar_lea.vmem %s7, 8
        %v2278 = vld [vmem:[%s2277] sm:$0xff]
        %s2279 = scalar_lea.vmem %s8, 8
        %v2280 = vld [vmem:[%s2279] sm:$0xff]
        %v2281 = vsel %vm522, %v2276, 0.0
        %v2282 = vrot.slane %v2281, 4
        %v2283 = vadd.f32 %v2281, %v2282
        %v2284 = vrot.slane %v2283, 2
        %v2285 = vadd.f32 %v2283, %v2284
        %v2286 = vrot.slane %v2285, 1
        %v2287 = vadd.f32 %v2285, %v2286
        %v2288 = vmul.f32 %v2287, %v536
        %v2289 = vsub.f32 %v2276, %v2288
        %v2290 = vmul.f32 %v2289, %v2289
        %v2291 = vsel %vm522, %v2290, 0.0
        %v2292 = vrot.slane %v2291, 4
        %v2293 = vadd.f32 %v2291, %v2292
        %v2294 = vrot.slane %v2293, 2
        %v2295 = vadd.f32 %v2293, %v2294
        %v2296 = vrot.slane %v2295, 1
        %v2297 = vadd.f32 %v2295, %v2296
        %v2298 = vmul.f32 %v2297, %v536
        %v2299 = vadd.f32 %v2298, 1e-05
        %v2300 = vrsqrt.pop %v2299
        %v2301 = vmul.f32 %v2300, %v2299
        %v2302 = vmul.f32 %v2301, %v2300
        %v2303 = vmul.f32 0.5, %v2302
        %v2304 = vsub.f32 1.5, %v2303
        %v2305 = vmul.f32 %v2300, %v2304
        %vm2306 = vweird.f32 %v2299
        %vm2307 = vweird.f32 %v2300
        %vm2308 = vmor %vm2306, %vm2307
        %v2309 = vsel %vm2308, %v2300, %v2305
        %v2310 = vmul.f32 %v2289, %v2309
        %2312 = vset.pattern.permute.xlu0 0
        %2313 = vperm.xlu0 %2312, %v2278
        %v2314 = vpop.permute.xlu0 %2313
        %v2316 = vmul.f32 %v2310, %v2314
        %2318 = vset.pattern.permute.xlu0 0
        %2319 = vperm.xlu0 %2318, %v2280
        %v2320 = vpop.permute.xlu0 %2319
        %v2322 = vadd.f32 %v2316, %v2320
        %s2323 = scalar_lea.vmem %s9, 32
        %v2324 = vld [vmem:[%s2323] sm:$0xff]
        %v2325 = vld [vmem:[%s2323 + $0x8] sm:$0xff]
        %v2326 = vld [vmem:[%s2323 + $0x10] sm:$0xff]
        %v2327 = vld [vmem:[%s2323 + $0x18] sm:$0xff]
        %s2328 = scalar_lea.vmem %s10, 32
        %v2329 = vld [vmem:[%s2328] sm:$0xff]
        %v2330 = vld [vmem:[%s2328 + $0x8] sm:$0xff]
        %v2331 = vld [vmem:[%s2328 + $0x10] sm:$0xff]
        %v2332 = vld [vmem:[%s2328 + $0x18] sm:$0xff]
        %2334 = vset.pattern.permute.xlu0 0
        %2335 = vperm.xlu0 %2334, %v2329
        %v2336 = vpop.permute.xlu0 %2335
        %2339 = vset.pattern.permute.xlu0 0
        %2340 = vperm.xlu0 %2339, %v2330
        %v2341 = vpop.permute.xlu0 %2340
        %2344 = vset.pattern.permute.xlu0 0
        %2345 = vperm.xlu0 %2344, %v2331
        %v2346 = vpop.permute.xlu0 %2345
        %2349 = vset.pattern.permute.xlu0 0
        %2350 = vperm.xlu0 %2349, %v2332
        %v2351 = vpop.permute.xlu0 %2350
        %v2354 = vsel %vm593, %v2324, 0
        %v2357 = vsel %vm593, %v2325, 0
        %v2360 = vsel %vm593, %v2326, 0
        %v2363 = vsel %vm593, %v2327, 0
        %2365 = vmatpush.msra.mxu0 0.0
        %2366 = vmatpush.msra.mxu0 0.0
        %2367 = vmatpush.msra.mxu0 0.0
        %2368 = vmatpush.msra.mxu0 0.0
        %2369 = vmatpush.msra.mxu0 0.0
        %2370 = vmatpush.msra.mxu0 0.0
        %2371 = vmatpush.msra.mxu0 0.0
        %2372 = vmatpush.msra.mxu0 0.0
        %2373 = vmatpush.msra.mxu0 0.0
        %2374 = vmatpush.msra.mxu0 0.0
        %2375 = vmatpush.msra.mxu0 0.0
        %2376 = vmatpush.msra.mxu0 0.0
        %2377 = vmatpush.msra.mxu0 0.0
        %2378 = vmatpush.msra.mxu0 0.0
        %2379 = vmatpush.msra.mxu0 0.0
        %2380 = vmatpush.msra.mxu0 %v2322
        %2381 = vmatmul.f32.gmra.mxu0 %v2354
        %v2382 = vpop.f32.mrf.mxu0
        %v2383 = vadd.f32 %v2336, %v2382
        %2384 = vmatmul.f32.gmra.mxu0 %v2357
        %v2385 = vpop.f32.mrf.mxu0
        %v2386 = vadd.f32 %v2341, %v2385
        %2387 = vmatmul.f32.gmra.mxu0 %v2360
        %v2388 = vpop.f32.mrf.mxu0
        %v2389 = vadd.f32 %v2346, %v2388
        %2390 = vmatmul.f32.gmra.mxu0 %v2363
        %v2391 = vpop.f32.mrf.mxu0
        %v2392 = vadd.f32 %v2351, %v2391
        %2393 = vdwg.mxu0
        %v2394 = vmul.f32 %v2383, 0.70710677
        %v2395 = vmul.f32 %v2386, 0.70710677
        %v2396 = vmul.f32 %v2389, 0.70710677
        %v2397 = vmul.f32 %v2392, 0.70710677
        %v2398 = vand.u32 2147483647, %v2394
        %v2399 = vand.u32 2147483647, %v2395
        %v2400 = vand.u32 2147483647, %v2396
        %v2401 = vand.u32 2147483647, %v2397
        %v2402 = vmul.f32 %v2398, 0.3275911
        %v2403 = vmul.f32 %v2399, 0.3275911
        %v2404 = vmul.f32 %v2400, 0.3275911
        %v2405 = vmul.f32 %v2401, 0.3275911
        %v2406 = vadd.f32 %v2402, 1.0
        %v2407 = vadd.f32 %v2403, 1.0
        %v2408 = vadd.f32 %v2404, 1.0
        %v2409 = vadd.f32 %v2405, 1.0
        %v2410 = vrcp.pop %v2406
        %v2411 = vmul.f32 %v2406, %v2410
        %v2412 = vsub.f32 1.0, %v2411
        %v2413 = vmul.f32 %v2410, %v2412
        %v2414 = vadd.f32 %v2410, %v2413
        %vm2415 = vweird.f32 %v2406
        %vm2416 = vweird.f32 %v2410
        %vm2417 = vmor %vm2415, %vm2416
        %v2418 = vsel %vm2417, %v2410, %v2414
        %v2419 = vand.u32 2147483647, %v2406
        %vm2420 = vcmp.eq.f32.partialorder %v2419, 8.507059e+37
        %v2421 = vand.u32 %v2406, 2147483648
        %v2422 = vor.u32 1.1754944e-38, %v2421
        %v2423 = vsel %vm2420, %v2422, %v2418
        %v2424 = vrcp.pop %v2407
        %v2425 = vmul.f32 %v2407, %v2424
        %v2426 = vsub.f32 1.0, %v2425
        %v2427 = vmul.f32 %v2424, %v2426
        %v2428 = vadd.f32 %v2424, %v2427
        %vm2429 = vweird.f32 %v2407
        %vm2430 = vweird.f32 %v2424
        %vm2431 = vmor %vm2429, %vm2430
        %v2432 = vsel %vm2431, %v2424, %v2428
        %v2433 = vand.u32 2147483647, %v2407
        %vm2434 = vcmp.eq.f32.partialorder %v2433, 8.507059e+37
        %v2435 = vand.u32 %v2407, 2147483648
        %v2436 = vor.u32 1.1754944e-38, %v2435
        %v2437 = vsel %vm2434, %v2436, %v2432
        %v2438 = vrcp.pop %v2408
        %v2439 = vmul.f32 %v2408, %v2438
        %v2440 = vsub.f32 1.0, %v2439
        %v2441 = vmul.f32 %v2438, %v2440
        %v2442 = vadd.f32 %v2438, %v2441
        %vm2443 = vweird.f32 %v2408
        %vm2444 = vweird.f32 %v2438
        %vm2445 = vmor %vm2443, %vm2444
        %v2446 = vsel %vm2445, %v2438, %v2442
        %v2447 = vand.u32 2147483647, %v2408
        %vm2448 = vcmp.eq.f32.partialorder %v2447, 8.507059e+37
        %v2449 = vand.u32 %v2408, 2147483648
        %v2450 = vor.u32 1.1754944e-38, %v2449
        %v2451 = vsel %vm2448, %v2450, %v2446
        %v2452 = vrcp.pop %v2409
        %v2453 = vmul.f32 %v2409, %v2452
        %v2454 = vsub.f32 1.0, %v2453
        %v2455 = vmul.f32 %v2452, %v2454
        %v2456 = vadd.f32 %v2452, %v2455
        %vm2457 = vweird.f32 %v2409
        %vm2458 = vweird.f32 %v2452
        %vm2459 = vmor %vm2457, %vm2458
        %v2460 = vsel %vm2459, %v2452, %v2456
        %v2461 = vand.u32 2147483647, %v2409
        %vm2462 = vcmp.eq.f32.partialorder %v2461, 8.507059e+37
        %v2463 = vand.u32 %v2409, 2147483648
        %v2464 = vor.u32 1.1754944e-38, %v2463
        %v2465 = vsel %vm2462, %v2464, %v2460
        %v2466 = vmul.f32 %v2423, 1.0614054
        %v2467 = vmul.f32 %v2437, 1.0614054
        %v2468 = vmul.f32 %v2451, 1.0614054
        %v2469 = vmul.f32 %v2465, 1.0614054
        %v2470 = vadd.f32 %v2466, -1.4531521
        %v2471 = vadd.f32 %v2467, -1.4531521
        %v2472 = vadd.f32 %v2468, -1.4531521
        %v2473 = vadd.f32 %v2469, -1.4531521
        %v2474 = vmul.f32 %v2470, %v2423
        %v2475 = vmul.f32 %v2471, %v2437
        %v2476 = vmul.f32 %v2472, %v2451
        %v2477 = vmul.f32 %v2473, %v2465
        %v2478 = vadd.f32 %v2474, 1.4214138
        %v2479 = vadd.f32 %v2475, 1.4214138
        %v2480 = vadd.f32 %v2476, 1.4214138
        %v2481 = vadd.f32 %v2477, 1.4214138
        %v2482 = vmul.f32 %v2478, %v2423
        %v2483 = vmul.f32 %v2479, %v2437
        %v2484 = vmul.f32 %v2480, %v2451
        %v2485 = vmul.f32 %v2481, %v2465
        %v2486 = vadd.f32 %v2482, -0.28449672
        %v2487 = vadd.f32 %v2483, -0.28449672
        %v2488 = vadd.f32 %v2484, -0.28449672
        %v2489 = vadd.f32 %v2485, -0.28449672
        %v2490 = vmul.f32 %v2486, %v2423
        %v2491 = vmul.f32 %v2487, %v2437
        %v2492 = vmul.f32 %v2488, %v2451
        %v2493 = vmul.f32 %v2489, %v2465
        %v2494 = vadd.f32 %v2490, 0.2548296
        %v2495 = vadd.f32 %v2491, 0.2548296
        %v2496 = vadd.f32 %v2492, 0.2548296
        %v2497 = vadd.f32 %v2493, 0.2548296
        %v2498 = vmul.f32 %v2494, %v2423
        %v2499 = vmul.f32 %v2495, %v2437
        %v2500 = vmul.f32 %v2496, %v2451
        %v2501 = vmul.f32 %v2497, %v2465
        %v2502 = vsub.f32 0.0, %v2398
        %v2503 = vsub.f32 0.0, %v2399
        %v2504 = vsub.f32 0.0, %v2400
        %v2505 = vsub.f32 0.0, %v2401
        %v2506 = vmul.f32 %v2502, %v2398
        %v2507 = vmul.f32 %v2503, %v2399
        %v2508 = vmul.f32 %v2504, %v2400
        %v2509 = vmul.f32 %v2505, %v2401
        %v2510 = vmul.f32 %v2506, 1.442695
        %v2511 = vpow.pop %v2510
        %v2512 = vmul.f32 %v2507, 1.442695
        %v2513 = vpow.pop %v2512
        %v2514 = vmul.f32 %v2508, 1.442695
        %v2515 = vpow.pop %v2514
        %v2516 = vmul.f32 %v2509, 1.442695
        %v2517 = vpow.pop %v2516
        %v2518 = vmul.f32 %v2498, %v2511
        %v2519 = vmul.f32 %v2499, %v2513
        %v2520 = vmul.f32 %v2500, %v2515
        %v2521 = vmul.f32 %v2501, %v2517
        %v2522 = vsub.f32 1.0, %v2518
        %v2523 = vsub.f32 1.0, %v2519
        %v2524 = vsub.f32 1.0, %v2520
        %v2525 = vsub.f32 1.0, %v2521
        %vm2526 = vcmp.ge.f32.partialorder %v2394, 0.0
        %vm2527 = vcmp.ge.f32.partialorder %v2395, 0.0
        %vm2528 = vcmp.ge.f32.partialorder %v2396, 0.0
        %vm2529 = vcmp.ge.f32.partialorder %v2397, 0.0
        %v2530 = vsub.f32 0.0, %v2522
        %v2531 = vsub.f32 0.0, %v2523
        %v2532 = vsub.f32 0.0, %v2524
        %v2533 = vsub.f32 0.0, %v2525
        %v2534 = vsel %vm2526, %v2522, %v2530
        %v2535 = vsel %vm2527, %v2523, %v2531
        %v2536 = vsel %vm2528, %v2524, %v2532
        %v2537 = vsel %vm2529, %v2525, %v2533
        %v2538 = vmul.f32 %v2383, 0.5
        %v2539 = vmul.f32 %v2386, 0.5
        %v2540 = vmul.f32 %v2389, 0.5
        %v2541 = vmul.f32 %v2392, 0.5
        %v2542 = vadd.f32 %v2534, 1.0
        %v2543 = vadd.f32 %v2535, 1.0
        %v2544 = vadd.f32 %v2536, 1.0
        %v2545 = vadd.f32 %v2537, 1.0
        %v2546 = vmul.f32 %v2538, %v2542
        %v2547 = vmul.f32 %v2539, %v2543
        %v2548 = vmul.f32 %v2540, %v2544
        %v2549 = vmul.f32 %v2541, %v2545
        %s2550 = scalar_lea.vmem %s11, 8
        %v2551 = vld [vmem:[%s2550] sm:$0xff]
        %s2552 = scalar_lea.vmem %s12, 8
        %v2553 = vld [vmem:[%s2552] sm:$0xff]
        %2555 = vset.pattern.permute.xlu0 0
        %2556 = vperm.xlu0 %2555, %v2553
        %v2557 = vpop.permute.xlu0 %2556
        %v2560 = vsel %vm1528, %v2551, 0
        %2562 = vmatpush.msra.mxu0 0.0
        %2563 = vmatpush.msra.mxu0 0.0
        %2564 = vmatpush.msra.mxu0 0.0
        %2565 = vmatpush.msra.mxu0 0.0
        %2566 = vmatpush.msra.mxu0 0.0
        %2567 = vmatpush.msra.mxu0 0.0
        %2568 = vmatpush.msra.mxu0 0.0
        %2569 = vmatpush.msra.mxu0 0.0
        %2570 = vmatpush.msra.mxu0 0.0
        %2571 = vmatpush.msra.mxu0 0.0
        %2572 = vmatpush.msra.mxu0 0.0
        %2573 = vmatpush.msra.mxu0 0.0
        %2574 = vmatpush.msra.mxu0 %v2549
        %2575 = vmatpush.msra.mxu0 %v2548
        %2576 = vmatpush.msra.mxu0 %v2547
        %2577 = vmatpush.msra.mxu0 %v2546
        %2578 = vmatmul.f32.gmra.mxu0 %v2560
        %v2579 = vpop.f32.mrf.mxu0
        %v2580 = vadd.f32 %v2557, %v2579
        %2581 = vdwg.mxu0
        %v2582 = vadd.f32 %v2276, %v2580
        %v2583 = vld [vmem:[%s13] sm:$0xff]
        %v2584 = vld [vmem:[%s14] sm:$0x1]
        %2585 = vxpose.xlu0.b32.start [1/16] %v2582, 128
        %2586 = vxpose.xlu0.b32.cont [2/16] 0.0, 128
        %2587 = vxpose.xlu0.b32.cont [3/16] 0.0, 128
        %2588 = vxpose.xlu0.b32.cont [4/16] 0.0, 128
        %2589 = vxpose.xlu0.b32.cont [5/16] 0.0, 128
        %2590 = vxpose.xlu0.b32.cont [6/16] 0.0, 128
        %2591 = vxpose.xlu0.b32.cont [7/16] 0.0, 128
        %2592 = vxpose.xlu0.b32.cont [8/16] 0.0, 128
        %2593 = vxpose.xlu0.b32.cont [9/16] 0.0, 128
        %2594 = vxpose.xlu0.b32.cont [10/16] 0.0, 128
        %2595 = vxpose.xlu0.b32.cont [11/16] 0.0, 128
        %2596 = vxpose.xlu0.b32.cont [12/16] 0.0, 128
        %2597 = vxpose.xlu0.b32.cont [13/16] 0.0, 128
        %2598 = vxpose.xlu0.b32.cont [14/16] 0.0, 128
        %2599 = vxpose.xlu0.b32.cont [15/16] 0.0, 128
        %2600 = vxpose.xlu0.b32.end [16/16] 0.0, 128
        %v2601 = vpop.trf.xlu0
        %v2602 = vpop.trf.xlu0
        %v2603 = vpop.trf.xlu0
        %v2604 = vpop.trf.xlu0
        %v2605 = vpop.trf.xlu0
        %v2606 = vpop.trf.xlu0
        %v2607 = vpop.trf.xlu0
        %v2608 = vpop.trf.xlu0
        %v2609 = vpop.trf.xlu0
        %v2610 = vpop.trf.xlu0
        %v2611 = vpop.trf.xlu0
        %v2612 = vpop.trf.xlu0
        %v2613 = vpop.trf.xlu0
        %v2614 = vpop.trf.xlu0
        %v2615 = vpop.trf.xlu0
        %v2616 = vpop.trf.xlu0
        %v2618 = vsel %vm593, %v2601, 0
        %2620 = vmatpush.msra.mxu0 0.0
        %2621 = vmatpush.msra.mxu0 0.0
        %2622 = vmatpush.msra.mxu0 0.0
        %2623 = vmatpush.msra.mxu0 0.0
        %2624 = vmatpush.msra.mxu0 0.0
        %2625 = vmatpush.msra.mxu0 0.0
        %2626 = vmatpush.msra.mxu0 0.0
        %2627 = vmatpush.msra.mxu0 0.0
        %2628 = vmatpush.msra.mxu0 0.0
        %2629 = vmatpush.msra.mxu0 0.0
        %2630 = vmatpush.msra.mxu0 0.0
        %2631 = vmatpush.msra.mxu0 0.0
        %2632 = vmatpush.msra.mxu0 0.0
        %2633 = vmatpush.msra.mxu0 0.0
        %2634 = vmatpush.msra.mxu0 0.0
        %2635 = vmatpush.msra.mxu0 %v2583
        %2636 = vmatmul.f32.gmra.mxu0 %v2618
        %v2637 = vpop.f32.mrf.mxu0
        %v2638 = vadd.f32 %v2584, %v2637
        %2639 = vdwg.mxu0
        %vm2640 = vcmask 73728
        %v2641 = vsel %vm2640, %v2638, -inf
        %2642 = vmax.xlane.f32.xlu0 %v2641
        %v2643 = vpop.xlane.xlu0 %2642
        %v2644 = vsub.f32 %v2638, %v2643
        %v2645 = vmul.f32 %v2644, 1.442695
        %v2646 = vpow.pop %v2645
        %v2647 = vsel %vm2640, %v2646, 0.0
        %2648 = vadd.xlane.f32.xlu0 %v2647
        %v2649 = vpop.xlane.xlu0 %2648
        %v2650 = vrcp.pop %v2649
        %v2651 = vmul.f32 %v2649, %v2650
        %v2652 = vsub.f32 1.0, %v2651
        %v2653 = vmul.f32 %v2650, %v2652
        %v2654 = vadd.f32 %v2650, %v2653
        %vm2655 = vweird.f32 %v2649
        %vm2656 = vweird.f32 %v2650
        %vm2657 = vmor %vm2655, %vm2656
        %v2658 = vsel %vm2657, %v2650, %v2654
        %v2659 = vand.u32 2147483647, %v2649
        %vm2660 = vcmp.eq.f32.partialorder %v2659, 8.507059e+37
        %v2661 = vand.u32 %v2649, 2147483648
        %v2662 = vor.u32 1.1754944e-38, %v2661
        %v2663 = vsel %vm2660, %v2662, %v2658
        %v2664 = vmul.f32 %v2646, %v2663
        %2665 = vst.msk [vmem:[%s486] sm:$0x1] %vm2640, %v2664
        %s2666 = sand.u32 %s357, 1
        %s2667 = scalar_lea.sflag [#allocation3], %s2666
        %s2668 = sand.u32 %s357, 1
        %s2669 = scalar_lea.vmem [#allocation2], %s2668
        // Predicated region
        $region81: #{vit_forward.1} parent=79 // pred_check
          %p2670 = pneg %p367
        $region82: #{vit_forward.1} parent=79 // pred_check_branch
          %2672 = sbr.rel (%p2670) target = $region84
        $region83: #{vit_forward.1} parent=79 // pred_region
          %2674 = vsyncadd %s2667, 0
          %s2675 = scalar_lea.hbm %s15, %s29
          %s2677 = sshll.u32 %s2669, 4
          %s2678 = int_to_ptr.vmem [resolvable:$true] %s2677
          %s2679 = sshll.u32 %s2675, 4
          %s2680 = int_to_ptr.hbm [resolvable:$true] %s2679
          %2682 = dma.vmem_to_hbm [thread:$0]  %s2678, 16, %s2680, %s2667
        $region84: #{vit_forward.1} parent=79 // pred_fallthru
          _
      $region80: #{vit_forward.1} parent=5 // pred_fallthru
        _
      %p2683 = scmp.le.s32.totalorder 2, %s24
      // Predicated region
      $region85: #{vit_forward.1} parent=5 // pred_check
        %p2684 = pneg %p2683
      $region86: #{vit_forward.1} parent=5 // pred_check_branch
        %2686 = sbr.rel (%p2684) target = $region88
      $region87: #{vit_forward.1} parent=5 // pred_region
        %s2687 = ssub.s32 %s24, 2
        // Predicated region
        $region89: #{vit_forward.1} parent=87 // pred_check
          %p2688 = pneg %p373
        $region90: #{vit_forward.1} parent=87 // pred_check_branch
          %2690 = sbr.rel (%p2688) target = $region92
        $region91: #{vit_forward.1} parent=87 // pred_region
          %s2691 = sand.u32 %s358, 1
          %s2692 = scalar_lea.sflag [#allocation3], %s2691
          %s2693 = sand.u32 %s358, 1
          %s2694 = scalar_lea.vmem [#allocation2], %s2693
          %2696 = dma.done %s2692, 16
        $region92: #{vit_forward.1} parent=87 // pred_fallthru
          _
      $region88: #{vit_forward.1} parent=5 // pred_fallthru
        _
    $region6: #{vit_forward.1} parent=1 // loop_footer
      %s28 = sadd.s32 1, %s24
    $region7: #{vit_forward.1} parent=1 // loop_footer_branch
      %23 = sbr.rel target = $region3
    $region8: #{vit_forward.1} parent=1 // loop_exit
      _
    %2697 = vsyncpa [#allocation3], 1
    %s2698 = scalar_lea.sflag [#allocation3], 1
    %2699 = vsyncpa %s2698, 1

</llo_original>
